<compile_context>
chip_gen: v5e
topology: v5e:2x2
jax: 0.10.0
libtpu: 0.0.40
codegen_flags: <defaults>
</compile_context>

<pallas_src>
import functools

import jax
import jax.numpy as jnp
from jax import lax
from jax.experimental import pallas as pl
from jax.experimental.pallas import tpu as pltpu

_LANE = 128
_SUBLANE = 8
# Timesteps per grid step. 32-64 is better on v5e/v6e for long sequences; keep
# ~16 (or tile the batch) on v7x (64 MiB VMEM, 32 MiB default scoped limit).
_T_BLK = 16


def _round_up(x, m):
    return ((x + m - 1) // m) * m


# ---------------------------------------------------------------------------
# Weight padding helpers (lane-aligned layout: gate k occupies columns
# [k*H_pad, k*H_pad + H), padded rows/cols are exactly zero).
# ---------------------------------------------------------------------------
def _pad_gate_cols(w, h, h_pad):
    """(..., 4*h) -> (..., 4*h_pad), placing each gate's h real cols at k*h_pad."""
    if h == h_pad:
        return w
    pads = [(0, 0)] * (w.ndim - 1)
    return jnp.concatenate(
        [jnp.pad(w[..., k * h:(k + 1) * h], pads + [(0, h_pad - h)])
         for k in range(4)], axis=-1)


def _pad_row_segments(w, seg, seg_pad):
    """Pad each row-segment of w (rows = sum(seg)) to the sizes in seg_pad."""
    parts, off = [], 0
    for s, sp in zip(seg, seg_pad):
        blk = w[off:off + s]
        parts.append(jnp.pad(blk, [(0, sp - s)] + [(0, 0)] * (w.ndim - 1)))
        off += s
    return jnp.concatenate(parts, axis=0)


# ---------------------------------------------------------------------------
# Fused kernel: per-chunk input projection (MXU GEMM into VMEM scratch) +
# serial LSTM recurrence.  grid = (direction, time_chunk).
# ---------------------------------------------------------------------------
def _lstm_layer_kernel(x_ref, w_ih_ref, b_ref, w_hh_ref,
                       hout_ref, hn_ref, cn_ref, gx_ref,
                       *, ndir, nc, t_blk, b_pad, h_pad, n_valid_last):
    d = pl.program_id(0)          # 0 = forward, 1 = backward
    c = pl.program_id(1)          # chunk step (chunk order reversed for bwd)

    @pl.when(c == 0)
    def _():
        hn_ref[...] = jnp.zeros_like(hn_ref)
        cn_ref[...] = jnp.zeros_like(cn_ref)

    # Fused per-chunk input projection: one big lane-aligned MXU GEMM, off the
    # serial critical path.  gx[t*b_pad + b, :] = x[t, b, :] @ W_ih + bias
    gx_ref[...] = (
        jnp.dot(x_ref[...], w_ih_ref[...], preferred_element_type=jnp.float32)
        + b_ref[...])

    w_hh = w_hh_ref[...]          # (H_pad, 4*H_pad) bf16, resident across chunks

    def run(reverse, n_valid):
        # Serial LSTM steps over one chunk: fully unrolled, all offsets static.
        # Only h @ W_hh is on the serial critical path.
        h = hn_ref[...]
        cell = cn_ref[...]
        order = range(n_valid - 1, -1, -1) if reverse else range(n_valid)
        for t_loc in order:
            row = t_loc * b_pad
            gates = gx_ref[pl.ds(row, b_pad), :] + jnp.dot(
                h.astype(jnp.bfloat16), w_hh, preferred_element_type=jnp.float32)
            i_g = jax.nn.sigmoid(gates[:, 0 * h_pad:1 * h_pad])
            f_g = jax.nn.sigmoid(gates[:, 1 * h_pad:2 * h_pad])
            g_g = jnp.tanh(gates[:, 2 * h_pad:3 * h_pad])
            o_g = jax.nn.sigmoid(gates[:, 3 * h_pad:4 * h_pad])
            cell = f_g * cell + i_g * g_g
            h = o_g * jnp.tanh(cell)
            hout_ref[pl.ds(row, b_pad), :] = h.astype(hout_ref.dtype)
        if n_valid < t_blk:
            # Zero the (later discarded) time-padded rows so downstream layers
            # never see uninitialized VMEM.
            hout_ref[pl.ds(n_valid * b_pad, (t_blk - n_valid) * b_pad), :] = (
                jnp.zeros(((t_blk - n_valid) * b_pad, h_pad), hout_ref.dtype))
        hn_ref[...] = h
        cn_ref[...] = cell

    def _branch(reverse, n_valid):
        return lambda: run(reverse, n_valid)

    # Static specialization: direction x (interior chunk | boundary chunk).
    # => no per-step index arithmetic and no per-step padding mask at all.
    for dd in range(ndir):
        rev = dd == 1
        d_ok = d == dd
        if n_valid_last == t_blk:                 # T is a multiple of t_blk
            pl.when(d_ok)(_branch(rev, t_blk))
        else:
            cb = 0 if rev else nc - 1             # grid step holding boundary chunk
            if nc > 1:
                pl.when(jnp.logical_and(d_ok, c != cb))(_branch(rev, t_blk))
            pl.when(jnp.logical_and(d_ok, c == cb))(_branch(rev, n_valid_last))


@functools.partial(jax.jit, static_argnames=("t_real", "t_blk", "b_pad"))
def _lstm_layer_pallas(x, w_ih, w_hh, b, *, t_real, t_blk, b_pad):
    """One (possibly bidirectional) LSTM layer.

    x    : (T_pad*B_pad, Din_pad) bf16, time-major, lane-dense flat slab.
    w_ih : (NDIR, Din_pad, 4*H_pad) bf16
    w_hh : (NDIR, H_pad, 4*H_pad)   bf16
    b    : (NDIR, 1, 4*H_pad)       f32
    returns hout (T_pad*B_pad, NDIR*H_pad) bf16, hn/cn (NDIR, B_pad, H_pad) f32.
    """
    rows, din_pad = x.shape
    ndir, h_pad, g4 = w_hh.shape
    t_pad = rows // b_pad
    nc = t_pad // t_blk
    n_valid_last = t_real - (nc - 1) * t_blk

    def csel(d, c):   # forward walks chunks 0..nc-1, backward walks nc-1..0
        return (1 - d) * c + d * (nc - 1 - c)

    kernel = functools.partial(
        _lstm_layer_kernel, ndir=ndir, nc=nc, t_blk=t_blk, b_pad=b_pad,
        h_pad=h_pad, n_valid_last=n_valid_last)

    return pl.pallas_call(
        kernel,
        out_shape=(jax.ShapeDtypeStruct((rows, ndir * h_pad), jnp.bfloat16),
                   jax.ShapeDtypeStruct((ndir, b_pad, h_pad), jnp.float32),
                   jax.ShapeDtypeStruct((ndir, b_pad, h_pad), jnp.float32)),
        grid_spec=pltpu.PrefetchScalarGridSpec(
            num_scalar_prefetch=0,
            grid=(ndir, nc),
            in_specs=[
                pl.BlockSpec((t_blk * b_pad, din_pad),
                             lambda d, c: (csel(d, c), 0)),
                pl.BlockSpec((None, din_pad, g4), lambda d, c: (d, 0, 0)),
                pl.BlockSpec((None, 1, g4), lambda d, c: (d, 0, 0)),
                pl.BlockSpec((None, h_pad, g4), lambda d, c: (d, 0, 0)),
            ],
            out_specs=[
                # direction folded into the last (lane) dim -> full-width stores
                pl.BlockSpec((t_blk * b_pad, h_pad),
                             lambda d, c: (csel(d, c), d)),
                pl.BlockSpec((None, b_pad, h_pad), lambda d, c: (d, 0, 0)),
                pl.BlockSpec((None, b_pad, h_pad), lambda d, c: (d, 0, 0)),
            ],
            scratch_shapes=[pltpu.VMEM((t_blk * b_pad, g4), jnp.float32)],
        ),
        compiler_params=pltpu.CompilerParams(
            dimension_semantics=("parallel", "arbitrary")),
    )(x, w_ih, b, w_hh)


# ---------------------------------------------------------------------------
# Module wrapper matching LSTMLayer.forward semantics (batch_first inputs).
# ---------------------------------------------------------------------------
class LSTMLayerPallas:
    """JAX/Pallas port of LSTMLayer (eval-mode forward).  Gate order matches
    PyTorch [i, f, g, o]; weights ~ U(-1/sqrt(H), 1/sqrt(H)) like nn.LSTM;
    matmul weights stored in bf16, biases/accumulation in f32."""

    def __init__(self, input_dim, hidden_dim, bidirectional, num_layers,
                 drop_prob=0.3, key=None, t_blk=_T_BLK):
        self.input_dim = input_dim
        self.hidden_dim = hidden_dim
        self.bidirectional = bidirectional
        self.num_layers = num_layers
        self.directions = 2 if bidirectional else 1
        self.H = hidden_dim // 2 if bidirectional else hidden_dim
        self.h_pad = _round_up(self.H, _LANE)
        self.din_pad0 = _round_up(input_dim, _LANE)
        self.t_blk = t_blk
        # TODO(synk): inter-layer dropout is a training-time op; this eval-mode
        # forward (like nn.LSTM.eval()) applies none.
        key = jax.random.PRNGKey(42) if key is None else key
        bound = 1.0 / float(self.H) ** 0.5
        H, h_pad = self.H, self.h_pad

        self.params_ref = []   # unpadded, for the pure-JAX reference path
        self.params_krn = []   # padded / lane-aligned, for the Pallas path
        for layer in range(num_layers):
            if layer == 0:
                in_dim, seg, seg_pad = input_dim, [input_dim], [self.din_pad0]
            else:
                in_dim = H * self.directions
                seg = [H] * self.directions
                seg_pad = [h_pad] * self.directions
            wi_r, wh_r, b_r, wi_p, wh_p, b_p = [], [], [], [], [], []
            for _ in range(self.directions):
                key, k1, k2, k3, k4 = jax.random.split(key, 5)
                w_ih = jax.random.uniform(k1, (in_dim, 4 * H), jnp.float32,
                                          -bound, bound).astype(jnp.bfloat16)
                w_hh = jax.random.uniform(k2, (H, 4 * H), jnp.float32,
                                          -bound, bound).astype(jnp.bfloat16)
                bias = (jax.random.uniform(k3, (4 * H,), jnp.float32, -bound, bound)
                        + jax.random.uniform(k4, (4 * H,), jnp.float32, -bound,
                                             bound))[None, :]
                wi_r.append(w_ih); wh_r.append(w_hh); b_r.append(bias)
                wi_p.append(_pad_gate_cols(
                    _pad_row_segments(w_ih, seg, seg_pad), H, h_pad))
                wh_p.append(_pad_gate_cols(
                    jnp.pad(w_hh, ((0, h_pad - H), (0, 0))), H, h_pad))
                b_p.append(_pad_gate_cols(bias, H, h_pad))
            self.params_ref.append(
                (jnp.stack(wi_r), jnp.stack(wh_r), jnp.stack(b_r)))
            self.params_krn.append(
                (jnp.stack(wi_p), jnp.stack(wh_p), jnp.stack(b_p)))

    # ---------------------------------------------------------------- Pallas
    def forward(self, vectors, mask=None, hidden=None):
        # TODO(synk): custom initial hidden state not supported (zeros only).
        assert hidden is None
        vectors = jnp.asarray(vectors, jnp.float32)
        batch, t, din = vectors.shape
        if mask is None:
            mask = jnp.ones((batch, t), jnp.int32)
        lengths = mask.reshape(batch, t).astype(jnp.int32).sum(-1)

        t_blk = max(1, min(self.t_blk, t))
        nc = -(-t // t_blk)
        t_pad = nc * t_blk
        b_pad = _round_up(batch, _SUBLANE)

        x = jnp.transpose(vectors, (1, 0, 2)).astype(jnp.bfloat16)   # (T,B,Din)
        x = jnp.pad(x, ((0, t_pad - t), (0, b_pad - batch),
                        (0, self.din_pad0 - din)))
        x = x.reshape(t_pad * b_pad, self.din_pad0)                  # lane-dense 2D

        hns, cns = [], []
        for layer in range(self.num_layers):
            w_ih, w_hh, b = self.params_krn[layer]
            # hout of layer L is directly (padded-layout) layer L+1 input:
            # no transpose / concat / slice between layers.
            x, hn, cn = _lstm_layer_pallas(x, w_ih, w_hh, b,
                                           t_real=t, t_blk=t_blk, b_pad=b_pad)
            for d in range(self.directions):
                hns.append(hn[d, :batch, :self.H])
                cns.append(cn[d, :batch, :self.H])

        outs = x.reshape(t_pad, b_pad, self.directions * self.h_pad)[:t, :batch]
        if self.bidirectional:
            outs = jnp.concatenate(
                [outs[..., :self.H],
                 outs[..., self.h_pad:self.h_pad + self.H]], axis=-1)
        else:
            outs = outs[..., :self.H]
        lstm_outs = jnp.transpose(outs, (1, 0, 2)).astype(jnp.float32)
        hn = jnp.stack(hns, axis=0)
        cn = jnp.stack(cns, axis=0)
        return self._finish(lstm_outs, hn, cn, lengths, batch, t)

    # ------------------------------------------------------------ pure-JAX ref
    def forward_ref(self, vectors, mask=None, hidden=None):
        assert hidden is None
        vectors = jnp.asarray(vectors, jnp.float32)
        batch, t, _ = vectors.shape
        if mask is None:
            mask = jnp.ones((batch, t), jnp.int32)
        lengths = mask.reshape(batch, t).astype(jnp.int32).sum(-1)

        H = self.H
        layer_in = jnp.transpose(vectors, (1, 0, 2))
        hns, cns = [], []
        for layer in range(self.num_layers):
            w_ih, w_hh, b = self.params_ref[layer]
            houts = []
            for d in range(self.directions):
                xs = layer_in if d == 0 else jnp.flip(layer_in, axis=0)
                gx = jnp.dot(xs.astype(jnp.bfloat16).reshape(t * batch, -1),
                             w_ih[d], preferred_element_type=jnp.float32)
                gx = gx.reshape(t, batch, 4 * H) + b[d]

                def step(carry, g, _d=d):
                    h, c = carry
                    gates = g + jnp.dot(h.astype(jnp.bfloat16), w_hh[_d],
                                        preferred_element_type=jnp.float32)
                    i_g, f_g, g_g, o_g = jnp.split(gates, 4, axis=-1)
                    c = (jax.nn.sigmoid(f_g) * c
                         + jax.nn.sigmoid(i_g) * jnp.tanh(g_g))
                    h = jax.nn.sigmoid(o_g) * jnp.tanh(c)
                    return (h, c), h

                zeros = jnp.zeros((batch, H), jnp.float32)
                (hn_d, cn_d), hs = lax.scan(step, (zeros, zeros), gx)
                if d == 1:
                    hs = jnp.flip(hs, axis=0)
                # mimic the kernel's bf16 hout storage
                houts.append(hs.astype(jnp.bfloat16).astype(jnp.float32))
                hns.append(hn_d); cns.append(cn_d)
            layer_in = jnp.concatenate(houts, axis=-1)
        lstm_outs = jnp.transpose(layer_in, (1, 0, 2))
        hn = jnp.stack(hns, axis=0)
        cn = jnp.stack(cns, axis=0)
        return self._finish(lstm_outs, hn, cn, lengths, batch, t)

    # ------------------------------------------------------------- common tail
    def _finish(self, lstm_outs, hn, cn, lengths, batch, t):
        idx = jnp.arange(batch)
        if self.bidirectional:
            half = self.hidden_dim // 2
            ov = lstm_outs.reshape(batch, t, 2, half)
            last_hn = jnp.concatenate([ov[idx, lengths - 1, 0], ov[idx, 0, 1]],
                                      axis=1)
        else:
            last_hn = lstm_outs[idx, lengths - 1]
        return {'last': last_hn, 'outs': lstm_outs, 'hidden': (hn, cn)}


if __name__ == "__main__":
    key = jax.random.PRNGKey(0)
    k1, k2, k3, kp1, kp2 = jax.random.split(key, 5)

    # --- test A: bidirectional, single chunk (T <= t_blk), no time padding ---
    batch, seq, input_dim, hidden_dim = 2, 8, 16, 32
    vec_a = jax.random.normal(k1, (batch, seq, input_dim), jnp.float32)
    mod_a = LSTMLayerPallas(input_dim, hidden_dim, bidirectional=True,
                            num_layers=1, key=kp1)
    out_a = mod_a.forward(vec_a)
    jax.block_until_ready(out_a['outs'])
    jax.block_until_ready(out_a['last'])
    jax.block_until_ready(out_a['hidden'])
    ref_a = mod_a.forward_ref(vec_a)
    assert out_a['outs'].shape == (batch, seq, hidden_dim)
    assert out_a['last'].shape == (batch, hidden_dim)
    assert out_a['hidden'][0].shape == (2, batch, hidden_dim // 2)
    assert jnp.allclose(out_a['outs'], ref_a['outs'], atol=2e-2)
    assert jnp.allclose(out_a['last'], ref_a['last'], atol=2e-2)
    assert jnp.allclose(out_a['hidden'][0], ref_a['hidden'][0], atol=5e-3)
    assert jnp.allclose(out_a['hidden'][1], ref_a['hidden'][1], atol=5e-3)

    # --- test B: seq=20 -> multi-chunk + time-padded boundary chunk + ragged mask
    seq_b = 20
    vec_b = jax.random.normal(k2, (batch, seq_b, input_dim), jnp.float32)
    mask_b = (jnp.arange(seq_b)[None, :]
              < jnp.array([seq_b, 13])[:, None]).astype(jnp.int32)
    out_b = mod_a.forward(vec_b, mask=mask_b)
    jax.block_until_ready(out_b['outs'])
    ref_b = mod_a.forward_ref(vec_b, mask=mask_b)
    assert jnp.allclose(out_b['outs'], ref_b['outs'], atol=2e-2)
    assert jnp.allclose(out_b['last'], ref_b['last'], atol=2e-2)
    assert jnp.allclose(out_b['hidden'][0], ref_b['hidden'][0], atol=5e-3)
    assert jnp.allclose(out_b['hidden'][1], ref_b['hidden'][1], atol=5e-3)

    # --- test C: 2-layer bidirectional (exercises the lane-dense fwd|bwd
    #     layer-to-layer handoff and the padded layer-1 W_ih row layout) ---
    batch_c, seq_c, in_c, hid_c = 3, 12, 10, 24
    vec_c = jax.random.normal(k3, (batch_c, seq_c, in_c), jnp.float32)
    mod_c = LSTMLayerPallas(in_c, hid_c, bidirectional=True, num_layers=2,
                            key=kp2)
    out_c = mod_c.forward(vec_c)
    jax.block_until_ready(out_c['outs'])
    ref_c = mod_c.forward_ref(vec_c)
    assert out_c['outs'].shape == (batch_c, seq_c, hid_c)
    assert out_c['hidden'][0].shape == (4, batch_c, hid_c // 2)
    assert jnp.allclose(out_c['outs'], ref_c['outs'], atol=2e-2)
    assert jnp.allclose(out_c['last'], ref_c['last'], atol=2e-2)
    assert jnp.allclose(out_c['hidden'][0], ref_c['hidden'][0], atol=5e-3)
    assert jnp.allclose(out_c['hidden'][1], ref_c['hidden'][1], atol=5e-3)

    print("KERNEL_OK")
</pallas_src>

<mosaic_0001>
module attributes {stable_mosaic.version = 11 : i64} {
  func.func @_lstm_layer_kernel(%arg0: i32, %arg1: i32, %arg2: memref<64x128xbf16, #tpu.memory_space<vmem>>, %arg3: memref<1x128x512xbf16, #tpu.memory_space<vmem>>, %arg4: memref<1x1x512xf32, #tpu.memory_space<vmem>>, %arg5: memref<1x128x512xbf16, #tpu.memory_space<vmem>>, %arg6: memref<64x128xbf16, #tpu.memory_space<vmem>>, %arg7: memref<1x8x128xf32, #tpu.memory_space<vmem>>, %arg8: memref<1x8x128xf32, #tpu.memory_space<vmem>>, %arg9: memref<64x512xf32, #tpu.memory_space<vmem>>) attributes {dimension_semantics = [#tpu.dimension_semantics<parallel>, #tpu.dimension_semantics<arbitrary>], iteration_bounds = array<i64: 2, 1>, scalar_prefetch = 0 : i64, scratch_operands = 1 : i64, tpu.core_type = #tpu.core_type<tc>, window_params = [{transform_indices = @transform_0, window_bounds = array<i64: 64, 128>}, {transform_indices = @transform_1, window_bounds = array<i64: 1, 128, 512>}, {transform_indices = @transform_2, window_bounds = array<i64: 1, 1, 512>}, {transform_indices = @transform_3, window_bounds = array<i64: 1, 128, 512>}, {transform_indices = @transform_4, window_bounds = array<i64: 64, 128>}, {transform_indices = @transform_5, window_bounds = array<i64: 1, 8, 128>}, {transform_indices = @transform_6, window_bounds = array<i64: 1, 8, 128>}]} {
    %c0_i32 = arith.constant 0 : i32
    %0 = arith.cmpi eq, %arg1, %c0_i32 : i32
    %1 = arith.extui %0 : i1 to i32
    %c0_i32_0 = arith.constant 0 : i32
    %2 = arith.cmpi ne, %1, %c0_i32_0 : i32
    scf.if %2 {
      %cst_16 = arith.constant 0.000000e+00 : f32
      %20 = vector.broadcast %cst_16 : f32 to vector<8x128xf32>
      %c0_17 = arith.constant 0 : index
      %c0_18 = arith.constant 0 : index
      %c0_19 = arith.constant 0 : index
      %21 = vector.load %arg7[%c0_17, %c0_18, %c0_19] : memref<1x8x128xf32, #tpu.memory_space<vmem>>, vector<1x8x128xf32>
      %22 = vector.shape_cast %21 : vector<1x8x128xf32> to vector<8x128xf32>
      %23 = vector.shape_cast %20 : vector<8x128xf32> to vector<1x8x128xf32>
      tpu.vector_store %arg7[%c0_17, %c0_18, %c0_19], %23 {strides = array<i32>} : memref<1x8x128xf32, #tpu.memory_space<vmem>>, vector<1x8x128xf32>,
      %cst_20 = arith.constant 0.000000e+00 : f32
      %24 = vector.broadcast %cst_20 : f32 to vector<8x128xf32>
      %c0_21 = arith.constant 0 : index
      %c0_22 = arith.constant 0 : index
      %c0_23 = arith.constant 0 : index
      %25 = vector.load %arg8[%c0_21, %c0_22, %c0_23] : memref<1x8x128xf32, #tpu.memory_space<vmem>>, vector<1x8x128xf32>
      %26 = vector.shape_cast %25 : vector<1x8x128xf32> to vector<8x128xf32>
      %27 = vector.shape_cast %24 : vector<8x128xf32> to vector<1x8x128xf32>
      tpu.vector_store %arg8[%c0_21, %c0_22, %c0_23], %27 {strides = array<i32>} : memref<1x8x128xf32, #tpu.memory_space<vmem>>, vector<1x8x128xf32>,
    } else {
    }
    %c0 = arith.constant 0 : index
    %c0_1 = arith.constant 0 : index
    %3 = vector.load %arg2[%c0, %c0_1] : memref<64x128xbf16, #tpu.memory_space<vmem>>, vector<64x128xbf16>
    %c0_2 = arith.constant 0 : index
    %c0_3 = arith.constant 0 : index
    %c0_4 = arith.constant 0 : index
    %4 = vector.load %arg3[%c0_2, %c0_3, %c0_4] : memref<1x128x512xbf16, #tpu.memory_space<vmem>>, vector<1x128x512xbf16>
    %5 = vector.shape_cast %4 : vector<1x128x512xbf16> to vector<128x512xbf16>
    %cst = arith.constant dense<0.000000e+00> : vector<64x512xf32>
    %6 = tpu.matmul %3, %5, %cst {dimension_numbers = #tpu.dot_dimension_numbers<[1], [0], [0], [1], [0, 0, 1, 1], [], []>} : vector<64x128xbf16>, vector<128x512xbf16>, vector<64x512xf32> -> vector<64x512xf32>
    %c0_5 = arith.constant 0 : index
    %c0_6 = arith.constant 0 : index
    %c0_7 = arith.constant 0 : index
    %7 = vector.load %arg4[%c0_5, %c0_6, %c0_7] : memref<1x1x512xf32, #tpu.memory_space<vmem>>, vector<1x1x512xf32>
    %8 = vector.shape_cast %7 : vector<1x1x512xf32> to vector<1x512xf32>
    %9 = vector.broadcast %8 : vector<1x512xf32> to vector<64x512xf32>
    %10 = arith.addf %6, %9 : vector<64x512xf32>
    %c0_8 = arith.constant 0 : index
    %c0_9 = arith.constant 0 : index
    %11 = vector.load %arg9[%c0_8, %c0_9] : memref<64x512xf32, #tpu.memory_space<vmem>>, vector<64x512xf32>
    tpu.vector_store %arg9[%c0_8, %c0_9], %10 {strides = array<i32>} : memref<64x512xf32, #tpu.memory_space<vmem>>, vector<64x512xf32>,
    %c0_10 = arith.constant 0 : index
    %c0_11 = arith.constant 0 : index
    %c0_12 = arith.constant 0 : index
    %12 = vector.load %arg5[%c0_10, %c0_11, %c0_12] : memref<1x128x512xbf16, #tpu.memory_space<vmem>>, vector<1x128x512xbf16>
    %13 = vector.shape_cast %12 : vector<1x128x512xbf16> to vector<128x512xbf16>
    %c0_i32_13 = arith.constant 0 : i32
    %14 = arith.cmpi eq, %arg0, %c0_i32_13 : i32
    %15 = arith.extui %14 : i1 to i32
    %c0_i32_14 = arith.constant 0 : i32
    %16 = arith.cmpi ne, %15, %c0_i32_14 : i32
    scf.if %16 {
      %c0_16 = arith.constant 0 : index
      %c0_17 = arith.constant 0 : index
      %c0_18 = arith.constant 0 : index
      %20 = vector.load %arg7[%c0_16, %c0_17, %c0_18] : memref<1x8x128xf32, #tpu.memory_space<vmem>>, vector<1x8x128xf32>
      %21 = vector.shape_cast %20 : vector<1x8x128xf32> to vector<8x128xf32>
      %c0_19 = arith.constant 0 : index
      %c0_20 = arith.constant 0 : index
      %c0_21 = arith.constant 0 : index
      %22 = vector.load %arg8[%c0_19, %c0_20, %c0_21] : memref<1x8x128xf32, #tpu.memory_space<vmem>>, vector<1x8x128xf32>
      %23 = vector.shape_cast %22 : vector<1x8x128xf32> to vector<8x128xf32>
      %c0_22 = arith.constant 0 : index
      %c0_23 = arith.constant 0 : index
      %24 = vector.load %arg9[%c0_22, %c0_23] : memref<64x512xf32, #tpu.memory_space<vmem>>, vector<8x512xf32>
      %25 = arith.truncf %21 : vector<8x128xf32> to vector<8x128xbf16>
      %cst_24 = arith.constant dense<0.000000e+00> : vector<8x512xf32>
      %26 = tpu.matmul %25, %13, %cst_24 {dimension_numbers = #tpu.dot_dimension_numbers<[1], [0], [0], [1], [0, 0, 1, 1], [], []>} : vector<8x128xbf16>, vector<128x512xbf16>, vector<8x512xf32> -> vector<8x512xf32>
      %27 = arith.addf %24, %26 : vector<8x512xf32>
      %28 = vector.extract_strided_slice %27 {offsets = [0, 0], sizes = [8, 128], strides = [1, 1]} : vector<8x512xf32> to vector<8x128xf32>
      %29 = arith.negf %28 : vector<8x128xf32>
      %30 = math.exp %29 : vector<8x128xf32>
      %cst_25 = arith.constant 1.000000e+00 : f32
      %31 = vector.broadcast %cst_25 : f32 to vector<8x128xf32>
      %32 = arith.addf %31, %30 : vector<8x128xf32>
      %33 = arith.divf %31, %32 : vector<8x128xf32>
      %34 = vector.extract_strided_slice %27 {offsets = [0, 128], sizes = [8, 128], strides = [1, 1]} : vector<8x512xf32> to vector<8x128xf32>
      %35 = arith.negf %34 : vector<8x128xf32>
      %36 = math.exp %35 : vector<8x128xf32>
      %cst_26 = arith.constant 1.000000e+00 : f32
      %37 = vector.broadcast %cst_26 : f32 to vector<8x128xf32>
      %38 = arith.addf %37, %36 : vector<8x128xf32>
      %39 = arith.divf %37, %38 : vector<8x128xf32>
      %40 = vector.extract_strided_slice %27 {offsets = [0, 256], sizes = [8, 128], strides = [1, 1]} : vector<8x512xf32> to vector<8x128xf32>
      %41 = math.tanh %40 : vector<8x128xf32>
      %42 = vector.extract_strided_slice %27 {offsets = [0, 384], sizes = [8, 128], strides = [1, 1]} : vector<8x512xf32> to vector<8x128xf32>
      %43 = arith.negf %42 : vector<8x128xf32>
      %44 = math.exp %43 : vector<8x128xf32>
      %cst_27 = arith.constant 1.000000e+00 : f32
      %45 = vector.broadcast %cst_27 : f32 to vector<8x128xf32>
      %46 = arith.addf %45, %44 : vector<8x128xf32>
      %47 = arith.divf %45, %46 : vector<8x128xf32>
      %48 = arith.mulf %39, %23 : vector<8x128xf32>
      %49 = arith.mulf %33, %41 : vector<8x128xf32>
      %50 = arith.addf %48, %49 : vector<8x128xf32>
      %51 = math.tanh %50 : vector<8x128xf32>
      %52 = arith.mulf %47, %51 : vector<8x128xf32>
      %53 = arith.truncf %52 : vector<8x128xf32> to vector<8x128xbf16>
      %c0_28 = arith.constant 0 : index
      %c0_29 = arith.constant 0 : index
      %54 = vector.load %arg6[%c0_28, %c0_29] : memref<64x128xbf16, #tpu.memory_space<vmem>>, vector<8x128xbf16>
      tpu.vector_store %arg6[%c0_28, %c0_29], %53 {strides = array<i32>} : memref<64x128xbf16, #tpu.memory_space<vmem>>, vector<8x128xbf16>,
      %c8 = arith.constant 8 : index
      %c0_30 = arith.constant 0 : index
      %55 = vector.load %arg9[%c8, %c0_30] : memref<64x512xf32, #tpu.memory_space<vmem>>, vector<8x512xf32>
      %56 = arith.truncf %52 : vector<8x128xf32> to vector<8x128xbf16>
      %cst_31 = arith.constant dense<0.000000e+00> : vector<8x512xf32>
      %57 = tpu.matmul %56, %13, %cst_31 {dimension_numbers = #tpu.dot_dimension_numbers<[1], [0], [0], [1], [0, 0, 1, 1], [], []>} : vector<8x128xbf16>, vector<128x512xbf16>, vector<8x512xf32> -> vector<8x512xf32>
      %58 = arith.addf %55, %57 : vector<8x512xf32>
      %59 = vector.extract_strided_slice %58 {offsets = [0, 0], sizes = [8, 128], strides = [1, 1]} : vector<8x512xf32> to vector<8x128xf32>
      %60 = arith.negf %59 : vector<8x128xf32>
      %61 = math.exp %60 : vector<8x128xf32>
      %cst_32 = arith.constant 1.000000e+00 : f32
      %62 = vector.broadcast %cst_32 : f32 to vector<8x128xf32>
      %63 = arith.addf %62, %61 : vector<8x128xf32>
      %64 = arith.divf %62, %63 : vector<8x128xf32>
      %65 = vector.extract_strided_slice %58 {offsets = [0, 128], sizes = [8, 128], strides = [1, 1]} : vector<8x512xf32> to vector<8x128xf32>
      %66 = arith.negf %65 : vector<8x128xf32>
      %67 = math.exp %66 : vector<8x128xf32>
      %cst_33 = arith.constant 1.000000e+00 : f32
      %68 = vector.broadcast %cst_33 : f32 to vector<8x128xf32>
      %69 = arith.addf %68, %67 : vector<8x128xf32>
      %70 = arith.divf %68, %69 : vector<8x128xf32>
      %71 = vector.extract_strided_slice %58 {offsets = [0, 256], sizes = [8, 128], strides = [1, 1]} : vector<8x512xf32> to vector<8x128xf32>
      %72 = math.tanh %71 : vector<8x128xf32>
      %73 = vector.extract_strided_slice %58 {offsets = [0, 384], sizes = [8, 128], strides = [1, 1]} : vector<8x512xf32> to vector<8x128xf32>
      %74 = arith.negf %73 : vector<8x128xf32>
      %75 = math.exp %74 : vector<8x128xf32>
      %cst_34 = arith.constant 1.000000e+00 : f32
      %76 = vector.broadcast %cst_34 : f32 to vector<8x128xf32>
      %77 = arith.addf %76, %75 : vector<8x128xf32>
      %78 = arith.divf %76, %77 : vector<8x128xf32>
      %79 = arith.mulf %70, %50 : vector<8x128xf32>
      %80 = arith.mulf %64, %72 : vector<8x128xf32>
      %81 = arith.addf %79, %80 : vector<8x128xf32>
      %82 = math.tanh %81 : vector<8x128xf32>
      %83 = arith.mulf %78, %82 : vector<8x128xf32>
      %84 = arith.truncf %83 : vector<8x128xf32> to vector<8x128xbf16>
      %c8_35 = arith.constant 8 : index
      %c0_36 = arith.constant 0 : index
      %85 = vector.load %arg6[%c8_35, %c0_36] : memref<64x128xbf16, #tpu.memory_space<vmem>>, vector<8x128xbf16>
      tpu.vector_store %arg6[%c8_35, %c0_36], %84 {strides = array<i32>} : memref<64x128xbf16, #tpu.memory_space<vmem>>, vector<8x128xbf16>,
      %c16 = arith.constant 16 : index
      %c0_37 = arith.constant 0 : index
      %86 = vector.load %arg9[%c16, %c0_37] : memref<64x512xf32, #tpu.memory_space<vmem>>, vector<8x512xf32>
      %87 = arith.truncf %83 : vector<8x128xf32> to vector<8x128xbf16>
      %cst_38 = arith.constant dense<0.000000e+00> : vector<8x512xf32>
      %88 = tpu.matmul %87, %13, %cst_38 {dimension_numbers = #tpu.dot_dimension_numbers<[1], [0], [0], [1], [0, 0, 1, 1], [], []>} : vector<8x128xbf16>, vector<128x512xbf16>, vector<8x512xf32> -> vector<8x512xf32>
      %89 = arith.addf %86, %88 : vector<8x512xf32>
      %90 = vector.extract_strided_slice %89 {offsets = [0, 0], sizes = [8, 128], strides = [1, 1]} : vector<8x512xf32> to vector<8x128xf32>
      %91 = arith.negf %90 : vector<8x128xf32>
      %92 = math.exp %91 : vector<8x128xf32>
      %cst_39 = arith.constant 1.000000e+00 : f32
      %93 = vector.broadcast %cst_39 : f32 to vector<8x128xf32>
      %94 = arith.addf %93, %92 : vector<8x128xf32>
      %95 = arith.divf %93, %94 : vector<8x128xf32>
      %96 = vector.extract_strided_slice %89 {offsets = [0, 128], sizes = [8, 128], strides = [1, 1]} : vector<8x512xf32> to vector<8x128xf32>
      %97 = arith.negf %96 : vector<8x128xf32>
      %98 = math.exp %97 : vector<8x128xf32>
      %cst_40 = arith.constant 1.000000e+00 : f32
      %99 = vector.broadcast %cst_40 : f32 to vector<8x128xf32>
      %100 = arith.addf %99, %98 : vector<8x128xf32>
      %101 = arith.divf %99, %100 : vector<8x128xf32>
      %102 = vector.extract_strided_slice %89 {offsets = [0, 256], sizes = [8, 128], strides = [1, 1]} : vector<8x512xf32> to vector<8x128xf32>
      %103 = math.tanh %102 : vector<8x128xf32>
      %104 = vector.extract_strided_slice %89 {offsets = [0, 384], sizes = [8, 128], strides = [1, 1]} : vector<8x512xf32> to vector<8x128xf32>
      %105 = arith.negf %104 : vector<8x128xf32>
      %106 = math.exp %105 : vector<8x128xf32>
      %cst_41 = arith.constant 1.000000e+00 : f32
      %107 = vector.broadcast %cst_41 : f32 to vector<8x128xf32>
      %108 = arith.addf %107, %106 : vector<8x128xf32>
      %109 = arith.divf %107, %108 : vector<8x128xf32>
      %110 = arith.mulf %101, %81 : vector<8x128xf32>
      %111 = arith.mulf %95, %103 : vector<8x128xf32>
      %112 = arith.addf %110, %111 : vector<8x128xf32>
      %113 = math.tanh %112 : vector<8x128xf32>
      %114 = arith.mulf %109, %113 : vector<8x128xf32>
      %115 = arith.truncf %114 : vector<8x128xf32> to vector<8x128xbf16>
      %c16_42 = arith.constant 16 : index
      %c0_43 = arith.constant 0 : index
      %116 = vector.load %arg6[%c16_42, %c0_43] : memref<64x128xbf16, #tpu.memory_space<vmem>>, vector<8x128xbf16>
      tpu.vector_store %arg6[%c16_42, %c0_43], %115 {strides = array<i32>} : memref<64x128xbf16, #tpu.memory_space<vmem>>, vector<8x128xbf16>,
      %c24 = arith.constant 24 : index
      %c0_44 = arith.constant 0 : index
      %117 = vector.load %arg9[%c24, %c0_44] : memref<64x512xf32, #tpu.memory_space<vmem>>, vector<8x512xf32>
      %118 = arith.truncf %114 : vector<8x128xf32> to vector<8x128xbf16>
      %cst_45 = arith.constant dense<0.000000e+00> : vector<8x512xf32>
      %119 = tpu.matmul %118, %13, %cst_45 {dimension_numbers = #tpu.dot_dimension_numbers<[1], [0], [0], [1], [0, 0, 1, 1], [], []>} : vector<8x128xbf16>, vector<128x512xbf16>, vector<8x512xf32> -> vector<8x512xf32>
      %120 = arith.addf %117, %119 : vector<8x512xf32>
      %121 = vector.extract_strided_slice %120 {offsets = [0, 0], sizes = [8, 128], strides = [1, 1]} : vector<8x512xf32> to vector<8x128xf32>
      %122 = arith.negf %121 : vector<8x128xf32>
      %123 = math.exp %122 : vector<8x128xf32>
      %cst_46 = arith.constant 1.000000e+00 : f32
      %124 = vector.broadcast %cst_46 : f32 to vector<8x128xf32>
      %125 = arith.addf %124, %123 : vector<8x128xf32>
      %126 = arith.divf %124, %125 : vector<8x128xf32>
      %127 = vector.extract_strided_slice %120 {offsets = [0, 128], sizes = [8, 128], strides = [1, 1]} : vector<8x512xf32> to vector<8x128xf32>
      %128 = arith.negf %127 : vector<8x128xf32>
      %129 = math.exp %128 : vector<8x128xf32>
      %cst_47 = arith.constant 1.000000e+00 : f32
      %130 = vector.broadcast %cst_47 : f32 to vector<8x128xf32>
      %131 = arith.addf %130, %129 : vector<8x128xf32>
      %132 = arith.divf %130, %131 : vector<8x128xf32>
      %133 = vector.extract_strided_slice %120 {offsets = [0, 256], sizes = [8, 128], strides = [1, 1]} : vector<8x512xf32> to vector<8x128xf32>
      %134 = math.tanh %133 : vector<8x128xf32>
      %135 = vector.extract_strided_slice %120 {offsets = [0, 384], sizes = [8, 128], strides = [1, 1]} : vector<8x512xf32> to vector<8x128xf32>
      %136 = arith.negf %135 : vector<8x128xf32>
      %137 = math.exp %136 : vector<8x128xf32>
      %cst_48 = arith.constant 1.000000e+00 : f32
      %138 = vector.broadcast %cst_48 : f32 to vector<8x128xf32>
      %139 = arith.addf %138, %137 : vector<8x128xf32>
      %140 = arith.divf %138, %139 : vector<8x128xf32>
      %141 = arith.mulf %132, %112 : vector<8x128xf32>
      %142 = arith.mulf %126, %134 : vector<8x128xf32>
      %143 = arith.addf %141, %142 : vector<8x128xf32>
      %144 = math.tanh %143 : vector<8x128xf32>
      %145 = arith.mulf %140, %144 : vector<8x128xf32>
      %146 = arith.truncf %145 : vector<8x128xf32> to vector<8x128xbf16>
      %c24_49 = arith.constant 24 : index
      %c0_50 = arith.constant 0 : index
      %147 = vector.load %arg6[%c24_49, %c0_50] : memref<64x128xbf16, #tpu.memory_space<vmem>>, vector<8x128xbf16>
      tpu.vector_store %arg6[%c24_49, %c0_50], %146 {strides = array<i32>} : memref<64x128xbf16, #tpu.memory_space<vmem>>, vector<8x128xbf16>,
      %c32 = arith.constant 32 : index
      %c0_51 = arith.constant 0 : index
      %148 = vector.load %arg9[%c32, %c0_51] : memref<64x512xf32, #tpu.memory_space<vmem>>, vector<8x512xf32>
      %149 = arith.truncf %145 : vector<8x128xf32> to vector<8x128xbf16>
      %cst_52 = arith.constant dense<0.000000e+00> : vector<8x512xf32>
      %150 = tpu.matmul %149, %13, %cst_52 {dimension_numbers = #tpu.dot_dimension_numbers<[1], [0], [0], [1], [0, 0, 1, 1], [], []>} : vector<8x128xbf16>, vector<128x512xbf16>, vector<8x512xf32> -> vector<8x512xf32>
      %151 = arith.addf %148, %150 : vector<8x512xf32>
      %152 = vector.extract_strided_slice %151 {offsets = [0, 0], sizes = [8, 128], strides = [1, 1]} : vector<8x512xf32> to vector<8x128xf32>
      %153 = arith.negf %152 : vector<8x128xf32>
      %154 = math.exp %153 : vector<8x128xf32>
      %cst_53 = arith.constant 1.000000e+00 : f32
      %155 = vector.broadcast %cst_53 : f32 to vector<8x128xf32>
      %156 = arith.addf %155, %154 : vector<8x128xf32>
      %157 = arith.divf %155, %156 : vector<8x128xf32>
      %158 = vector.extract_strided_slice %151 {offsets = [0, 128], sizes = [8, 128], strides = [1, 1]} : vector<8x512xf32> to vector<8x128xf32>
      %159 = arith.negf %158 : vector<8x128xf32>
      %160 = math.exp %159 : vector<8x128xf32>
      %cst_54 = arith.constant 1.000000e+00 : f32
      %161 = vector.broadcast %cst_54 : f32 to vector<8x128xf32>
      %162 = arith.addf %161, %160 : vector<8x128xf32>
      %163 = arith.divf %161, %162 : vector<8x128xf32>
      %164 = vector.extract_strided_slice %151 {offsets = [0, 256], sizes = [8, 128], strides = [1, 1]} : vector<8x512xf32> to vector<8x128xf32>
      %165 = math.tanh %164 : vector<8x128xf32>
      %166 = vector.extract_strided_slice %151 {offsets = [0, 384], sizes = [8, 128], strides = [1, 1]} : vector<8x512xf32> to vector<8x128xf32>
      %167 = arith.negf %166 : vector<8x128xf32>
      %168 = math.exp %167 : vector<8x128xf32>
      %cst_55 = arith.constant 1.000000e+00 : f32
      %169 = vector.broadcast %cst_55 : f32 to vector<8x128xf32>
      %170 = arith.addf %169, %168 : vector<8x128xf32>
      %171 = arith.divf %169, %170 : vector<8x128xf32>
      %172 = arith.mulf %163, %143 : vector<8x128xf32>
      %173 = arith.mulf %157, %165 : vector<8x128xf32>
      %174 = arith.addf %172, %173 : vector<8x128xf32>
      %175 = math.tanh %174 : vector<8x128xf32>
      %176 = arith.mulf %171, %175 : vector<8x128xf32>
      %177 = arith.truncf %176 : vector<8x128xf32> to vector<8x128xbf16>
      %c32_56 = arith.constant 32 : index
      %c0_57 = arith.constant 0 : index
      %178 = vector.load %arg6[%c32_56, %c0_57] : memref<64x128xbf16, #tpu.memory_space<vmem>>, vector<8x128xbf16>
      tpu.vector_store %arg6[%c32_56, %c0_57], %177 {strides = array<i32>} : memref<64x128xbf16, #tpu.memory_space<vmem>>, vector<8x128xbf16>,
      %c40 = arith.constant 40 : index
      %c0_58 = arith.constant 0 : index
      %179 = vector.load %arg9[%c40, %c0_58] : memref<64x512xf32, #tpu.memory_space<vmem>>, vector<8x512xf32>
      %180 = arith.truncf %176 : vector<8x128xf32> to vector<8x128xbf16>
      %cst_59 = arith.constant dense<0.000000e+00> : vector<8x512xf32>
      %181 = tpu.matmul %180, %13, %cst_59 {dimension_numbers = #tpu.dot_dimension_numbers<[1], [0], [0], [1], [0, 0, 1, 1], [], []>} : vector<8x128xbf16>, vector<128x512xbf16>, vector<8x512xf32> -> vector<8x512xf32>
      %182 = arith.addf %179, %181 : vector<8x512xf32>
      %183 = vector.extract_strided_slice %182 {offsets = [0, 0], sizes = [8, 128], strides = [1, 1]} : vector<8x512xf32> to vector<8x128xf32>
      %184 = arith.negf %183 : vector<8x128xf32>
      %185 = math.exp %184 : vector<8x128xf32>
      %cst_60 = arith.constant 1.000000e+00 : f32
      %186 = vector.broadcast %cst_60 : f32 to vector<8x128xf32>
      %187 = arith.addf %186, %185 : vector<8x128xf32>
      %188 = arith.divf %186, %187 : vector<8x128xf32>
      %189 = vector.extract_strided_slice %182 {offsets = [0, 128], sizes = [8, 128], strides = [1, 1]} : vector<8x512xf32> to vector<8x128xf32>
      %190 = arith.negf %189 : vector<8x128xf32>
      %191 = math.exp %190 : vector<8x128xf32>
      %cst_61 = arith.constant 1.000000e+00 : f32
      %192 = vector.broadcast %cst_61 : f32 to vector<8x128xf32>
      %193 = arith.addf %192, %191 : vector<8x128xf32>
      %194 = arith.divf %192, %193 : vector<8x128xf32>
      %195 = vector.extract_strided_slice %182 {offsets = [0, 256], sizes = [8, 128], strides = [1, 1]} : vector<8x512xf32> to vector<8x128xf32>
      %196 = math.tanh %195 : vector<8x128xf32>
      %197 = vector.extract_strided_slice %182 {offsets = [0, 384], sizes = [8, 128], strides = [1, 1]} : vector<8x512xf32> to vector<8x128xf32>
      %198 = arith.negf %197 : vector<8x128xf32>
      %199 = math.exp %198 : vector<8x128xf32>
      %cst_62 = arith.constant 1.000000e+00 : f32
      %200 = vector.broadcast %cst_62 : f32 to vector<8x128xf32>
      %201 = arith.addf %200, %199 : vector<8x128xf32>
      %202 = arith.divf %200, %201 : vector<8x128xf32>
      %203 = arith.mulf %194, %174 : vector<8x128xf32>
      %204 = arith.mulf %188, %196 : vector<8x128xf32>
      %205 = arith.addf %203, %204 : vector<8x128xf32>
      %206 = math.tanh %205 : vector<8x128xf32>
      %207 = arith.mulf %202, %206 : vector<8x128xf32>
      %208 = arith.truncf %207 : vector<8x128xf32> to vector<8x128xbf16>
      %c40_63 = arith.constant 40 : index
      %c0_64 = arith.constant 0 : index
      %209 = vector.load %arg6[%c40_63, %c0_64] : memref<64x128xbf16, #tpu.memory_space<vmem>>, vector<8x128xbf16>
      tpu.vector_store %arg6[%c40_63, %c0_64], %208 {strides = array<i32>} : memref<64x128xbf16, #tpu.memory_space<vmem>>, vector<8x128xbf16>,
      %c48 = arith.constant 48 : index
      %c0_65 = arith.constant 0 : index
      %210 = vector.load %arg9[%c48, %c0_65] : memref<64x512xf32, #tpu.memory_space<vmem>>, vector<8x512xf32>
      %211 = arith.truncf %207 : vector<8x128xf32> to vector<8x128xbf16>
      %cst_66 = arith.constant dense<0.000000e+00> : vector<8x512xf32>
      %212 = tpu.matmul %211, %13, %cst_66 {dimension_numbers = #tpu.dot_dimension_numbers<[1], [0], [0], [1], [0, 0, 1, 1], [], []>} : vector<8x128xbf16>, vector<128x512xbf16>, vector<8x512xf32> -> vector<8x512xf32>
      %213 = arith.addf %210, %212 : vector<8x512xf32>
      %214 = vector.extract_strided_slice %213 {offsets = [0, 0], sizes = [8, 128], strides = [1, 1]} : vector<8x512xf32> to vector<8x128xf32>
      %215 = arith.negf %214 : vector<8x128xf32>
      %216 = math.exp %215 : vector<8x128xf32>
      %cst_67 = arith.constant 1.000000e+00 : f32
      %217 = vector.broadcast %cst_67 : f32 to vector<8x128xf32>
      %218 = arith.addf %217, %216 : vector<8x128xf32>
      %219 = arith.divf %217, %218 : vector<8x128xf32>
      %220 = vector.extract_strided_slice %213 {offsets = [0, 128], sizes = [8, 128], strides = [1, 1]} : vector<8x512xf32> to vector<8x128xf32>
      %221 = arith.negf %220 : vector<8x128xf32>
      %222 = math.exp %221 : vector<8x128xf32>
      %cst_68 = arith.constant 1.000000e+00 : f32
      %223 = vector.broadcast %cst_68 : f32 to vector<8x128xf32>
      %224 = arith.addf %223, %222 : vector<8x128xf32>
      %225 = arith.divf %223, %224 : vector<8x128xf32>
      %226 = vector.extract_strided_slice %213 {offsets = [0, 256], sizes = [8, 128], strides = [1, 1]} : vector<8x512xf32> to vector<8x128xf32>
      %227 = math.tanh %226 : vector<8x128xf32>
      %228 = vector.extract_strided_slice %213 {offsets = [0, 384], sizes = [8, 128], strides = [1, 1]} : vector<8x512xf32> to vector<8x128xf32>
      %229 = arith.negf %228 : vector<8x128xf32>
      %230 = math.exp %229 : vector<8x128xf32>
      %cst_69 = arith.constant 1.000000e+00 : f32
      %231 = vector.broadcast %cst_69 : f32 to vector<8x128xf32>
      %232 = arith.addf %231, %230 : vector<8x128xf32>
      %233 = arith.divf %231, %232 : vector<8x128xf32>
      %234 = arith.mulf %225, %205 : vector<8x128xf32>
      %235 = arith.mulf %219, %227 : vector<8x128xf32>
      %236 = arith.addf %234, %235 : vector<8x128xf32>
      %237 = math.tanh %236 : vector<8x128xf32>
      %238 = arith.mulf %233, %237 : vector<8x128xf32>
      %239 = arith.truncf %238 : vector<8x128xf32> to vector<8x128xbf16>
      %c48_70 = arith.constant 48 : index
      %c0_71 = arith.constant 0 : index
      %240 = vector.load %arg6[%c48_70, %c0_71] : memref<64x128xbf16, #tpu.memory_space<vmem>>, vector<8x128xbf16>
      tpu.vector_store %arg6[%c48_70, %c0_71], %239 {strides = array<i32>} : memref<64x128xbf16, #tpu.memory_space<vmem>>, vector<8x128xbf16>,
      %c56 = arith.constant 56 : index
      %c0_72 = arith.constant 0 : index
      %241 = vector.load %arg9[%c56, %c0_72] : memref<64x512xf32, #tpu.memory_space<vmem>>, vector<8x512xf32>
      %242 = arith.truncf %238 : vector<8x128xf32> to vector<8x128xbf16>
      %cst_73 = arith.constant dense<0.000000e+00> : vector<8x512xf32>
      %243 = tpu.matmul %242, %13, %cst_73 {dimension_numbers = #tpu.dot_dimension_numbers<[1], [0], [0], [1], [0, 0, 1, 1], [], []>} : vector<8x128xbf16>, vector<128x512xbf16>, vector<8x512xf32> -> vector<8x512xf32>
      %244 = arith.addf %241, %243 : vector<8x512xf32>
      %245 = vector.extract_strided_slice %244 {offsets = [0, 0], sizes = [8, 128], strides = [1, 1]} : vector<8x512xf32> to vector<8x128xf32>
      %246 = arith.negf %245 : vector<8x128xf32>
      %247 = math.exp %246 : vector<8x128xf32>
      %cst_74 = arith.constant 1.000000e+00 : f32
      %248 = vector.broadcast %cst_74 : f32 to vector<8x128xf32>
      %249 = arith.addf %248, %247 : vector<8x128xf32>
      %250 = arith.divf %248, %249 : vector<8x128xf32>
      %251 = vector.extract_strided_slice %244 {offsets = [0, 128], sizes = [8, 128], strides = [1, 1]} : vector<8x512xf32> to vector<8x128xf32>
      %252 = arith.negf %251 : vector<8x128xf32>
      %253 = math.exp %252 : vector<8x128xf32>
      %cst_75 = arith.constant 1.000000e+00 : f32
      %254 = vector.broadcast %cst_75 : f32 to vector<8x128xf32>
      %255 = arith.addf %254, %253 : vector<8x128xf32>
      %256 = arith.divf %254, %255 : vector<8x128xf32>
      %257 = vector.extract_strided_slice %244 {offsets = [0, 256], sizes = [8, 128], strides = [1, 1]} : vector<8x512xf32> to vector<8x128xf32>
      %258 = math.tanh %257 : vector<8x128xf32>
      %259 = vector.extract_strided_slice %244 {offsets = [0, 384], sizes = [8, 128], strides = [1, 1]} : vector<8x512xf32> to vector<8x128xf32>
      %260 = arith.negf %259 : vector<8x128xf32>
      %261 = math.exp %260 : vector<8x128xf32>
      %cst_76 = arith.constant 1.000000e+00 : f32
      %262 = vector.broadcast %cst_76 : f32 to vector<8x128xf32>
      %263 = arith.addf %262, %261 : vector<8x128xf32>
      %264 = arith.divf %262, %263 : vector<8x128xf32>
      %265 = arith.mulf %256, %236 : vector<8x128xf32>
      %266 = arith.mulf %250, %258 : vector<8x128xf32>
      %267 = arith.addf %265, %266 : vector<8x128xf32>
      %268 = math.tanh %267 : vector<8x128xf32>
      %269 = arith.mulf %264, %268 : vector<8x128xf32>
      %270 = arith.truncf %269 : vector<8x128xf32> to vector<8x128xbf16>
      %c56_77 = arith.constant 56 : index
      %c0_78 = arith.constant 0 : index
      %271 = vector.load %arg6[%c56_77, %c0_78] : memref<64x128xbf16, #tpu.memory_space<vmem>>, vector<8x128xbf16>
      tpu.vector_store %arg6[%c56_77, %c0_78], %270 {strides = array<i32>} : memref<64x128xbf16, #tpu.memory_space<vmem>>, vector<8x128xbf16>,
      %c0_79 = arith.constant 0 : index
      %c0_80 = arith.constant 0 : index
      %c0_81 = arith.constant 0 : index
      %272 = vector.load %arg7[%c0_79, %c0_80, %c0_81] : memref<1x8x128xf32, #tpu.memory_space<vmem>>, vector<1x8x128xf32>
      %273 = vector.shape_cast %272 : vector<1x8x128xf32> to vector<8x128xf32>
      %274 = vector.shape_cast %269 : vector<8x128xf32> to vector<1x8x128xf32>
      tpu.vector_store %arg7[%c0_79, %c0_80, %c0_81], %274 {strides = array<i32>} : memref<1x8x128xf32, #tpu.memory_space<vmem>>, vector<1x8x128xf32>,
      %c0_82 = arith.constant 0 : index
      %c0_83 = arith.constant 0 : index
      %c0_84 = arith.constant 0 : index
      %275 = vector.load %arg8[%c0_82, %c0_83, %c0_84] : memref<1x8x128xf32, #tpu.memory_space<vmem>>, vector<1x8x128xf32>
      %276 = vector.shape_cast %275 : vector<1x8x128xf32> to vector<8x128xf32>
      %277 = vector.shape_cast %267 : vector<8x128xf32> to vector<1x8x128xf32>
      tpu.vector_store %arg8[%c0_82, %c0_83, %c0_84], %277 {strides = array<i32>} : memref<1x8x128xf32, #tpu.memory_space<vmem>>, vector<1x8x128xf32>,
    } else {
    }
    %c1_i32 = arith.constant 1 : i32
    %17 = arith.cmpi eq, %arg0, %c1_i32 : i32
    %18 = arith.extui %17 : i1 to i32
    %c0_i32_15 = arith.constant 0 : i32
    %19 = arith.cmpi ne, %18, %c0_i32_15 : i32
    scf.if %19 {
      %c0_16 = arith.constant 0 : index
      %c0_17 = arith.constant 0 : index
      %c0_18 = arith.constant 0 : index
      %20 = vector.load %arg7[%c0_16, %c0_17, %c0_18] : memref<1x8x128xf32, #tpu.memory_space<vmem>>, vector<1x8x128xf32>
      %21 = vector.shape_cast %20 : vector<1x8x128xf32> to vector<8x128xf32>
      %c0_19 = arith.constant 0 : index
      %c0_20 = arith.constant 0 : index
      %c0_21 = arith.constant 0 : index
      %22 = vector.load %arg8[%c0_19, %c0_20, %c0_21] : memref<1x8x128xf32, #tpu.memory_space<vmem>>, vector<1x8x128xf32>
      %23 = vector.shape_cast %22 : vector<1x8x128xf32> to vector<8x128xf32>
      %c56 = arith.constant 56 : index
      %c0_22 = arith.constant 0 : index
      %24 = vector.load %arg9[%c56, %c0_22] : memref<64x512xf32, #tpu.memory_space<vmem>>, vector<8x512xf32>
      %25 = arith.truncf %21 : vector<8x128xf32> to vector<8x128xbf16>
      %cst_23 = arith.constant dense<0.000000e+00> : vector<8x512xf32>
      %26 = tpu.matmul %25, %13, %cst_23 {dimension_numbers = #tpu.dot_dimension_numbers<[1], [0], [0], [1], [0, 0, 1, 1], [], []>} : vector<8x128xbf16>, vector<128x512xbf16>, vector<8x512xf32> -> vector<8x512xf32>
      %27 = arith.addf %24, %26 : vector<8x512xf32>
      %28 = vector.extract_strided_slice %27 {offsets = [0, 0], sizes = [8, 128], strides = [1, 1]} : vector<8x512xf32> to vector<8x128xf32>
      %29 = arith.negf %28 : vector<8x128xf32>
      %30 = math.exp %29 : vector<8x128xf32>
      %cst_24 = arith.constant 1.000000e+00 : f32
      %31 = vector.broadcast %cst_24 : f32 to vector<8x128xf32>
      %32 = arith.addf %31, %30 : vector<8x128xf32>
      %33 = arith.divf %31, %32 : vector<8x128xf32>
      %34 = vector.extract_strided_slice %27 {offsets = [0, 128], sizes = [8, 128], strides = [1, 1]} : vector<8x512xf32> to vector<8x128xf32>
      %35 = arith.negf %34 : vector<8x128xf32>
      %36 = math.exp %35 : vector<8x128xf32>
      %cst_25 = arith.constant 1.000000e+00 : f32
      %37 = vector.broadcast %cst_25 : f32 to vector<8x128xf32>
      %38 = arith.addf %37, %36 : vector<8x128xf32>
      %39 = arith.divf %37, %38 : vector<8x128xf32>
      %40 = vector.extract_strided_slice %27 {offsets = [0, 256], sizes = [8, 128], strides = [1, 1]} : vector<8x512xf32> to vector<8x128xf32>
      %41 = math.tanh %40 : vector<8x128xf32>
      %42 = vector.extract_strided_slice %27 {offsets = [0, 384], sizes = [8, 128], strides = [1, 1]} : vector<8x512xf32> to vector<8x128xf32>
      %43 = arith.negf %42 : vector<8x128xf32>
      %44 = math.exp %43 : vector<8x128xf32>
      %cst_26 = arith.constant 1.000000e+00 : f32
      %45 = vector.broadcast %cst_26 : f32 to vector<8x128xf32>
      %46 = arith.addf %45, %44 : vector<8x128xf32>
      %47 = arith.divf %45, %46 : vector<8x128xf32>
      %48 = arith.mulf %39, %23 : vector<8x128xf32>
      %49 = arith.mulf %33, %41 : vector<8x128xf32>
      %50 = arith.addf %48, %49 : vector<8x128xf32>
      %51 = math.tanh %50 : vector<8x128xf32>
      %52 = arith.mulf %47, %51 : vector<8x128xf32>
      %53 = arith.truncf %52 : vector<8x128xf32> to vector<8x128xbf16>
      %c56_27 = arith.constant 56 : index
      %c0_28 = arith.constant 0 : index
      %54 = vector.load %arg6[%c56_27, %c0_28] : memref<64x128xbf16, #tpu.memory_space<vmem>>, vector<8x128xbf16>
      tpu.vector_store %arg6[%c56_27, %c0_28], %53 {strides = array<i32>} : memref<64x128xbf16, #tpu.memory_space<vmem>>, vector<8x128xbf16>,
      %c48 = arith.constant 48 : index
      %c0_29 = arith.constant 0 : index
      %55 = vector.load %arg9[%c48, %c0_29] : memref<64x512xf32, #tpu.memory_space<vmem>>, vector<8x512xf32>
      %56 = arith.truncf %52 : vector<8x128xf32> to vector<8x128xbf16>
      %cst_30 = arith.constant dense<0.000000e+00> : vector<8x512xf32>
      %57 = tpu.matmul %56, %13, %cst_30 {dimension_numbers = #tpu.dot_dimension_numbers<[1], [0], [0], [1], [0, 0, 1, 1], [], []>} : vector<8x128xbf16>, vector<128x512xbf16>, vector<8x512xf32> -> vector<8x512xf32>
      %58 = arith.addf %55, %57 : vector<8x512xf32>
      %59 = vector.extract_strided_slice %58 {offsets = [0, 0], sizes = [8, 128], strides = [1, 1]} : vector<8x512xf32> to vector<8x128xf32>
      %60 = arith.negf %59 : vector<8x128xf32>
      %61 = math.exp %60 : vector<8x128xf32>
      %cst_31 = arith.constant 1.000000e+00 : f32
      %62 = vector.broadcast %cst_31 : f32 to vector<8x128xf32>
      %63 = arith.addf %62, %61 : vector<8x128xf32>
      %64 = arith.divf %62, %63 : vector<8x128xf32>
      %65 = vector.extract_strided_slice %58 {offsets = [0, 128], sizes = [8, 128], strides = [1, 1]} : vector<8x512xf32> to vector<8x128xf32>
      %66 = arith.negf %65 : vector<8x128xf32>
      %67 = math.exp %66 : vector<8x128xf32>
      %cst_32 = arith.constant 1.000000e+00 : f32
      %68 = vector.broadcast %cst_32 : f32 to vector<8x128xf32>
      %69 = arith.addf %68, %67 : vector<8x128xf32>
      %70 = arith.divf %68, %69 : vector<8x128xf32>
      %71 = vector.extract_strided_slice %58 {offsets = [0, 256], sizes = [8, 128], strides = [1, 1]} : vector<8x512xf32> to vector<8x128xf32>
      %72 = math.tanh %71 : vector<8x128xf32>
      %73 = vector.extract_strided_slice %58 {offsets = [0, 384], sizes = [8, 128], strides = [1, 1]} : vector<8x512xf32> to vector<8x128xf32>
      %74 = arith.negf %73 : vector<8x128xf32>
      %75 = math.exp %74 : vector<8x128xf32>
      %cst_33 = arith.constant 1.000000e+00 : f32
      %76 = vector.broadcast %cst_33 : f32 to vector<8x128xf32>
      %77 = arith.addf %76, %75 : vector<8x128xf32>
      %78 = arith.divf %76, %77 : vector<8x128xf32>
      %79 = arith.mulf %70, %50 : vector<8x128xf32>
      %80 = arith.mulf %64, %72 : vector<8x128xf32>
      %81 = arith.addf %79, %80 : vector<8x128xf32>
      %82 = math.tanh %81 : vector<8x128xf32>
      %83 = arith.mulf %78, %82 : vector<8x128xf32>
      %84 = arith.truncf %83 : vector<8x128xf32> to vector<8x128xbf16>
      %c48_34 = arith.constant 48 : index
      %c0_35 = arith.constant 0 : index
      %85 = vector.load %arg6[%c48_34, %c0_35] : memref<64x128xbf16, #tpu.memory_space<vmem>>, vector<8x128xbf16>
      tpu.vector_store %arg6[%c48_34, %c0_35], %84 {strides = array<i32>} : memref<64x128xbf16, #tpu.memory_space<vmem>>, vector<8x128xbf16>,
      %c40 = arith.constant 40 : index
      %c0_36 = arith.constant 0 : index
      %86 = vector.load %arg9[%c40, %c0_36] : memref<64x512xf32, #tpu.memory_space<vmem>>, vector<8x512xf32>
      %87 = arith.truncf %83 : vector<8x128xf32> to vector<8x128xbf16>
      %cst_37 = arith.constant dense<0.000000e+00> : vector<8x512xf32>
      %88 = tpu.matmul %87, %13, %cst_37 {dimension_numbers = #tpu.dot_dimension_numbers<[1], [0], [0], [1], [0, 0, 1, 1], [], []>} : vector<8x128xbf16>, vector<128x512xbf16>, vector<8x512xf32> -> vector<8x512xf32>
      %89 = arith.addf %86, %88 : vector<8x512xf32>
      %90 = vector.extract_strided_slice %89 {offsets = [0, 0], sizes = [8, 128], strides = [1, 1]} : vector<8x512xf32> to vector<8x128xf32>
      %91 = arith.negf %90 : vector<8x128xf32>
      %92 = math.exp %91 : vector<8x128xf32>
      %cst_38 = arith.constant 1.000000e+00 : f32
      %93 = vector.broadcast %cst_38 : f32 to vector<8x128xf32>
      %94 = arith.addf %93, %92 : vector<8x128xf32>
      %95 = arith.divf %93, %94 : vector<8x128xf32>
      %96 = vector.extract_strided_slice %89 {offsets = [0, 128], sizes = [8, 128], strides = [1, 1]} : vector<8x512xf32> to vector<8x128xf32>
      %97 = arith.negf %96 : vector<8x128xf32>
      %98 = math.exp %97 : vector<8x128xf32>
      %cst_39 = arith.constant 1.000000e+00 : f32
      %99 = vector.broadcast %cst_39 : f32 to vector<8x128xf32>
      %100 = arith.addf %99, %98 : vector<8x128xf32>
      %101 = arith.divf %99, %100 : vector<8x128xf32>
      %102 = vector.extract_strided_slice %89 {offsets = [0, 256], sizes = [8, 128], strides = [1, 1]} : vector<8x512xf32> to vector<8x128xf32>
      %103 = math.tanh %102 : vector<8x128xf32>
      %104 = vector.extract_strided_slice %89 {offsets = [0, 384], sizes = [8, 128], strides = [1, 1]} : vector<8x512xf32> to vector<8x128xf32>
      %105 = arith.negf %104 : vector<8x128xf32>
      %106 = math.exp %105 : vector<8x128xf32>
      %cst_40 = arith.constant 1.000000e+00 : f32
      %107 = vector.broadcast %cst_40 : f32 to vector<8x128xf32>
      %108 = arith.addf %107, %106 : vector<8x128xf32>
      %109 = arith.divf %107, %108 : vector<8x128xf32>
      %110 = arith.mulf %101, %81 : vector<8x128xf32>
      %111 = arith.mulf %95, %103 : vector<8x128xf32>
      %112 = arith.addf %110, %111 : vector<8x128xf32>
      %113 = math.tanh %112 : vector<8x128xf32>
      %114 = arith.mulf %109, %113 : vector<8x128xf32>
      %115 = arith.truncf %114 : vector<8x128xf32> to vector<8x128xbf16>
      %c40_41 = arith.constant 40 : index
      %c0_42 = arith.constant 0 : index
      %116 = vector.load %arg6[%c40_41, %c0_42] : memref<64x128xbf16, #tpu.memory_space<vmem>>, vector<8x128xbf16>
      tpu.vector_store %arg6[%c40_41, %c0_42], %115 {strides = array<i32>} : memref<64x128xbf16, #tpu.memory_space<vmem>>, vector<8x128xbf16>,
      %c32 = arith.constant 32 : index
      %c0_43 = arith.constant 0 : index
      %117 = vector.load %arg9[%c32, %c0_43] : memref<64x512xf32, #tpu.memory_space<vmem>>, vector<8x512xf32>
      %118 = arith.truncf %114 : vector<8x128xf32> to vector<8x128xbf16>
      %cst_44 = arith.constant dense<0.000000e+00> : vector<8x512xf32>
      %119 = tpu.matmul %118, %13, %cst_44 {dimension_numbers = #tpu.dot_dimension_numbers<[1], [0], [0], [1], [0, 0, 1, 1], [], []>} : vector<8x128xbf16>, vector<128x512xbf16>, vector<8x512xf32> -> vector<8x512xf32>
      %120 = arith.addf %117, %119 : vector<8x512xf32>
      %121 = vector.extract_strided_slice %120 {offsets = [0, 0], sizes = [8, 128], strides = [1, 1]} : vector<8x512xf32> to vector<8x128xf32>
      %122 = arith.negf %121 : vector<8x128xf32>
      %123 = math.exp %122 : vector<8x128xf32>
      %cst_45 = arith.constant 1.000000e+00 : f32
      %124 = vector.broadcast %cst_45 : f32 to vector<8x128xf32>
      %125 = arith.addf %124, %123 : vector<8x128xf32>
      %126 = arith.divf %124, %125 : vector<8x128xf32>
      %127 = vector.extract_strided_slice %120 {offsets = [0, 128], sizes = [8, 128], strides = [1, 1]} : vector<8x512xf32> to vector<8x128xf32>
      %128 = arith.negf %127 : vector<8x128xf32>
      %129 = math.exp %128 : vector<8x128xf32>
      %cst_46 = arith.constant 1.000000e+00 : f32
      %130 = vector.broadcast %cst_46 : f32 to vector<8x128xf32>
      %131 = arith.addf %130, %129 : vector<8x128xf32>
      %132 = arith.divf %130, %131 : vector<8x128xf32>
      %133 = vector.extract_strided_slice %120 {offsets = [0, 256], sizes = [8, 128], strides = [1, 1]} : vector<8x512xf32> to vector<8x128xf32>
      %134 = math.tanh %133 : vector<8x128xf32>
      %135 = vector.extract_strided_slice %120 {offsets = [0, 384], sizes = [8, 128], strides = [1, 1]} : vector<8x512xf32> to vector<8x128xf32>
      %136 = arith.negf %135 : vector<8x128xf32>
      %137 = math.exp %136 : vector<8x128xf32>
      %cst_47 = arith.constant 1.000000e+00 : f32
      %138 = vector.broadcast %cst_47 : f32 to vector<8x128xf32>
      %139 = arith.addf %138, %137 : vector<8x128xf32>
      %140 = arith.divf %138, %139 : vector<8x128xf32>
      %141 = arith.mulf %132, %112 : vector<8x128xf32>
      %142 = arith.mulf %126, %134 : vector<8x128xf32>
      %143 = arith.addf %141, %142 : vector<8x128xf32>
      %144 = math.tanh %143 : vector<8x128xf32>
      %145 = arith.mulf %140, %144 : vector<8x128xf32>
      %146 = arith.truncf %145 : vector<8x128xf32> to vector<8x128xbf16>
      %c32_48 = arith.constant 32 : index
      %c0_49 = arith.constant 0 : index
      %147 = vector.load %arg6[%c32_48, %c0_49] : memref<64x128xbf16, #tpu.memory_space<vmem>>, vector<8x128xbf16>
      tpu.vector_store %arg6[%c32_48, %c0_49], %146 {strides = array<i32>} : memref<64x128xbf16, #tpu.memory_space<vmem>>, vector<8x128xbf16>,
      %c24 = arith.constant 24 : index
      %c0_50 = arith.constant 0 : index
      %148 = vector.load %arg9[%c24, %c0_50] : memref<64x512xf32, #tpu.memory_space<vmem>>, vector<8x512xf32>
      %149 = arith.truncf %145 : vector<8x128xf32> to vector<8x128xbf16>
      %cst_51 = arith.constant dense<0.000000e+00> : vector<8x512xf32>
      %150 = tpu.matmul %149, %13, %cst_51 {dimension_numbers = #tpu.dot_dimension_numbers<[1], [0], [0], [1], [0, 0, 1, 1], [], []>} : vector<8x128xbf16>, vector<128x512xbf16>, vector<8x512xf32> -> vector<8x512xf32>
      %151 = arith.addf %148, %150 : vector<8x512xf32>
      %152 = vector.extract_strided_slice %151 {offsets = [0, 0], sizes = [8, 128], strides = [1, 1]} : vector<8x512xf32> to vector<8x128xf32>
      %153 = arith.negf %152 : vector<8x128xf32>
      %154 = math.exp %153 : vector<8x128xf32>
      %cst_52 = arith.constant 1.000000e+00 : f32
      %155 = vector.broadcast %cst_52 : f32 to vector<8x128xf32>
      %156 = arith.addf %155, %154 : vector<8x128xf32>
      %157 = arith.divf %155, %156 : vector<8x128xf32>
      %158 = vector.extract_strided_slice %151 {offsets = [0, 128], sizes = [8, 128], strides = [1, 1]} : vector<8x512xf32> to vector<8x128xf32>
      %159 = arith.negf %158 : vector<8x128xf32>
      %160 = math.exp %159 : vector<8x128xf32>
      %cst_53 = arith.constant 1.000000e+00 : f32
      %161 = vector.broadcast %cst_53 : f32 to vector<8x128xf32>
      %162 = arith.addf %161, %160 : vector<8x128xf32>
      %163 = arith.divf %161, %162 : vector<8x128xf32>
      %164 = vector.extract_strided_slice %151 {offsets = [0, 256], sizes = [8, 128], strides = [1, 1]} : vector<8x512xf32> to vector<8x128xf32>
      %165 = math.tanh %164 : vector<8x128xf32>
      %166 = vector.extract_strided_slice %151 {offsets = [0, 384], sizes = [8, 128], strides = [1, 1]} : vector<8x512xf32> to vector<8x128xf32>
      %167 = arith.negf %166 : vector<8x128xf32>
      %168 = math.exp %167 : vector<8x128xf32>
      %cst_54 = arith.constant 1.000000e+00 : f32
      %169 = vector.broadcast %cst_54 : f32 to vector<8x128xf32>
      %170 = arith.addf %169, %168 : vector<8x128xf32>
      %171 = arith.divf %169, %170 : vector<8x128xf32>
      %172 = arith.mulf %163, %143 : vector<8x128xf32>
      %173 = arith.mulf %157, %165 : vector<8x128xf32>
      %174 = arith.addf %172, %173 : vector<8x128xf32>
      %175 = math.tanh %174 : vector<8x128xf32>
      %176 = arith.mulf %171, %175 : vector<8x128xf32>
      %177 = arith.truncf %176 : vector<8x128xf32> to vector<8x128xbf16>
      %c24_55 = arith.constant 24 : index
      %c0_56 = arith.constant 0 : index
      %178 = vector.load %arg6[%c24_55, %c0_56] : memref<64x128xbf16, #tpu.memory_space<vmem>>, vector<8x128xbf16>
      tpu.vector_store %arg6[%c24_55, %c0_56], %177 {strides = array<i32>} : memref<64x128xbf16, #tpu.memory_space<vmem>>, vector<8x128xbf16>,
      %c16 = arith.constant 16 : index
      %c0_57 = arith.constant 0 : index
      %179 = vector.load %arg9[%c16, %c0_57] : memref<64x512xf32, #tpu.memory_space<vmem>>, vector<8x512xf32>
      %180 = arith.truncf %176 : vector<8x128xf32> to vector<8x128xbf16>
      %cst_58 = arith.constant dense<0.000000e+00> : vector<8x512xf32>
      %181 = tpu.matmul %180, %13, %cst_58 {dimension_numbers = #tpu.dot_dimension_numbers<[1], [0], [0], [1], [0, 0, 1, 1], [], []>} : vector<8x128xbf16>, vector<128x512xbf16>, vector<8x512xf32> -> vector<8x512xf32>
      %182 = arith.addf %179, %181 : vector<8x512xf32>
      %183 = vector.extract_strided_slice %182 {offsets = [0, 0], sizes = [8, 128], strides = [1, 1]} : vector<8x512xf32> to vector<8x128xf32>
      %184 = arith.negf %183 : vector<8x128xf32>
      %185 = math.exp %184 : vector<8x128xf32>
      %cst_59 = arith.constant 1.000000e+00 : f32
      %186 = vector.broadcast %cst_59 : f32 to vector<8x128xf32>
      %187 = arith.addf %186, %185 : vector<8x128xf32>
      %188 = arith.divf %186, %187 : vector<8x128xf32>
      %189 = vector.extract_strided_slice %182 {offsets = [0, 128], sizes = [8, 128], strides = [1, 1]} : vector<8x512xf32> to vector<8x128xf32>
      %190 = arith.negf %189 : vector<8x128xf32>
      %191 = math.exp %190 : vector<8x128xf32>
      %cst_60 = arith.constant 1.000000e+00 : f32
      %192 = vector.broadcast %cst_60 : f32 to vector<8x128xf32>
      %193 = arith.addf %192, %191 : vector<8x128xf32>
      %194 = arith.divf %192, %193 : vector<8x128xf32>
      %195 = vector.extract_strided_slice %182 {offsets = [0, 256], sizes = [8, 128], strides = [1, 1]} : vector<8x512xf32> to vector<8x128xf32>
      %196 = math.tanh %195 : vector<8x128xf32>
      %197 = vector.extract_strided_slice %182 {offsets = [0, 384], sizes = [8, 128], strides = [1, 1]} : vector<8x512xf32> to vector<8x128xf32>
      %198 = arith.negf %197 : vector<8x128xf32>
      %199 = math.exp %198 : vector<8x128xf32>
      %cst_61 = arith.constant 1.000000e+00 : f32
      %200 = vector.broadcast %cst_61 : f32 to vector<8x128xf32>
      %201 = arith.addf %200, %199 : vector<8x128xf32>
      %202 = arith.divf %200, %201 : vector<8x128xf32>
      %203 = arith.mulf %194, %174 : vector<8x128xf32>
      %204 = arith.mulf %188, %196 : vector<8x128xf32>
      %205 = arith.addf %203, %204 : vector<8x128xf32>
      %206 = math.tanh %205 : vector<8x128xf32>
      %207 = arith.mulf %202, %206 : vector<8x128xf32>
      %208 = arith.truncf %207 : vector<8x128xf32> to vector<8x128xbf16>
      %c16_62 = arith.constant 16 : index
      %c0_63 = arith.constant 0 : index
      %209 = vector.load %arg6[%c16_62, %c0_63] : memref<64x128xbf16, #tpu.memory_space<vmem>>, vector<8x128xbf16>
      tpu.vector_store %arg6[%c16_62, %c0_63], %208 {strides = array<i32>} : memref<64x128xbf16, #tpu.memory_space<vmem>>, vector<8x128xbf16>,
      %c8 = arith.constant 8 : index
      %c0_64 = arith.constant 0 : index
      %210 = vector.load %arg9[%c8, %c0_64] : memref<64x512xf32, #tpu.memory_space<vmem>>, vector<8x512xf32>
      %211 = arith.truncf %207 : vector<8x128xf32> to vector<8x128xbf16>
      %cst_65 = arith.constant dense<0.000000e+00> : vector<8x512xf32>
      %212 = tpu.matmul %211, %13, %cst_65 {dimension_numbers = #tpu.dot_dimension_numbers<[1], [0], [0], [1], [0, 0, 1, 1], [], []>} : vector<8x128xbf16>, vector<128x512xbf16>, vector<8x512xf32> -> vector<8x512xf32>
      %213 = arith.addf %210, %212 : vector<8x512xf32>
      %214 = vector.extract_strided_slice %213 {offsets = [0, 0], sizes = [8, 128], strides = [1, 1]} : vector<8x512xf32> to vector<8x128xf32>
      %215 = arith.negf %214 : vector<8x128xf32>
      %216 = math.exp %215 : vector<8x128xf32>
      %cst_66 = arith.constant 1.000000e+00 : f32
      %217 = vector.broadcast %cst_66 : f32 to vector<8x128xf32>
      %218 = arith.addf %217, %216 : vector<8x128xf32>
      %219 = arith.divf %217, %218 : vector<8x128xf32>
      %220 = vector.extract_strided_slice %213 {offsets = [0, 128], sizes = [8, 128], strides = [1, 1]} : vector<8x512xf32> to vector<8x128xf32>
      %221 = arith.negf %220 : vector<8x128xf32>
      %222 = math.exp %221 : vector<8x128xf32>
      %cst_67 = arith.constant 1.000000e+00 : f32
      %223 = vector.broadcast %cst_67 : f32 to vector<8x128xf32>
      %224 = arith.addf %223, %222 : vector<8x128xf32>
      %225 = arith.divf %223, %224 : vector<8x128xf32>
      %226 = vector.extract_strided_slice %213 {offsets = [0, 256], sizes = [8, 128], strides = [1, 1]} : vector<8x512xf32> to vector<8x128xf32>
      %227 = math.tanh %226 : vector<8x128xf32>
      %228 = vector.extract_strided_slice %213 {offsets = [0, 384], sizes = [8, 128], strides = [1, 1]} : vector<8x512xf32> to vector<8x128xf32>
      %229 = arith.negf %228 : vector<8x128xf32>
      %230 = math.exp %229 : vector<8x128xf32>
      %cst_68 = arith.constant 1.000000e+00 : f32
      %231 = vector.broadcast %cst_68 : f32 to vector<8x128xf32>
      %232 = arith.addf %231, %230 : vector<8x128xf32>
      %233 = arith.divf %231, %232 : vector<8x128xf32>
      %234 = arith.mulf %225, %205 : vector<8x128xf32>
      %235 = arith.mulf %219, %227 : vector<8x128xf32>
      %236 = arith.addf %234, %235 : vector<8x128xf32>
      %237 = math.tanh %236 : vector<8x128xf32>
      %238 = arith.mulf %233, %237 : vector<8x128xf32>
      %239 = arith.truncf %238 : vector<8x128xf32> to vector<8x128xbf16>
      %c8_69 = arith.constant 8 : index
      %c0_70 = arith.constant 0 : index
      %240 = vector.load %arg6[%c8_69, %c0_70] : memref<64x128xbf16, #tpu.memory_space<vmem>>, vector<8x128xbf16>
      tpu.vector_store %arg6[%c8_69, %c0_70], %239 {strides = array<i32>} : memref<64x128xbf16, #tpu.memory_space<vmem>>, vector<8x128xbf16>,
      %c0_71 = arith.constant 0 : index
      %c0_72 = arith.constant 0 : index
      %241 = vector.load %arg9[%c0_71, %c0_72] : memref<64x512xf32, #tpu.memory_space<vmem>>, vector<8x512xf32>
      %242 = arith.truncf %238 : vector<8x128xf32> to vector<8x128xbf16>
      %cst_73 = arith.constant dense<0.000000e+00> : vector<8x512xf32>
      %243 = tpu.matmul %242, %13, %cst_73 {dimension_numbers = #tpu.dot_dimension_numbers<[1], [0], [0], [1], [0, 0, 1, 1], [], []>} : vector<8x128xbf16>, vector<128x512xbf16>, vector<8x512xf32> -> vector<8x512xf32>
      %244 = arith.addf %241, %243 : vector<8x512xf32>
      %245 = vector.extract_strided_slice %244 {offsets = [0, 0], sizes = [8, 128], strides = [1, 1]} : vector<8x512xf32> to vector<8x128xf32>
      %246 = arith.negf %245 : vector<8x128xf32>
      %247 = math.exp %246 : vector<8x128xf32>
      %cst_74 = arith.constant 1.000000e+00 : f32
      %248 = vector.broadcast %cst_74 : f32 to vector<8x128xf32>
      %249 = arith.addf %248, %247 : vector<8x128xf32>
      %250 = arith.divf %248, %249 : vector<8x128xf32>
      %251 = vector.extract_strided_slice %244 {offsets = [0, 128], sizes = [8, 128], strides = [1, 1]} : vector<8x512xf32> to vector<8x128xf32>
      %252 = arith.negf %251 : vector<8x128xf32>
      %253 = math.exp %252 : vector<8x128xf32>
      %cst_75 = arith.constant 1.000000e+00 : f32
      %254 = vector.broadcast %cst_75 : f32 to vector<8x128xf32>
      %255 = arith.addf %254, %253 : vector<8x128xf32>
      %256 = arith.divf %254, %255 : vector<8x128xf32>
      %257 = vector.extract_strided_slice %244 {offsets = [0, 256], sizes = [8, 128], strides = [1, 1]} : vector<8x512xf32> to vector<8x128xf32>
      %258 = math.tanh %257 : vector<8x128xf32>
      %259 = vector.extract_strided_slice %244 {offsets = [0, 384], sizes = [8, 128], strides = [1, 1]} : vector<8x512xf32> to vector<8x128xf32>
      %260 = arith.negf %259 : vector<8x128xf32>
      %261 = math.exp %260 : vector<8x128xf32>
      %cst_76 = arith.constant 1.000000e+00 : f32
      %262 = vector.broadcast %cst_76 : f32 to vector<8x128xf32>
      %263 = arith.addf %262, %261 : vector<8x128xf32>
      %264 = arith.divf %262, %263 : vector<8x128xf32>
      %265 = arith.mulf %256, %236 : vector<8x128xf32>
      %266 = arith.mulf %250, %258 : vector<8x128xf32>
      %267 = arith.addf %265, %266 : vector<8x128xf32>
      %268 = math.tanh %267 : vector<8x128xf32>
      %269 = arith.mulf %264, %268 : vector<8x128xf32>
      %270 = arith.truncf %269 : vector<8x128xf32> to vector<8x128xbf16>
      %c0_77 = arith.constant 0 : index
      %c0_78 = arith.constant 0 : index
      %271 = vector.load %arg6[%c0_77, %c0_78] : memref<64x128xbf16, #tpu.memory_space<vmem>>, vector<8x128xbf16>
      tpu.vector_store %arg6[%c0_77, %c0_78], %270 {strides = array<i32>} : memref<64x128xbf16, #tpu.memory_space<vmem>>, vector<8x128xbf16>,
      %c0_79 = arith.constant 0 : index
      %c0_80 = arith.constant 0 : index
      %c0_81 = arith.constant 0 : index
      %272 = vector.load %arg7[%c0_79, %c0_80, %c0_81] : memref<1x8x128xf32, #tpu.memory_space<vmem>>, vector<1x8x128xf32>
      %273 = vector.shape_cast %272 : vector<1x8x128xf32> to vector<8x128xf32>
      %274 = vector.shape_cast %269 : vector<8x128xf32> to vector<1x8x128xf32>
      tpu.vector_store %arg7[%c0_79, %c0_80, %c0_81], %274 {strides = array<i32>} : memref<1x8x128xf32, #tpu.memory_space<vmem>>, vector<1x8x128xf32>,
      %c0_82 = arith.constant 0 : index
      %c0_83 = arith.constant 0 : index
      %c0_84 = arith.constant 0 : index
      %275 = vector.load %arg8[%c0_82, %c0_83, %c0_84] : memref<1x8x128xf32, #tpu.memory_space<vmem>>, vector<1x8x128xf32>
      %276 = vector.shape_cast %275 : vector<1x8x128xf32> to vector<8x128xf32>
      %277 = vector.shape_cast %267 : vector<8x128xf32> to vector<1x8x128xf32>
      tpu.vector_store %arg8[%c0_82, %c0_83, %c0_84], %277 {strides = array<i32>} : memref<1x8x128xf32, #tpu.memory_space<vmem>>, vector<1x8x128xf32>,
    } else {
    }
    return
  }
  func.func @transform_0(%arg0: i32, %arg1: i32) -> (i32, i32) {
    %c1_i32 = arith.constant 1 : i32
    %0 = arith.subi %c1_i32, %arg0 : i32
    %1 = arith.muli %0, %arg1 : i32
    %c0_i32 = arith.constant 0 : i32
    %2 = arith.subi %c0_i32, %arg1 : i32
    %3 = arith.muli %arg0, %2 : i32
    %4 = arith.addi %1, %3 : i32
    %c0_i32_0 = arith.constant 0 : i32
    %c0_i32_1 = arith.constant 0 : i32
    return %4, %c0_i32_0 : i32, i32
  }
  func.func @transform_1(%arg0: i32, %arg1: i32) -> (i32, i32, i32) {
    %c0_i32 = arith.constant 0 : i32
    %c0_i32_0 = arith.constant 0 : i32
    %c0_i32_1 = arith.constant 0 : i32
    return %arg0, %c0_i32, %c0_i32_0 : i32, i32, i32
  }
  func.func @transform_2(%arg0: i32, %arg1: i32) -> (i32, i32, i32) {
    %c0_i32 = arith.constant 0 : i32
    %c0_i32_0 = arith.constant 0 : i32
    %c0_i32_1 = arith.constant 0 : i32
    return %arg0, %c0_i32, %c0_i32_0 : i32, i32, i32
  }
  func.func @transform_3(%arg0: i32, %arg1: i32) -> (i32, i32, i32) {
    %c0_i32 = arith.constant 0 : i32
    %c0_i32_0 = arith.constant 0 : i32
    %c0_i32_1 = arith.constant 0 : i32
    return %arg0, %c0_i32, %c0_i32_0 : i32, i32, i32
  }
  func.func @transform_4(%arg0: i32, %arg1: i32) -> (i32, i32) {
    %c1_i32 = arith.constant 1 : i32
    %0 = arith.subi %c1_i32, %arg0 : i32
    %1 = arith.muli %0, %arg1 : i32
    %c0_i32 = arith.constant 0 : i32
    %2 = arith.subi %c0_i32, %arg1 : i32
    %3 = arith.muli %arg0, %2 : i32
    %4 = arith.addi %1, %3 : i32
    %c0_i32_0 = arith.constant 0 : i32
    return %4, %arg0 : i32, i32
  }
  func.func @transform_5(%arg0: i32, %arg1: i32) -> (i32, i32, i32) {
    %c0_i32 = arith.constant 0 : i32
    %c0_i32_0 = arith.constant 0 : i32
    %c0_i32_1 = arith.constant 0 : i32
    return %arg0, %c0_i32, %c0_i32_0 : i32, i32, i32
  }
  func.func @transform_6(%arg0: i32, %arg1: i32) -> (i32, i32, i32) {
    %c0_i32 = arith.constant 0 : i32
    %c0_i32_0 = arith.constant 0 : i32
    %c0_i32_1 = arith.constant 0 : i32
    return %arg0, %c0_i32, %c0_i32_0 : i32, i32, i32
  }
}

</mosaic_0001>

<llo_original>
// kernel: _lstm_layer_pallas.1
$region0: #{_lstm_layer_pallas.1}
  #allocation0 [shape = 'u32[]', space=smem, size = 0x4, offset = 0x4, fixed_abs, tag = 'smem constant byte address 0x4 - core index']
  #allocation1 [shape = 'u32[72,128]{1,0:T(1,128)}', space=vmem, size = 0x9000, scoped, tag = 'internal scratch']
  #allocation2 [shape = 'f32[64,512]{1,0:T(8,128)}', space=vmem, size = 0x20000, scoped, tag = 'scratch operand']
  %s0 = inlined_call_operand.hbm [shape: bf16[64,128], index: 0, kind: input, shape index: {}]
  %s1 = inlined_call_operand.hbm [shape: bf16[2,128,512], index: 1, kind: input, shape index: {}]
  %s2 = inlined_call_operand.hbm [shape: f32[2,1,512], index: 2, kind: input, shape index: {}]
  %s3 = inlined_call_operand.hbm [shape: bf16[2,128,512], index: 3, kind: input, shape index: {}]
  %s4 = inlined_call_operand.hbm [shape: bf16[64,256], index: 4, kind: output, shape index: {0}]
  %s5 = inlined_call_operand.hbm [shape: f32[2,8,128], index: 5, kind: output, shape index: {1}]
  %s6 = inlined_call_operand.hbm [shape: f32[2,8,128], index: 6, kind: output, shape index: {2}]
  %7 = xla_tuple %s4, %s5, %s6
  %s8 = sld [smem:[#allocation0]]
  $region93: #{_lstm_layer_pallas.1} parent=0
    _
  %s10 = ssub.s32 1, %s8
  %s11 = scalar_select 0, %s10, %s8
  $region1: #{_lstm_layer_pallas.1} parent=0
    #allocation3 [shape = 'u8[32768]{0}', space=vmem, size = 0x8000, scoped, tag = 'input window, operand 0']
    #allocation4 [shape = 's32[2]{0}', space=sflag, size = 0x8, scoped, tag = 'scoped memory for _lstm_layer_pallas.1']
    #allocation5 [shape = 's32[2]{0}', space=sflag, size = 0x8, scoped, tag = 'scoped memory for _lstm_layer_pallas.1']
    #allocation6 [shape = 'u8[262144]{0}', space=vmem, size = 0x40000, scoped, tag = 'input window, operand 1']
    #allocation7 [shape = 's32[2]{0}', space=sflag, size = 0x8, scoped, tag = 'scoped memory for _lstm_layer_pallas.1']
    #allocation8 [shape = 'u8[4096]{0}', space=vmem, size = 0x1000, scoped, tag = 'input window, operand 2']
    #allocation9 [shape = 'u8[262144]{0}', space=vmem, size = 0x40000, scoped, tag = 'input window, operand 3']
    #allocation10 [shape = 's32[2]{0}', space=sflag, size = 0x8, scoped, tag = 'scoped memory for _lstm_layer_pallas.1']
    #allocation11 [shape = 'u8[32768]{0}', space=vmem, size = 0x8000, scoped, tag = 'output window, operand 0']
    #allocation12 [shape = 'u8[8192]{0}', space=vmem, size = 0x2000, scoped, tag = 'output window, operand 1']
    #allocation13 [shape = 's32[2]{0}', space=sflag, size = 0x8, scoped, tag = 'scoped memory for _lstm_layer_pallas.1']
    #allocation14 [shape = 'u8[8192]{0}', space=vmem, size = 0x2000, scoped, tag = 'output window, operand 2']
    %12 = vsyncpa [#allocation4], 0
    %s13 = scalar_lea.sflag [#allocation4], 1
    %14 = vsyncpa %s13, 0
    %15 = vsyncpa [#allocation7], 0
    %s16 = scalar_lea.sflag [#allocation7], 1
    %17 = vsyncpa %s16, 0
    %18 = vsyncpa [#allocation10], 0
    %s19 = scalar_lea.sflag [#allocation10], 1
    %20 = vsyncpa %s19, 0
    %21 = vsyncpa [#allocation5], 0
    %s22 = scalar_lea.sflag [#allocation5], 1
    %23 = vsyncpa %s22, 0
    %24 = vsyncpa [#allocation13], 0
    %s25 = scalar_lea.sflag [#allocation13], 1
    %26 = vsyncpa %s25, 0
    loop: start=0, step=1, limit=4
    $region2: #{_lstm_layer_pallas.1} parent=1 // loop_pre_header
      _
    $region3: #{_lstm_layer_pallas.1} parent=1 // loop_header
      %s28 = sphi 0, %s32
      %p29 = scmp.ge.s32.totalorder %s28, 4
      %s35 = sphi 0, %s47
      %s36 = sphi 0, %s43
      %s37 = sphi 0, %s35
      %s38 = sphi 0, %s36
      %s39 = sphi 0, %s37
      %s40 = sphi 0, %s38
      %s60 = sphi 0, %s62
      %s63 = sphi 0, %s60
      %s64 = sphi 0, %s63
      %s80 = sphi 0, %s64
      %s86 = sphi 0, %s88
      %s89 = sphi 0, %s86
      %s90 = sphi 0, %s89
      %s106 = sphi 0, %s90
      %s112 = sphi 0, %s114
      %s115 = sphi 0, %s112
      %s116 = sphi 0, %s115
      %s132 = sphi 0, %s116
      %s138 = sphi 0, %s140
      %s141 = sphi 0, %s138
      %s142 = sphi 0, %s141
      %s158 = sphi 0, %s142
      %s176 = sphi 0, %s178
      %s179 = sphi 0, %s176
      %s180 = sphi 0, %s179
      %s196 = sphi 0, %s180
      %s202 = sphi 0, %s204
      %s205 = sphi 0, %s202
      %s206 = sphi 0, %s205
      %s222 = sphi 0, %s206
      %s228 = sphi 0, %s230
      %s231 = sphi 0, %s228
      %s232 = sphi 0, %s231
      %s248 = sphi 0, %s232
    $region4: #{_lstm_layer_pallas.1} parent=1 // loop_header_branch
      %31 = sbr.rel (%p29) target = $region8
    $region5: #{_lstm_layer_pallas.1} parent=1 // loop_body
      %s33 = ssub.s32 %s28, 1
      %s34 = ssub.s32 %s28, 2
      %s41 = sadd.s32 1, %s36
      %p42 = scmp.ge.s32.totalorder %s41, 1
      %s43 = scalar_select %p42, 0, %s41
      %s44 = sadd.s32 1, %s35
      %s45 = scalar_select %p42, %s44, %s35
      %p46 = scmp.ge.s32.totalorder %s45, 2
      %s47 = scalar_select %p46, 0, %s45
      %s48 = ssub.s32 1, %s35
      %s49 = smul.u32 %s48, %s36
      %s50 = ssub.s32 0, %s36
      %s51 = smul.u32 %s35, %s50
      %s52 = sadd.s32 %s49, %s51
      %s53 = ssub.s32 1, %s47
      %s54 = smul.u32 %s53, %s43
      %s55 = ssub.s32 0, %s43
      %s56 = smul.u32 %s47, %s55
      %s57 = sadd.s32 %s54, %s56
      %s58 = ssub.s32 %s52, %s57
      %p59 = scmp.eq.s32.totalorder %s58, 0
      %s61 = sadd.s32 %s60, 1
      %s62 = scalar_select %p59, %s60, %s61
      %p65 = pneg %p59
      %p66 = scmp.eq.s32.totalorder %s28, 1
      %p67 = por %p65, %p66
      %p68 = scmp.ne.s32.totalorder %s60, %s63
      %p69 = scmp.eq.s32.totalorder %s28, 0
      %p70 = por %p68, %p69
      %p71 = scmp.ne.s32.totalorder %s60, %s63
      %p72 = scmp.eq.s32.totalorder %s33, 1
      %p73 = por %p71, %p72
      %p74 = scmp.ne.s32.totalorder %s63, %s64
      %p75 = scmp.eq.s32.totalorder %s33, 0
      %p76 = por %p74, %p75
      %p77 = scmp.ne.s32.totalorder %s63, %s64
      %p78 = scmp.eq.s32.totalorder %s34, 1
      %p79 = por %p77, %p78
      %p81 = scmp.ne.s32.totalorder %s64, %s80
      %p82 = scmp.eq.s32.totalorder %s34, 0
      %p83 = por %p81, %p82
      %s84 = ssub.s32 %s35, %s47
      %p85 = scmp.eq.s32.totalorder %s84, 0
      %s87 = sadd.s32 %s86, 1
      %s88 = scalar_select %p85, %s86, %s87
      %p91 = pneg %p85
      %p92 = scmp.eq.s32.totalorder %s28, 1
      %p93 = por %p91, %p92
      %p94 = scmp.ne.s32.totalorder %s86, %s89
      %p95 = scmp.eq.s32.totalorder %s28, 0
      %p96 = por %p94, %p95
      %p97 = scmp.ne.s32.totalorder %s86, %s89
      %p98 = scmp.eq.s32.totalorder %s33, 1
      %p99 = por %p97, %p98
      %p100 = scmp.ne.s32.totalorder %s89, %s90
      %p101 = scmp.eq.s32.totalorder %s33, 0
      %p102 = por %p100, %p101
      %p103 = scmp.ne.s32.totalorder %s89, %s90
      %p104 = scmp.eq.s32.totalorder %s34, 1
      %p105 = por %p103, %p104
      %p107 = scmp.ne.s32.totalorder %s90, %s106
      %p108 = scmp.eq.s32.totalorder %s34, 0
      %p109 = por %p107, %p108
      %s110 = ssub.s32 %s35, %s47
      %p111 = scmp.eq.s32.totalorder %s110, 0
      %s113 = sadd.s32 %s112, 1
      %s114 = scalar_select %p111, %s112, %s113
      %p117 = pneg %p111
      %p118 = scmp.eq.s32.totalorder %s28, 1
      %p119 = por %p117, %p118
      %p120 = scmp.ne.s32.totalorder %s112, %s115
      %p121 = scmp.eq.s32.totalorder %s28, 0
      %p122 = por %p120, %p121
      %p123 = scmp.ne.s32.totalorder %s112, %s115
      %p124 = scmp.eq.s32.totalorder %s33, 1
      %p125 = por %p123, %p124
      %p126 = scmp.ne.s32.totalorder %s115, %s116
      %p127 = scmp.eq.s32.totalorder %s33, 0
      %p128 = por %p126, %p127
      %p129 = scmp.ne.s32.totalorder %s115, %s116
      %p130 = scmp.eq.s32.totalorder %s34, 1
      %p131 = por %p129, %p130
      %p133 = scmp.ne.s32.totalorder %s116, %s132
      %p134 = scmp.eq.s32.totalorder %s34, 0
      %p135 = por %p133, %p134
      %s136 = ssub.s32 %s35, %s47
      %p137 = scmp.eq.s32.totalorder %s136, 0
      %s139 = sadd.s32 %s138, 1
      %s140 = scalar_select %p137, %s138, %s139
      %p143 = pneg %p137
      %p144 = scmp.eq.s32.totalorder %s28, 1
      %p145 = por %p143, %p144
      %p146 = scmp.ne.s32.totalorder %s138, %s141
      %p147 = scmp.eq.s32.totalorder %s28, 0
      %p148 = por %p146, %p147
      %p149 = scmp.ne.s32.totalorder %s138, %s141
      %p150 = scmp.eq.s32.totalorder %s33, 1
      %p151 = por %p149, %p150
      %p152 = scmp.ne.s32.totalorder %s141, %s142
      %p153 = scmp.eq.s32.totalorder %s33, 0
      %p154 = por %p152, %p153
      %p155 = scmp.ne.s32.totalorder %s141, %s142
      %p156 = scmp.eq.s32.totalorder %s34, 1
      %p157 = por %p155, %p156
      %p159 = scmp.ne.s32.totalorder %s142, %s158
      %p160 = scmp.eq.s32.totalorder %s34, 0
      %p161 = por %p159, %p160
      %s162 = ssub.s32 1, %s35
      %s163 = smul.u32 %s162, %s36
      %s164 = ssub.s32 0, %s36
      %s165 = smul.u32 %s35, %s164
      %s166 = sadd.s32 %s163, %s165
      %s167 = ssub.s32 1, %s47
      %s168 = smul.u32 %s167, %s43
      %s169 = ssub.s32 0, %s43
      %s170 = smul.u32 %s47, %s169
      %s171 = sadd.s32 %s168, %s170
      %s172 = ssub.s32 %s166, %s171
      %s173 = ssub.s32 %s35, %s47
      %s174 = sor.u32 %s172, %s173
      %p175 = scmp.eq.s32.totalorder %s174, 0
      %s177 = sadd.s32 %s176, 1
      %s178 = scalar_select %p175, %s176, %s177
      %p181 = pneg %p175
      %p182 = scmp.eq.s32.totalorder %s28, 1
      %p183 = por %p181, %p182
      %p184 = scmp.ne.s32.totalorder %s176, %s179
      %p185 = scmp.eq.s32.totalorder %s28, 0
      %p186 = por %p184, %p185
      %p187 = scmp.ne.s32.totalorder %s176, %s179
      %p188 = scmp.eq.s32.totalorder %s33, 1
      %p189 = por %p187, %p188
      %p190 = scmp.ne.s32.totalorder %s179, %s180
      %p191 = scmp.eq.s32.totalorder %s33, 0
      %p192 = por %p190, %p191
      %p193 = scmp.ne.s32.totalorder %s179, %s180
      %p194 = scmp.eq.s32.totalorder %s34, 1
      %p195 = por %p193, %p194
      %p197 = scmp.ne.s32.totalorder %s180, %s196
      %p198 = scmp.eq.s32.totalorder %s34, 0
      %p199 = por %p197, %p198
      %s200 = ssub.s32 %s35, %s47
      %p201 = scmp.eq.s32.totalorder %s200, 0
      %s203 = sadd.s32 %s202, 1
      %s204 = scalar_select %p201, %s202, %s203
      %p207 = pneg %p201
      %p208 = scmp.eq.s32.totalorder %s28, 1
      %p209 = por %p207, %p208
      %p210 = scmp.ne.s32.totalorder %s202, %s205
      %p211 = scmp.eq.s32.totalorder %s28, 0
      %p212 = por %p210, %p211
      %p213 = scmp.ne.s32.totalorder %s202, %s205
      %p214 = scmp.eq.s32.totalorder %s33, 1
      %p215 = por %p213, %p214
      %p216 = scmp.ne.s32.totalorder %s205, %s206
      %p217 = scmp.eq.s32.totalorder %s33, 0
      %p218 = por %p216, %p217
      %p219 = scmp.ne.s32.totalorder %s205, %s206
      %p220 = scmp.eq.s32.totalorder %s34, 1
      %p221 = por %p219, %p220
      %p223 = scmp.ne.s32.totalorder %s206, %s222
      %p224 = scmp.eq.s32.totalorder %s34, 0
      %p225 = por %p223, %p224
      %s226 = ssub.s32 %s35, %s47
      %p227 = scmp.eq.s32.totalorder %s226, 0
      %s229 = sadd.s32 %s228, 1
      %s230 = scalar_select %p227, %s228, %s229
      %p233 = pneg %p227
      %p234 = scmp.eq.s32.totalorder %s28, 1
      %p235 = por %p233, %p234
      %p236 = scmp.ne.s32.totalorder %s228, %s231
      %p237 = scmp.eq.s32.totalorder %s28, 0
      %p238 = por %p236, %p237
      %p239 = scmp.ne.s32.totalorder %s228, %s231
      %p240 = scmp.eq.s32.totalorder %s33, 1
      %p241 = por %p239, %p240
      %p242 = scmp.ne.s32.totalorder %s231, %s232
      %p243 = scmp.eq.s32.totalorder %s33, 0
      %p244 = por %p242, %p243
      %p245 = scmp.ne.s32.totalorder %s231, %s232
      %p246 = scmp.eq.s32.totalorder %s34, 1
      %p247 = por %p245, %p246
      %p249 = scmp.ne.s32.totalorder %s232, %s248
      %p250 = scmp.eq.s32.totalorder %s34, 0
      %p251 = por %p249, %p250
      %p252 = scmp.le.s32.totalorder 1, %s28
      %p253 = scmp.lt.s32.totalorder %s28, 3
      %p254 = pnand %p252, %p253
      %p255 = pneg %p254
      // Predicated region
      $region9: #{_lstm_layer_pallas.1} parent=5 // pred_check
        _
      $region10: #{_lstm_layer_pallas.1} parent=5 // pred_check_branch
        %257 = sbr.rel (%p254) target = $region12
      $region11: #{_lstm_layer_pallas.1} parent=5 // pred_region
        %s258 = ssub.s32 %s28, 1
      $region12: #{_lstm_layer_pallas.1} parent=5 // pred_fallthru
        _
      %p259 = scmp.lt.s32.totalorder %s28, 2
      // Predicated region
      $region13: #{_lstm_layer_pallas.1} parent=5 // pred_check
        %p260 = pneg %p259
      $region14: #{_lstm_layer_pallas.1} parent=5 // pred_check_branch
        %262 = sbr.rel (%p260) target = $region16
      $region15: #{_lstm_layer_pallas.1} parent=5 // pred_region
        // Predicated region
        $region17: #{_lstm_layer_pallas.1} parent=15 // pred_check
          %p263 = pneg %p70
        $region18: #{_lstm_layer_pallas.1} parent=15 // pred_check_branch
          %265 = sbr.rel (%p263) target = $region20
        $region19: #{_lstm_layer_pallas.1} parent=15 // pred_region
          %s266 = sand.u32 %s60, 1
          %s267 = scalar_lea.sflag [#allocation4], %s266
          %s268 = sand.u32 %s60, 1
          %s269 = smul.addr %s268, 32
          %s270 = scalar_lea.vmem [#allocation3], %s269
          %s271 = ssub.s32 1, %s35
          %s272 = smul.u32 %s271, %s36
          %s273 = ssub.s32 0, %s36
          %s274 = smul.u32 %s35, %s273
          %s275 = sadd.s32 %s272, %s274
          %s276 = smul.u32 8, %s275
          %278 = vsyncadd %s267, 0
          %s279 = smul.addr %s276, 4
          %s280 = scalar_lea.hbm %s0, %s279
          %s281 = sshll.u32 %s280, 4
          %s282 = int_to_ptr.hbm [resolvable:$true] %s281
          %s283 = sshll.u32 %s270, 4
          %s284 = int_to_ptr.vmem [resolvable:$true] %s283
          %289 = dma.hbm_to_vmem [thread:$0]  %s282, 512, %s284, %s267, 64, 64, 4
        $region20: #{_lstm_layer_pallas.1} parent=15 // pred_fallthru
          _
        // Predicated region
        $region21: #{_lstm_layer_pallas.1} parent=15 // pred_check
          %p290 = pneg %p96
        $region22: #{_lstm_layer_pallas.1} parent=15 // pred_check_branch
          %292 = sbr.rel (%p290) target = $region24
        $region23: #{_lstm_layer_pallas.1} parent=15 // pred_region
          %s293 = sand.u32 %s28, 1
          %s294 = scalar_lea.sflag [#allocation7], %s293
          %s295 = sand.u32 %s86, 1
          %s296 = smul.addr %s295, 256
          %s297 = scalar_lea.vmem [#allocation6], %s296
          %299 = vsyncadd %s294, 0
          %s300 = smul.addr %s35, 64
          %s301 = smul.addr %s300, 4
          %s302 = scalar_lea.hbm %s1, %s301
          %s303 = sshll.u32 %s302, 4
          %s304 = int_to_ptr.hbm [resolvable:$true] %s303
          %s305 = sshll.u32 %s297, 4
          %s306 = int_to_ptr.vmem [resolvable:$true] %s305
          %311 = dma.hbm_to_vmem [thread:$0]  %s304, 4096, %s306, %s294, 256, 256, 16
        $region24: #{_lstm_layer_pallas.1} parent=15 // pred_fallthru
          _
        // Predicated region
        $region25: #{_lstm_layer_pallas.1} parent=15 // pred_check
          %p312 = pneg %p122
        $region26: #{_lstm_layer_pallas.1} parent=15 // pred_check_branch
          %314 = sbr.rel (%p312) target = $region28
        $region27: #{_lstm_layer_pallas.1} parent=15 // pred_region
          %s315 = sand.u32 %s28, 1
          %s316 = scalar_lea.sflag [#allocation7], %s315
          %s317 = sand.u32 %s112, 1
          %s318 = smul.addr %s317, 4
          %s319 = scalar_lea.vmem [#allocation8], %s318
          %321 = vsyncadd %s316, 0
          %s322 = smul.addr %s35, 4
          %s323 = scalar_lea.hbm %s2, %s322
          %s325 = sshll.u32 %s323, 4
          %s326 = int_to_ptr.hbm [resolvable:$true] %s325
          %s327 = sshll.u32 %s319, 4
          %s328 = int_to_ptr.vmem [resolvable:$true] %s327
          %330 = dma.hbm_to_vmem [thread:$0]  %s326, 64, %s328, %s316
        $region28: #{_lstm_layer_pallas.1} parent=15 // pred_fallthru
          _
        // Predicated region
        $region29: #{_lstm_layer_pallas.1} parent=15 // pred_check
          %p331 = pneg %p148
        $region30: #{_lstm_layer_pallas.1} parent=15 // pred_check_branch
          %333 = sbr.rel (%p331) target = $region32
        $region31: #{_lstm_layer_pallas.1} parent=15 // pred_region
          %s334 = sand.u32 %s138, 1
          %s335 = scalar_lea.sflag [#allocation10], %s334
          %s336 = sand.u32 %s138, 1
          %s337 = smul.addr %s336, 256
          %s338 = scalar_lea.vmem [#allocation9], %s337
          %340 = vsyncadd %s335, 0
          %s341 = smul.addr %s35, 64
          %s342 = smul.addr %s341, 4
          %s343 = scalar_lea.hbm %s3, %s342
          %s344 = sshll.u32 %s343, 4
          %s345 = int_to_ptr.hbm [resolvable:$true] %s344
          %s346 = sshll.u32 %s338, 4
          %s347 = int_to_ptr.vmem [resolvable:$true] %s346
          %352 = dma.hbm_to_vmem [thread:$0]  %s345, 4096, %s347, %s335, 256, 256, 16
        $region32: #{_lstm_layer_pallas.1} parent=15 // pred_fallthru
          _
      $region16: #{_lstm_layer_pallas.1} parent=5 // pred_fallthru
        _
      %p353 = scmp.le.s32.totalorder 1, %s28
      %p354 = scmp.lt.s32.totalorder %s28, 3
      %p355 = pnand %p353, %p354
      %p356 = pneg %p355
      // Predicated region
      $region33: #{_lstm_layer_pallas.1} parent=5 // pred_check
        _
      $region34: #{_lstm_layer_pallas.1} parent=5 // pred_check_branch
        %358 = sbr.rel (%p355) target = $region36
      $region35: #{_lstm_layer_pallas.1} parent=5 // pred_region
        %s359 = ssub.s32 %s28, 1
        %s360 = sand.u32 %s63, 1
        %s361 = scalar_lea.sflag [#allocation4], %s360
        %s362 = sand.u32 %s63, 1
        %s363 = smul.addr %s362, 32
        %s364 = scalar_lea.vmem [#allocation3], %s363
        // Predicated region
        $region37: #{_lstm_layer_pallas.1} parent=35 // pred_check
          %p365 = pneg %p76
        $region38: #{_lstm_layer_pallas.1} parent=35 // pred_check_branch
          %367 = sbr.rel (%p365) target = $region40
        $region39: #{_lstm_layer_pallas.1} parent=35 // pred_region
          %369 = dma.done %s361, 512
        $region40: #{_lstm_layer_pallas.1} parent=35 // pred_fallthru
          _
        %s370 = sand.u32 %s33, 1
        %s371 = scalar_lea.sflag [#allocation7], %s370
        %s372 = sand.u32 %s89, 1
        %s373 = smul.addr %s372, 256
        %s374 = scalar_lea.vmem [#allocation6], %s373
        // Predicated region
        $region41: #{_lstm_layer_pallas.1} parent=35 // pred_check
          %p375 = pneg %p102
        $region42: #{_lstm_layer_pallas.1} parent=35 // pred_check_branch
          %377 = sbr.rel (%p375) target = $region44
        $region43: #{_lstm_layer_pallas.1} parent=35 // pred_region
          %379 = dma.done %s371, 4096
        $region44: #{_lstm_layer_pallas.1} parent=35 // pred_fallthru
          _
        %s380 = sand.u32 %s33, 1
        %s381 = scalar_lea.sflag [#allocation7], %s380
        %s382 = sand.u32 %s115, 1
        %s383 = smul.addr %s382, 4
        %s384 = scalar_lea.vmem [#allocation8], %s383
        // Predicated region
        $region45: #{_lstm_layer_pallas.1} parent=35 // pred_check
          %p385 = pneg %p128
        $region46: #{_lstm_layer_pallas.1} parent=35 // pred_check_branch
          %387 = sbr.rel (%p385) target = $region48
        $region47: #{_lstm_layer_pallas.1} parent=35 // pred_region
          %389 = dma.done %s381, 64
        $region48: #{_lstm_layer_pallas.1} parent=35 // pred_fallthru
          _
        %s390 = sand.u32 %s141, 1
        %s391 = scalar_lea.sflag [#allocation10], %s390
        %s392 = sand.u32 %s141, 1
        %s393 = smul.addr %s392, 256
        %s394 = scalar_lea.vmem [#allocation9], %s393
        // Predicated region
        $region49: #{_lstm_layer_pallas.1} parent=35 // pred_check
          %p395 = pneg %p154
        $region50: #{_lstm_layer_pallas.1} parent=35 // pred_check_branch
          %397 = sbr.rel (%p395) target = $region52
        $region51: #{_lstm_layer_pallas.1} parent=35 // pred_region
          %399 = dma.done %s391, 4096
        $region52: #{_lstm_layer_pallas.1} parent=35 // pred_fallthru
          _
        %s400 = sand.u32 %s63, 1
        %s401 = scalar_lea.sflag [#allocation4], %s400
        %s402 = sand.u32 %s63, 1
        %s403 = smul.addr %s402, 32
        %s404 = scalar_lea.vmem [#allocation3], %s403
        %p405 = pneg %p76
        %p406 = pneg %p73
        %s407 = sand.u32 %s33, 1
        %s408 = scalar_lea.sflag [#allocation7], %s407
        %s409 = sand.u32 %s89, 1
        %s410 = smul.addr %s409, 256
        %s411 = scalar_lea.vmem [#allocation6], %s410
        %p412 = pneg %p102
        %p413 = pneg %p99
        %s414 = sand.u32 %s33, 1
        %s415 = scalar_lea.sflag [#allocation7], %s414
        %s416 = sand.u32 %s115, 1
        %s417 = smul.addr %s416, 4
        %s418 = scalar_lea.vmem [#allocation8], %s417
        %p419 = pneg %p128
        %p420 = pneg %p125
        %s421 = sand.u32 %s141, 1
        %s422 = scalar_lea.sflag [#allocation10], %s421
        %s423 = sand.u32 %s141, 1
        %s424 = smul.addr %s423, 256
        %s425 = scalar_lea.vmem [#allocation9], %s424
        %p426 = pneg %p154
        %p427 = pneg %p151
        %p428 = pneg %p192
        %p429 = pneg %p189
        %s430 = sand.u32 %s179, 1
        %s431 = scalar_lea.sflag [#allocation5], %s430
        %s432 = sand.u32 %s179, 1
        %s433 = smul.addr %s432, 32
        %s434 = scalar_lea.vmem [#allocation11], %s433
        %p435 = pneg %p218
        %p436 = pneg %p215
        %s437 = sand.u32 %s33, 1
        %s438 = scalar_lea.sflag [#allocation13], %s437
        %s439 = sand.u32 %s205, 1
        %s440 = smul.addr %s439, 8
        %s441 = scalar_lea.vmem [#allocation12], %s440
        %p442 = pneg %p244
        %p443 = pneg %p241
        %s444 = sand.u32 %s33, 1
        %s445 = scalar_lea.sflag [#allocation13], %s444
        %s446 = sand.u32 %s231, 1
        %s447 = smul.addr %s446, 8
        %s448 = scalar_lea.vmem [#allocation14], %s447
        %s449 = ssub.s32 1, %s37
        %s450 = smul.u32 %s449, %s38
        %s451 = ssub.s32 0, %s38
        %s452 = smul.u32 %s37, %s451
        %s453 = sadd.s32 %s450, %s452
        %s454 = smul.u32 8, %s453
        %s455 = ssub.s32 1, %s37
        %s456 = smul.u32 %s455, %s38
        %s457 = ssub.s32 0, %s38
        %s458 = smul.u32 %s37, %s457
        %s459 = sadd.s32 %s456, %s458
        %s460 = smul.u32 8, %s459
        %p461 = scmp.eq.s32.totalorder %s38, 0
        // Predicated region
        $region53: #{_lstm_layer_pallas.1} parent=35 // pred_check
          %p462 = pneg %p461
        $region54: #{_lstm_layer_pallas.1} parent=35 // pred_check_branch
          %464 = sbr.rel (%p462) target = $region56
        $region55: #{_lstm_layer_pallas.1} parent=35 // pred_region
          %465 = vst [vmem:[%s441] sm:$0xff] 0.0
          %466 = vst [vmem:[%s448] sm:$0xff] 0.0
        $region56: #{_lstm_layer_pallas.1} parent=35 // pred_fallthru
          _
        %v467 = vld [vmem:[%s364] sm:$0xf]
        %v468 = vld [vmem:[%s364 + $0x4] sm:$0xf]
        %v469 = vld [vmem:[%s364 + $0x8] sm:$0xf]
        %v470 = vld [vmem:[%s364 + $0xc] sm:$0xf]
        %v471 = vld [vmem:[%s364 + $0x10] sm:$0xf]
        %v472 = vld [vmem:[%s364 + $0x14] sm:$0xf]
        %v473 = vld [vmem:[%s364 + $0x18] sm:$0xf]
        %v474 = vld [vmem:[%s364 + $0x1c] sm:$0xf]
        %v475 = vld [vmem:[%s374] sm:$0xff]
        %v476 = vld [vmem:[%s374 + $0x8] sm:$0xff]
        %v477 = vld [vmem:[%s374 + $0x10] sm:$0xff]
        %v478 = vld [vmem:[%s374 + $0x18] sm:$0xff]
        %v479 = vld [vmem:[%s374 + $0x20] sm:$0xff]
        %v480 = vld [vmem:[%s374 + $0x28] sm:$0xff]
        %v481 = vld [vmem:[%s374 + $0x30] sm:$0xff]
        %v482 = vld [vmem:[%s374 + $0x38] sm:$0xff]
        %v483 = vld [vmem:[%s374 + $0x40] sm:$0xff]
        %v484 = vld [vmem:[%s374 + $0x48] sm:$0xff]
        %v485 = vld [vmem:[%s374 + $0x50] sm:$0xff]
        %v486 = vld [vmem:[%s374 + $0x58] sm:$0xff]
        %v487 = vld [vmem:[%s374 + $0x60] sm:$0xff]
        %v488 = vld [vmem:[%s374 + $0x68] sm:$0xff]
        %v489 = vld [vmem:[%s374 + $0x70] sm:$0xff]
        %v490 = vld [vmem:[%s374 + $0x78] sm:$0xff]
        %v491 = vld [vmem:[%s374 + $0x80] sm:$0xff]
        %v492 = vld [vmem:[%s374 + $0x88] sm:$0xff]
        %v493 = vld [vmem:[%s374 + $0x90] sm:$0xff]
        %v494 = vld [vmem:[%s374 + $0x98] sm:$0xff]
        %v495 = vld [vmem:[%s374 + $0xa0] sm:$0xff]
        %v496 = vld [vmem:[%s374 + $0xa8] sm:$0xff]
        %v497 = vld [vmem:[%s374 + $0xb0] sm:$0xff]
        %v498 = vld [vmem:[%s374 + $0xb8] sm:$0xff]
        %v499 = vld [vmem:[%s374 + $0xc0] sm:$0xff]
        %v500 = vld [vmem:[%s374 + $0xc8] sm:$0xff]
        %v501 = vld [vmem:[%s374 + $0xd0] sm:$0xff]
        %v502 = vld [vmem:[%s374 + $0xd8] sm:$0xff]
        %v503 = vld [vmem:[%s374 + $0xe0] sm:$0xff]
        %v504 = vld [vmem:[%s374 + $0xe8] sm:$0xff]
        %v505 = vld [vmem:[%s374 + $0xf0] sm:$0xff]
        %v506 = vld [vmem:[%s374 + $0xf8] sm:$0xff]
        %v507 = vld [vmem:[%s384] sm:$0xf]
        %v509 = vperm.slane %v507, 0
        %v510 = vperm.slane %v507, 1
        %v511 = vperm.slane %v507, 2
        %v512 = vperm.slane %v507, 3
        %v525 = vunpack.c.l.b16 %v467
        %v526 = vunpack.c.l.b16 %v468
        %v527 = vunpack.c.l.b16 %v469
        %v528 = vunpack.c.l.b16 %v470
        %v529 = vunpack.c.l.b16 %v471
        %v530 = vunpack.c.l.b16 %v472
        %v531 = vunpack.c.l.b16 %v473
        %v532 = vunpack.c.l.b16 %v474
        %v533 = vpack.c.b16 %v526, %v525
        %v534 = vpack.c.b16 %v528, %v527
        %v535 = vpack.c.b16 %v530, %v529
        %v536 = vpack.c.b16 %v532, %v531
        %v573 = vunpack.c.l.b16 %v475
        %v574 = vunpack.c.h.b16 %v475
        %v575 = vunpack.c.l.b16 %v476
        %v576 = vunpack.c.h.b16 %v476
        %v577 = vunpack.c.l.b16 %v477
        %v578 = vunpack.c.h.b16 %v477
        %v579 = vunpack.c.l.b16 %v478
        %v580 = vunpack.c.h.b16 %v478
        %v581 = vunpack.c.l.b16 %v479
        %v582 = vunpack.c.h.b16 %v479
        %v583 = vunpack.c.l.b16 %v480
        %v584 = vunpack.c.h.b16 %v480
        %v585 = vunpack.c.l.b16 %v481
        %v586 = vunpack.c.h.b16 %v481
        %v587 = vunpack.c.l.b16 %v482
        %v588 = vunpack.c.h.b16 %v482
        %v589 = vunpack.c.l.b16 %v483
        %v590 = vunpack.c.h.b16 %v483
        %v591 = vunpack.c.l.b16 %v484
        %v592 = vunpack.c.h.b16 %v484
        %v593 = vunpack.c.l.b16 %v485
        %v594 = vunpack.c.h.b16 %v485
        %v595 = vunpack.c.l.b16 %v486
        %v596 = vunpack.c.h.b16 %v486
        %v597 = vunpack.c.l.b16 %v487
        %v598 = vunpack.c.h.b16 %v487
        %v599 = vunpack.c.l.b16 %v488
        %v600 = vunpack.c.h.b16 %v488
        %v601 = vunpack.c.l.b16 %v489
        %v602 = vunpack.c.h.b16 %v489
        %v603 = vunpack.c.l.b16 %v490
        %v604 = vunpack.c.h.b16 %v490
        %v605 = vunpack.c.l.b16 %v491
        %v606 = vunpack.c.h.b16 %v491
        %v607 = vunpack.c.l.b16 %v492
        %v608 = vunpack.c.h.b16 %v492
        %v609 = vunpack.c.l.b16 %v493
        %v610 = vunpack.c.h.b16 %v493
        %v611 = vunpack.c.l.b16 %v494
        %v612 = vunpack.c.h.b16 %v494
        %v613 = vunpack.c.l.b16 %v495
        %v614 = vunpack.c.h.b16 %v495
        %v615 = vunpack.c.l.b16 %v496
        %v616 = vunpack.c.h.b16 %v496
        %v617 = vunpack.c.l.b16 %v497
        %v618 = vunpack.c.h.b16 %v497
        %v619 = vunpack.c.l.b16 %v498
        %v620 = vunpack.c.h.b16 %v498
        %v621 = vunpack.c.l.b16 %v499
        %v622 = vunpack.c.h.b16 %v499
        %v623 = vunpack.c.l.b16 %v500
        %v624 = vunpack.c.h.b16 %v500
        %v625 = vunpack.c.l.b16 %v501
        %v626 = vunpack.c.h.b16 %v501
        %v627 = vunpack.c.l.b16 %v502
        %v628 = vunpack.c.h.b16 %v502
        %v629 = vunpack.c.l.b16 %v503
        %v630 = vunpack.c.h.b16 %v503
        %v631 = vunpack.c.l.b16 %v504
        %v632 = vunpack.c.h.b16 %v504
        %v633 = vunpack.c.l.b16 %v505
        %v634 = vunpack.c.h.b16 %v505
        %v635 = vunpack.c.l.b16 %v506
        %v636 = vunpack.c.h.b16 %v506
        %v637 = vpack.c.b16 %v577, %v573
        %v638 = vpack.c.b16 %v578, %v574
        %v639 = vpack.c.b16 %v579, %v575
        %v640 = vpack.c.b16 %v580, %v576
        %v641 = vpack.c.b16 %v585, %v581
        %v642 = vpack.c.b16 %v586, %v582
        %v643 = vpack.c.b16 %v587, %v583
        %v644 = vpack.c.b16 %v588, %v584
        %v645 = vpack.c.b16 %v593, %v589
        %v646 = vpack.c.b16 %v594, %v590
        %v647 = vpack.c.b16 %v595, %v591
        %v648 = vpack.c.b16 %v596, %v592
        %v649 = vpack.c.b16 %v601, %v597
        %v650 = vpack.c.b16 %v602, %v598
        %v651 = vpack.c.b16 %v603, %v599
        %v652 = vpack.c.b16 %v604, %v600
        %v653 = vpack.c.b16 %v609, %v605
        %v654 = vpack.c.b16 %v610, %v606
        %v655 = vpack.c.b16 %v611, %v607
        %v656 = vpack.c.b16 %v612, %v608
        %v657 = vpack.c.b16 %v617, %v613
        %v658 = vpack.c.b16 %v618, %v614
        %v659 = vpack.c.b16 %v619, %v615
        %v660 = vpack.c.b16 %v620, %v616
        %v661 = vpack.c.b16 %v625, %v621
        %v662 = vpack.c.b16 %v626, %v622
        %v663 = vpack.c.b16 %v627, %v623
        %v664 = vpack.c.b16 %v628, %v624
        %v665 = vpack.c.b16 %v633, %v629
        %v666 = vpack.c.b16 %v634, %v630
        %v667 = vpack.c.b16 %v635, %v631
        %v668 = vpack.c.b16 %v636, %v632
        %701 = vmatpush.bf16.msra.mxu0 %v665
        %702 = vmatpush.bf16.msra.mxu0 %v661
        %703 = vmatpush.bf16.msra.mxu0 %v657
        %704 = vmatpush.bf16.msra.mxu0 %v653
        %705 = vmatpush.bf16.msra.mxu0 %v649
        %706 = vmatpush.bf16.msra.mxu0 %v645
        %707 = vmatpush.bf16.msra.mxu0 %v641
        %708 = vmatpush.bf16.msra.mxu0 %v637
        %709 = vmatmul.bf16.gmra.mxu0 %v533
        %v710 = vpop.f32.mrf.mxu0
        %v711 = vadd.f32 %v509, %v710
        %v712 = vpop.f32.mrf.mxu0
        %v713 = vadd.f32 %v509, %v712
        %714 = vmatmul.bf16.gmra.mxu0 %v534
        %v715 = vpop.f32.mrf.mxu0
        %v716 = vadd.f32 %v509, %v715
        %v717 = vpop.f32.mrf.mxu0
        %v718 = vadd.f32 %v509, %v717
        %719 = vmatmul.bf16.gmra.mxu0 %v535
        %v720 = vpop.f32.mrf.mxu0
        %v721 = vadd.f32 %v509, %v720
        %v722 = vpop.f32.mrf.mxu0
        %v723 = vadd.f32 %v509, %v722
        %724 = vmatmul.bf16.gmra.mxu0 %v536
        %v725 = vpop.f32.mrf.mxu0
        %v726 = vadd.f32 %v509, %v725
        %v727 = vpop.f32.mrf.mxu0
        %v728 = vadd.f32 %v509, %v727
        %729 = vdwg.mxu0
        %730 = vmatpush.bf16.msra.mxu0 %v666
        %731 = vmatpush.bf16.msra.mxu0 %v662
        %732 = vmatpush.bf16.msra.mxu0 %v658
        %733 = vmatpush.bf16.msra.mxu0 %v654
        %734 = vmatpush.bf16.msra.mxu0 %v650
        %735 = vmatpush.bf16.msra.mxu0 %v646
        %736 = vmatpush.bf16.msra.mxu0 %v642
        %737 = vmatpush.bf16.msra.mxu0 %v638
        %738 = vmatmul.bf16.gmra.mxu0 %v533
        %v739 = vpop.f32.mrf.mxu0
        %v740 = vadd.f32 %v510, %v739
        %v741 = vpop.f32.mrf.mxu0
        %v742 = vadd.f32 %v510, %v741
        %743 = vmatmul.bf16.gmra.mxu0 %v534
        %v744 = vpop.f32.mrf.mxu0
        %v745 = vadd.f32 %v510, %v744
        %v746 = vpop.f32.mrf.mxu0
        %v747 = vadd.f32 %v510, %v746
        %748 = vmatmul.bf16.gmra.mxu0 %v535
        %v749 = vpop.f32.mrf.mxu0
        %v750 = vadd.f32 %v510, %v749
        %v751 = vpop.f32.mrf.mxu0
        %v752 = vadd.f32 %v510, %v751
        %753 = vmatmul.bf16.gmra.mxu0 %v536
        %v754 = vpop.f32.mrf.mxu0
        %v755 = vadd.f32 %v510, %v754
        %v756 = vpop.f32.mrf.mxu0
        %v757 = vadd.f32 %v510, %v756
        %758 = vdwg.mxu0
        %759 = vmatpush.bf16.msra.mxu0 %v667
        %760 = vmatpush.bf16.msra.mxu0 %v663
        %761 = vmatpush.bf16.msra.mxu0 %v659
        %762 = vmatpush.bf16.msra.mxu0 %v655
        %763 = vmatpush.bf16.msra.mxu0 %v651
        %764 = vmatpush.bf16.msra.mxu0 %v647
        %765 = vmatpush.bf16.msra.mxu0 %v643
        %766 = vmatpush.bf16.msra.mxu0 %v639
        %767 = vmatmul.bf16.gmra.mxu0 %v533
        %v768 = vpop.f32.mrf.mxu0
        %v769 = vadd.f32 %v511, %v768
        %v770 = vpop.f32.mrf.mxu0
        %v771 = vadd.f32 %v511, %v770
        %772 = vmatmul.bf16.gmra.mxu0 %v534
        %v773 = vpop.f32.mrf.mxu0
        %v774 = vadd.f32 %v511, %v773
        %v775 = vpop.f32.mrf.mxu0
        %v776 = vadd.f32 %v511, %v775
        %777 = vmatmul.bf16.gmra.mxu0 %v535
        %v778 = vpop.f32.mrf.mxu0
        %v779 = vadd.f32 %v511, %v778
        %v780 = vpop.f32.mrf.mxu0
        %v781 = vadd.f32 %v511, %v780
        %782 = vmatmul.bf16.gmra.mxu0 %v536
        %v783 = vpop.f32.mrf.mxu0
        %v784 = vadd.f32 %v511, %v783
        %v785 = vpop.f32.mrf.mxu0
        %v786 = vadd.f32 %v511, %v785
        %787 = vdwg.mxu0
        %788 = vmatpush.bf16.msra.mxu0 %v668
        %789 = vmatpush.bf16.msra.mxu0 %v664
        %790 = vmatpush.bf16.msra.mxu0 %v660
        %791 = vmatpush.bf16.msra.mxu0 %v656
        %792 = vmatpush.bf16.msra.mxu0 %v652
        %793 = vmatpush.bf16.msra.mxu0 %v648
        %794 = vmatpush.bf16.msra.mxu0 %v644
        %795 = vmatpush.bf16.msra.mxu0 %v640
        %796 = vmatmul.bf16.gmra.mxu0 %v533
        %v797 = vpop.f32.mrf.mxu0
        %v798 = vadd.f32 %v512, %v797
        %v799 = vpop.f32.mrf.mxu0
        %v800 = vadd.f32 %v512, %v799
        %801 = vmatmul.bf16.gmra.mxu0 %v534
        %v802 = vpop.f32.mrf.mxu0
        %v803 = vadd.f32 %v512, %v802
        %v804 = vpop.f32.mrf.mxu0
        %v805 = vadd.f32 %v512, %v804
        %806 = vmatmul.bf16.gmra.mxu0 %v535
        %v807 = vpop.f32.mrf.mxu0
        %v808 = vadd.f32 %v512, %v807
        %v809 = vpop.f32.mrf.mxu0
        %v810 = vadd.f32 %v512, %v809
        %811 = vmatmul.bf16.gmra.mxu0 %v536
        %v812 = vpop.f32.mrf.mxu0
        %v813 = vadd.f32 %v512, %v812
        %v814 = vpop.f32.mrf.mxu0
        %v815 = vadd.f32 %v512, %v814
        %816 = vdwg.mxu0
        %817 = vst [vmem:[#allocation2] sm:$0xff] %v711
        %818 = vst [vmem:[#allocation2 + $0x8] sm:$0xff] %v740
        %819 = vst [vmem:[#allocation2 + $0x10] sm:$0xff] %v769
        %820 = vst [vmem:[#allocation2 + $0x18] sm:$0xff] %v798
        %821 = vst [vmem:[#allocation2 + $0x20] sm:$0xff] %v713
        %822 = vst [vmem:[#allocation2 + $0x28] sm:$0xff] %v742
        %823 = vst [vmem:[#allocation2 + $0x30] sm:$0xff] %v771
        %824 = vst [vmem:[#allocation2 + $0x38] sm:$0xff] %v800
        %825 = vst [vmem:[#allocation2 + $0x40] sm:$0xff] %v716
        %826 = vst [vmem:[#allocation2 + $0x48] sm:$0xff] %v745
        %827 = vst [vmem:[#allocation2 + $0x50] sm:$0xff] %v774
        %828 = vst [vmem:[#allocation2 + $0x58] sm:$0xff] %v803
        %829 = vst [vmem:[#allocation2 + $0x60] sm:$0xff] %v718
        %830 = vst [vmem:[#allocation2 + $0x68] sm:$0xff] %v747
        %831 = vst [vmem:[#allocation2 + $0x70] sm:$0xff] %v776
        %832 = vst [vmem:[#allocation2 + $0x78] sm:$0xff] %v805
        %833 = vst [vmem:[#allocation2 + $0x80] sm:$0xff] %v721
        %834 = vst [vmem:[#allocation2 + $0x88] sm:$0xff] %v750
        %835 = vst [vmem:[#allocation2 + $0x90] sm:$0xff] %v779
        %836 = vst [vmem:[#allocation2 + $0x98] sm:$0xff] %v808
        %837 = vst [vmem:[#allocation2 + $0xa0] sm:$0xff] %v723
        %838 = vst [vmem:[#allocation2 + $0xa8] sm:$0xff] %v752
        %839 = vst [vmem:[#allocation2 + $0xb0] sm:$0xff] %v781
        %840 = vst [vmem:[#allocation2 + $0xb8] sm:$0xff] %v810
        %841 = vst [vmem:[#allocation2 + $0xc0] sm:$0xff] %v726
        %842 = vst [vmem:[#allocation2 + $0xc8] sm:$0xff] %v755
        %843 = vst [vmem:[#allocation2 + $0xd0] sm:$0xff] %v784
        %844 = vst [vmem:[#allocation2 + $0xd8] sm:$0xff] %v813
        %845 = vst [vmem:[#allocation2 + $0xe0] sm:$0xff] %v728
        %846 = vst [vmem:[#allocation2 + $0xe8] sm:$0xff] %v757
        %847 = vst [vmem:[#allocation2 + $0xf0] sm:$0xff] %v786
        %848 = vst [vmem:[#allocation2 + $0xf8] sm:$0xff] %v815
        %v849 = vld [vmem:[%s394] sm:$0xff]
        %v850 = vld [vmem:[%s394 + $0x8] sm:$0xff]
        %v851 = vld [vmem:[%s394 + $0x10] sm:$0xff]
        %v852 = vld [vmem:[%s394 + $0x18] sm:$0xff]
        %v853 = vld [vmem:[%s394 + $0x20] sm:$0xff]
        %v854 = vld [vmem:[%s394 + $0x28] sm:$0xff]
        %v855 = vld [vmem:[%s394 + $0x30] sm:$0xff]
        %v856 = vld [vmem:[%s394 + $0x38] sm:$0xff]
        %v857 = vld [vmem:[%s394 + $0x40] sm:$0xff]
        %v858 = vld [vmem:[%s394 + $0x48] sm:$0xff]
        %v859 = vld [vmem:[%s394 + $0x50] sm:$0xff]
        %v860 = vld [vmem:[%s394 + $0x58] sm:$0xff]
        %v861 = vld [vmem:[%s394 + $0x60] sm:$0xff]
        %v862 = vld [vmem:[%s394 + $0x68] sm:$0xff]
        %v863 = vld [vmem:[%s394 + $0x70] sm:$0xff]
        %v864 = vld [vmem:[%s394 + $0x78] sm:$0xff]
        %v865 = vld [vmem:[%s394 + $0x80] sm:$0xff]
        %v866 = vld [vmem:[%s394 + $0x88] sm:$0xff]
        %v867 = vld [vmem:[%s394 + $0x90] sm:$0xff]
        %v868 = vld [vmem:[%s394 + $0x98] sm:$0xff]
        %v869 = vld [vmem:[%s394 + $0xa0] sm:$0xff]
        %v870 = vld [vmem:[%s394 + $0xa8] sm:$0xff]
        %v871 = vld [vmem:[%s394 + $0xb0] sm:$0xff]
        %v872 = vld [vmem:[%s394 + $0xb8] sm:$0xff]
        %v873 = vld [vmem:[%s394 + $0xc0] sm:$0xff]
        %v874 = vld [vmem:[%s394 + $0xc8] sm:$0xff]
        %v875 = vld [vmem:[%s394 + $0xd0] sm:$0xff]
        %v876 = vld [vmem:[%s394 + $0xd8] sm:$0xff]
        %v877 = vld [vmem:[%s394 + $0xe0] sm:$0xff]
        %v878 = vld [vmem:[%s394 + $0xe8] sm:$0xff]
        %v879 = vld [vmem:[%s394 + $0xf0] sm:$0xff]
        %v880 = vld [vmem:[%s394 + $0xf8] sm:$0xff]
        %p881 = scmp.eq.s32.totalorder %s37, 0
        // Predicated region
        $region57: #{_lstm_layer_pallas.1} parent=35 // pred_check
          %p882 = pneg %p881
        $region58: #{_lstm_layer_pallas.1} parent=35 // pred_check_branch
          %884 = sbr.rel (%p882) target = $region60
        $region59: #{_lstm_layer_pallas.1} parent=35 // pred_region
          %v885 = vld [vmem:[%s441] sm:$0xff]
          %v886 = vld [vmem:[%s448] sm:$0xff]
          %v887 = vld [vmem:[#allocation2] sm:$0xff]
          %v888 = vld [vmem:[#allocation2 + $0x8] sm:$0xff]
          %v889 = vld [vmem:[#allocation2 + $0x10] sm:$0xff]
          %v890 = vld [vmem:[#allocation2 + $0x18] sm:$0xff]
          %v891 = vpack.c.bf16 %v885, %v885
          %v924 = vunpack.c.l.b16 %v849
          %v925 = vunpack.c.h.b16 %v849
          %v926 = vunpack.c.l.b16 %v850
          %v927 = vunpack.c.h.b16 %v850
          %v928 = vunpack.c.l.b16 %v851
          %v929 = vunpack.c.h.b16 %v851
          %v930 = vunpack.c.l.b16 %v852
          %v931 = vunpack.c.h.b16 %v852
          %v932 = vunpack.c.l.b16 %v853
          %v933 = vunpack.c.h.b16 %v853
          %v934 = vunpack.c.l.b16 %v854
          %v935 = vunpack.c.h.b16 %v854
          %v936 = vunpack.c.l.b16 %v855
          %v937 = vunpack.c.h.b16 %v855
          %v938 = vunpack.c.l.b16 %v856
          %v939 = vunpack.c.h.b16 %v856
          %v940 = vunpack.c.l.b16 %v857
          %v941 = vunpack.c.h.b16 %v857
          %v942 = vunpack.c.l.b16 %v858
          %v943 = vunpack.c.h.b16 %v858
          %v944 = vunpack.c.l.b16 %v859
          %v945 = vunpack.c.h.b16 %v859
          %v946 = vunpack.c.l.b16 %v860
          %v947 = vunpack.c.h.b16 %v860
          %v948 = vunpack.c.l.b16 %v861
          %v949 = vunpack.c.h.b16 %v861
          %v950 = vunpack.c.l.b16 %v862
          %v951 = vunpack.c.h.b16 %v862
          %v952 = vunpack.c.l.b16 %v863
          %v953 = vunpack.c.h.b16 %v863
          %v954 = vunpack.c.l.b16 %v864
          %v955 = vunpack.c.h.b16 %v864
          %v956 = vunpack.c.l.b16 %v865
          %v957 = vunpack.c.h.b16 %v865
          %v958 = vunpack.c.l.b16 %v866
          %v959 = vunpack.c.h.b16 %v866
          %v960 = vunpack.c.l.b16 %v867
          %v961 = vunpack.c.h.b16 %v867
          %v962 = vunpack.c.l.b16 %v868
          %v963 = vunpack.c.h.b16 %v868
          %v964 = vunpack.c.l.b16 %v869
          %v965 = vunpack.c.h.b16 %v869
          %v966 = vunpack.c.l.b16 %v870
          %v967 = vunpack.c.h.b16 %v870
          %v968 = vunpack.c.l.b16 %v871
          %v969 = vunpack.c.h.b16 %v871
          %v970 = vunpack.c.l.b16 %v872
          %v971 = vunpack.c.h.b16 %v872
          %v972 = vunpack.c.l.b16 %v873
          %v973 = vunpack.c.h.b16 %v873
          %v974 = vunpack.c.l.b16 %v874
          %v975 = vunpack.c.h.b16 %v874
          %v976 = vunpack.c.l.b16 %v875
          %v977 = vunpack.c.h.b16 %v875
          %v978 = vunpack.c.l.b16 %v876
          %v979 = vunpack.c.h.b16 %v876
          %v980 = vunpack.c.l.b16 %v877
          %v981 = vunpack.c.h.b16 %v877
          %v982 = vunpack.c.l.b16 %v878
          %v983 = vunpack.c.h.b16 %v878
          %v984 = vunpack.c.l.b16 %v879
          %v985 = vunpack.c.h.b16 %v879
          %v986 = vunpack.c.l.b16 %v880
          %v987 = vunpack.c.h.b16 %v880
          %v988 = vpack.c.b16 %v928, %v924
          %v989 = vpack.c.b16 %v929, %v925
          %v990 = vpack.c.b16 %v930, %v926
          %v991 = vpack.c.b16 %v931, %v927
          %v992 = vpack.c.b16 %v936, %v932
          %v993 = vpack.c.b16 %v937, %v933
          %v994 = vpack.c.b16 %v938, %v934
          %v995 = vpack.c.b16 %v939, %v935
          %v996 = vpack.c.b16 %v944, %v940
          %v997 = vpack.c.b16 %v945, %v941
          %v998 = vpack.c.b16 %v946, %v942
          %v999 = vpack.c.b16 %v947, %v943
          %v1000 = vpack.c.b16 %v952, %v948
          %v1001 = vpack.c.b16 %v953, %v949
          %v1002 = vpack.c.b16 %v954, %v950
          %v1003 = vpack.c.b16 %v955, %v951
          %v1004 = vpack.c.b16 %v960, %v956
          %v1005 = vpack.c.b16 %v961, %v957
          %v1006 = vpack.c.b16 %v962, %v958
          %v1007 = vpack.c.b16 %v963, %v959
          %v1008 = vpack.c.b16 %v968, %v964
          %v1009 = vpack.c.b16 %v969, %v965
          %v1010 = vpack.c.b16 %v970, %v966
          %v1011 = vpack.c.b16 %v971, %v967
          %v1012 = vpack.c.b16 %v976, %v972
          %v1013 = vpack.c.b16 %v977, %v973
          %v1014 = vpack.c.b16 %v978, %v974
          %v1015 = vpack.c.b16 %v979, %v975
          %v1016 = vpack.c.b16 %v984, %v980
          %v1017 = vpack.c.b16 %v985, %v981
          %v1018 = vpack.c.b16 %v986, %v982
          %v1019 = vpack.c.b16 %v987, %v983
          %1052 = vmatpush.bf16.msra.mxu0 %v1016
          %1053 = vmatpush.bf16.msra.mxu0 %v1012
          %1054 = vmatpush.bf16.msra.mxu0 %v1008
          %1055 = vmatpush.bf16.msra.mxu0 %v1004
          %1056 = vmatpush.bf16.msra.mxu0 %v1000
          %1057 = vmatpush.bf16.msra.mxu0 %v996
          %1058 = vmatpush.bf16.msra.mxu0 %v992
          %1059 = vmatpush.bf16.msra.mxu0 %v988
          %1060 = vmatmul.bf16.gmra.mxu0 %v891
          %v1061 = vpop.f32.mrf.mxu0
          %v1062 = vadd.f32 0.0, %v1061
          %v1063 = vpop.f32.mrf.mxu0
          %1064 = vdwg.mxu0
          %1065 = vmatpush.bf16.msra.mxu0 %v1017
          %1066 = vmatpush.bf16.msra.mxu0 %v1013
          %1067 = vmatpush.bf16.msra.mxu0 %v1009
          %1068 = vmatpush.bf16.msra.mxu0 %v1005
          %1069 = vmatpush.bf16.msra.mxu0 %v1001
          %1070 = vmatpush.bf16.msra.mxu0 %v997
          %1071 = vmatpush.bf16.msra.mxu0 %v993
          %1072 = vmatpush.bf16.msra.mxu0 %v989
          %1073 = vmatmul.bf16.gmra.mxu0 %v891
          %v1074 = vpop.f32.mrf.mxu0
          %v1075 = vadd.f32 0.0, %v1074
          %v1076 = vpop.f32.mrf.mxu0
          %1077 = vdwg.mxu0
          %1078 = vmatpush.bf16.msra.mxu0 %v1018
          %1079 = vmatpush.bf16.msra.mxu0 %v1014
          %1080 = vmatpush.bf16.msra.mxu0 %v1010
          %1081 = vmatpush.bf16.msra.mxu0 %v1006
          %1082 = vmatpush.bf16.msra.mxu0 %v1002
          %1083 = vmatpush.bf16.msra.mxu0 %v998
          %1084 = vmatpush.bf16.msra.mxu0 %v994
          %1085 = vmatpush.bf16.msra.mxu0 %v990
          %1086 = vmatmul.bf16.gmra.mxu0 %v891
          %v1087 = vpop.f32.mrf.mxu0
          %v1088 = vadd.f32 0.0, %v1087
          %v1089 = vpop.f32.mrf.mxu0
          %1090 = vdwg.mxu0
          %1091 = vmatpush.bf16.msra.mxu0 %v1019
          %1092 = vmatpush.bf16.msra.mxu0 %v1015
          %1093 = vmatpush.bf16.msra.mxu0 %v1011
          %1094 = vmatpush.bf16.msra.mxu0 %v1007
          %1095 = vmatpush.bf16.msra.mxu0 %v1003
          %1096 = vmatpush.bf16.msra.mxu0 %v999
          %1097 = vmatpush.bf16.msra.mxu0 %v995
          %1098 = vmatpush.bf16.msra.mxu0 %v991
          %1099 = vmatmul.bf16.gmra.mxu0 %v891
          %v1100 = vpop.f32.mrf.mxu0
          %v1101 = vadd.f32 0.0, %v1100
          %v1102 = vpop.f32.mrf.mxu0
          %1103 = vdwg.mxu0
          %v1104 = vadd.f32 %v887, %v1062
          %v1105 = vadd.f32 %v888, %v1075
          %v1106 = vadd.f32 %v889, %v1088
          %v1107 = vadd.f32 %v890, %v1101
          %v1108 = vxor.u32 %v1104, 2147483648
          %v1109 = vmul.f32 %v1108, 1.442695
          %v1110 = vpow.pop %v1109
          %v1111 = vadd.f32 %v1110, 1.0
          %v1112 = vrcp.pop %v1111
          %v1113 = vmul.f32 %v1111, %v1112
          %v1114 = vsub.f32 1.0, %v1113
          %v1115 = vmul.f32 %v1112, %v1114
          %v1116 = vadd.f32 %v1112, %v1115
          %vm1117 = vweird.f32 %v1111
          %vm1118 = vweird.f32 %v1112
          %vm1119 = vmor %vm1117, %vm1118
          %v1120 = vsel %vm1119, %v1112, %v1116
          %v1121 = vand.u32 2147483647, %v1111
          %vm1122 = vcmp.eq.f32.partialorder %v1121, 8.507059e+37
          %v1123 = vand.u32 %v1111, 2147483648
          %v1124 = vor.u32 1.1754944e-38, %v1123
          %v1125 = vsel %vm1122, %v1124, %v1120
          %v1126 = vmul.f32 1.0, %v1125
          %v1127 = vxor.u32 %v1105, 2147483648
          %v1128 = vmul.f32 %v1127, 1.442695
          %v1129 = vpow.pop %v1128
          %v1130 = vadd.f32 %v1129, 1.0
          %v1131 = vrcp.pop %v1130
          %v1132 = vmul.f32 %v1130, %v1131
          %v1133 = vsub.f32 1.0, %v1132
          %v1134 = vmul.f32 %v1131, %v1133
          %v1135 = vadd.f32 %v1131, %v1134
          %vm1136 = vweird.f32 %v1130
          %vm1137 = vweird.f32 %v1131
          %vm1138 = vmor %vm1136, %vm1137
          %v1139 = vsel %vm1138, %v1131, %v1135
          %v1140 = vand.u32 2147483647, %v1130
          %vm1141 = vcmp.eq.f32.partialorder %v1140, 8.507059e+37
          %v1142 = vand.u32 %v1130, 2147483648
          %v1143 = vor.u32 1.1754944e-38, %v1142
          %v1144 = vsel %vm1141, %v1143, %v1139
          %v1145 = vmul.f32 1.0, %v1144
          %v1146 = vtanh.pop %v1106
          %v1147 = vxor.u32 %v1107, 2147483648
          %v1148 = vmul.f32 %v1147, 1.442695
          %v1149 = vpow.pop %v1148
          %v1150 = vadd.f32 %v1149, 1.0
          %v1151 = vrcp.pop %v1150
          %v1152 = vmul.f32 %v1150, %v1151
          %v1153 = vsub.f32 1.0, %v1152
          %v1154 = vmul.f32 %v1151, %v1153
          %v1155 = vadd.f32 %v1151, %v1154
          %vm1156 = vweird.f32 %v1150
          %vm1157 = vweird.f32 %v1151
          %vm1158 = vmor %vm1156, %vm1157
          %v1159 = vsel %vm1158, %v1151, %v1155
          %v1160 = vand.u32 2147483647, %v1150
          %vm1161 = vcmp.eq.f32.partialorder %v1160, 8.507059e+37
          %v1162 = vand.u32 %v1150, 2147483648
          %v1163 = vor.u32 1.1754944e-38, %v1162
          %v1164 = vsel %vm1161, %v1163, %v1159
          %v1165 = vmul.f32 1.0, %v1164
          %v1166 = vmul.f32 %v1145, %v886
          %v1167 = vmul.f32 %v1126, %v1146
          %v1168 = vadd.f32 %v1166, %v1167
          %v1169 = vtanh.pop %v1168
          %v1170 = vmul.f32 %v1165, %v1169
          %v1171 = vpack.c.bf16 %v1170, %v1170
          %1172 = vst [vmem:[%s434] sm:$0xf] %v1171
          %v1173 = vld [vmem:[#allocation2 + $0x20] sm:$0xff]
          %v1174 = vld [vmem:[#allocation2 + $0x28] sm:$0xff]
          %v1175 = vld [vmem:[#allocation2 + $0x30] sm:$0xff]
          %v1176 = vld [vmem:[#allocation2 + $0x38] sm:$0xff]
          %1177 = vmatpush.bf16.msra.mxu0 %v1016
          %1178 = vmatpush.bf16.msra.mxu0 %v1012
          %1179 = vmatpush.bf16.msra.mxu0 %v1008
          %1180 = vmatpush.bf16.msra.mxu0 %v1004
          %1181 = vmatpush.bf16.msra.mxu0 %v1000
          %1182 = vmatpush.bf16.msra.mxu0 %v996
          %1183 = vmatpush.bf16.msra.mxu0 %v992
          %1184 = vmatpush.bf16.msra.mxu0 %v988
          %1185 = vmatmul.bf16.gmra.mxu0 %v1171
          %v1186 = vpop.f32.mrf.mxu0
          %v1187 = vadd.f32 0.0, %v1186
          %v1188 = vpop.f32.mrf.mxu0
          %1189 = vdwg.mxu0
          %1190 = vmatpush.bf16.msra.mxu0 %v1017
          %1191 = vmatpush.bf16.msra.mxu0 %v1013
          %1192 = vmatpush.bf16.msra.mxu0 %v1009
          %1193 = vmatpush.bf16.msra.mxu0 %v1005
          %1194 = vmatpush.bf16.msra.mxu0 %v1001
          %1195 = vmatpush.bf16.msra.mxu0 %v997
          %1196 = vmatpush.bf16.msra.mxu0 %v993
          %1197 = vmatpush.bf16.msra.mxu0 %v989
          %1198 = vmatmul.bf16.gmra.mxu0 %v1171
          %v1199 = vpop.f32.mrf.mxu0
          %v1200 = vadd.f32 0.0, %v1199
          %v1201 = vpop.f32.mrf.mxu0
          %1202 = vdwg.mxu0
          %1203 = vmatpush.bf16.msra.mxu0 %v1018
          %1204 = vmatpush.bf16.msra.mxu0 %v1014
          %1205 = vmatpush.bf16.msra.mxu0 %v1010
          %1206 = vmatpush.bf16.msra.mxu0 %v1006
          %1207 = vmatpush.bf16.msra.mxu0 %v1002
          %1208 = vmatpush.bf16.msra.mxu0 %v998
          %1209 = vmatpush.bf16.msra.mxu0 %v994
          %1210 = vmatpush.bf16.msra.mxu0 %v990
          %1211 = vmatmul.bf16.gmra.mxu0 %v1171
          %v1212 = vpop.f32.mrf.mxu0
          %v1213 = vadd.f32 0.0, %v1212
          %v1214 = vpop.f32.mrf.mxu0
          %1215 = vdwg.mxu0
          %1216 = vmatpush.bf16.msra.mxu0 %v1019
          %1217 = vmatpush.bf16.msra.mxu0 %v1015
          %1218 = vmatpush.bf16.msra.mxu0 %v1011
          %1219 = vmatpush.bf16.msra.mxu0 %v1007
          %1220 = vmatpush.bf16.msra.mxu0 %v1003
          %1221 = vmatpush.bf16.msra.mxu0 %v999
          %1222 = vmatpush.bf16.msra.mxu0 %v995
          %1223 = vmatpush.bf16.msra.mxu0 %v991
          %1224 = vmatmul.bf16.gmra.mxu0 %v1171
          %v1225 = vpop.f32.mrf.mxu0
          %v1226 = vadd.f32 0.0, %v1225
          %v1227 = vpop.f32.mrf.mxu0
          %1228 = vdwg.mxu0
          %v1229 = vadd.f32 %v1173, %v1187
          %v1230 = vadd.f32 %v1174, %v1200
          %v1231 = vadd.f32 %v1175, %v1213
          %v1232 = vadd.f32 %v1176, %v1226
          %v1233 = vxor.u32 %v1229, 2147483648
          %v1234 = vmul.f32 %v1233, 1.442695
          %v1235 = vpow.pop %v1234
          %v1236 = vadd.f32 %v1235, 1.0
          %v1237 = vrcp.pop %v1236
          %v1238 = vmul.f32 %v1236, %v1237
          %v1239 = vsub.f32 1.0, %v1238
          %v1240 = vmul.f32 %v1237, %v1239
          %v1241 = vadd.f32 %v1237, %v1240
          %vm1242 = vweird.f32 %v1236
          %vm1243 = vweird.f32 %v1237
          %vm1244 = vmor %vm1242, %vm1243
          %v1245 = vsel %vm1244, %v1237, %v1241
          %v1246 = vand.u32 2147483647, %v1236
          %vm1247 = vcmp.eq.f32.partialorder %v1246, 8.507059e+37
          %v1248 = vand.u32 %v1236, 2147483648
          %v1249 = vor.u32 1.1754944e-38, %v1248
          %v1250 = vsel %vm1247, %v1249, %v1245
          %v1251 = vmul.f32 1.0, %v1250
          %v1252 = vxor.u32 %v1230, 2147483648
          %v1253 = vmul.f32 %v1252, 1.442695
          %v1254 = vpow.pop %v1253
          %v1255 = vadd.f32 %v1254, 1.0
          %v1256 = vrcp.pop %v1255
          %v1257 = vmul.f32 %v1255, %v1256
          %v1258 = vsub.f32 1.0, %v1257
          %v1259 = vmul.f32 %v1256, %v1258
          %v1260 = vadd.f32 %v1256, %v1259
          %vm1261 = vweird.f32 %v1255
          %vm1262 = vweird.f32 %v1256
          %vm1263 = vmor %vm1261, %vm1262
          %v1264 = vsel %vm1263, %v1256, %v1260
          %v1265 = vand.u32 2147483647, %v1255
          %vm1266 = vcmp.eq.f32.partialorder %v1265, 8.507059e+37
          %v1267 = vand.u32 %v1255, 2147483648
          %v1268 = vor.u32 1.1754944e-38, %v1267
          %v1269 = vsel %vm1266, %v1268, %v1264
          %v1270 = vmul.f32 1.0, %v1269
          %v1271 = vtanh.pop %v1231
          %v1272 = vxor.u32 %v1232, 2147483648
          %v1273 = vmul.f32 %v1272, 1.442695
          %v1274 = vpow.pop %v1273
          %v1275 = vadd.f32 %v1274, 1.0
          %v1276 = vrcp.pop %v1275
          %v1277 = vmul.f32 %v1275, %v1276
          %v1278 = vsub.f32 1.0, %v1277
          %v1279 = vmul.f32 %v1276, %v1278
          %v1280 = vadd.f32 %v1276, %v1279
          %vm1281 = vweird.f32 %v1275
          %vm1282 = vweird.f32 %v1276
          %vm1283 = vmor %vm1281, %vm1282
          %v1284 = vsel %vm1283, %v1276, %v1280
          %v1285 = vand.u32 2147483647, %v1275
          %vm1286 = vcmp.eq.f32.partialorder %v1285, 8.507059e+37
          %v1287 = vand.u32 %v1275, 2147483648
          %v1288 = vor.u32 1.1754944e-38, %v1287
          %v1289 = vsel %vm1286, %v1288, %v1284
          %v1290 = vmul.f32 1.0, %v1289
          %v1291 = vmul.f32 %v1270, %v1168
          %v1292 = vmul.f32 %v1251, %v1271
          %v1293 = vadd.f32 %v1291, %v1292
          %v1294 = vtanh.pop %v1293
          %v1295 = vmul.f32 %v1290, %v1294
          %v1296 = vpack.c.bf16 %v1295, %v1295
          %1297 = vst [vmem:[%s434 + $0x4] sm:$0xf] %v1296
          %v1298 = vld [vmem:[#allocation2 + $0x40] sm:$0xff]
          %v1299 = vld [vmem:[#allocation2 + $0x48] sm:$0xff]
          %v1300 = vld [vmem:[#allocation2 + $0x50] sm:$0xff]
          %v1301 = vld [vmem:[#allocation2 + $0x58] sm:$0xff]
          %1302 = vmatpush.bf16.msra.mxu0 %v1016
          %1303 = vmatpush.bf16.msra.mxu0 %v1012
          %1304 = vmatpush.bf16.msra.mxu0 %v1008
          %1305 = vmatpush.bf16.msra.mxu0 %v1004
          %1306 = vmatpush.bf16.msra.mxu0 %v1000
          %1307 = vmatpush.bf16.msra.mxu0 %v996
          %1308 = vmatpush.bf16.msra.mxu0 %v992
          %1309 = vmatpush.bf16.msra.mxu0 %v988
          %1310 = vmatmul.bf16.gmra.mxu0 %v1296
          %v1311 = vpop.f32.mrf.mxu0
          %v1312 = vadd.f32 0.0, %v1311
          %v1313 = vpop.f32.mrf.mxu0
          %1314 = vdwg.mxu0
          %1315 = vmatpush.bf16.msra.mxu0 %v1017
          %1316 = vmatpush.bf16.msra.mxu0 %v1013
          %1317 = vmatpush.bf16.msra.mxu0 %v1009
          %1318 = vmatpush.bf16.msra.mxu0 %v1005
          %1319 = vmatpush.bf16.msra.mxu0 %v1001
          %1320 = vmatpush.bf16.msra.mxu0 %v997
          %1321 = vmatpush.bf16.msra.mxu0 %v993
          %1322 = vmatpush.bf16.msra.mxu0 %v989
          %1323 = vmatmul.bf16.gmra.mxu0 %v1296
          %v1324 = vpop.f32.mrf.mxu0
          %v1325 = vadd.f32 0.0, %v1324
          %v1326 = vpop.f32.mrf.mxu0
          %1327 = vdwg.mxu0
          %1328 = vmatpush.bf16.msra.mxu0 %v1018
          %1329 = vmatpush.bf16.msra.mxu0 %v1014
          %1330 = vmatpush.bf16.msra.mxu0 %v1010
          %1331 = vmatpush.bf16.msra.mxu0 %v1006
          %1332 = vmatpush.bf16.msra.mxu0 %v1002
          %1333 = vmatpush.bf16.msra.mxu0 %v998
          %1334 = vmatpush.bf16.msra.mxu0 %v994
          %1335 = vmatpush.bf16.msra.mxu0 %v990
          %1336 = vmatmul.bf16.gmra.mxu0 %v1296
          %v1337 = vpop.f32.mrf.mxu0
          %v1338 = vadd.f32 0.0, %v1337
          %v1339 = vpop.f32.mrf.mxu0
          %1340 = vdwg.mxu0
          %1341 = vmatpush.bf16.msra.mxu0 %v1019
          %1342 = vmatpush.bf16.msra.mxu0 %v1015
          %1343 = vmatpush.bf16.msra.mxu0 %v1011
          %1344 = vmatpush.bf16.msra.mxu0 %v1007
          %1345 = vmatpush.bf16.msra.mxu0 %v1003
          %1346 = vmatpush.bf16.msra.mxu0 %v999
          %1347 = vmatpush.bf16.msra.mxu0 %v995
          %1348 = vmatpush.bf16.msra.mxu0 %v991
          %1349 = vmatmul.bf16.gmra.mxu0 %v1296
          %v1350 = vpop.f32.mrf.mxu0
          %v1351 = vadd.f32 0.0, %v1350
          %v1352 = vpop.f32.mrf.mxu0
          %1353 = vdwg.mxu0
          %v1354 = vadd.f32 %v1298, %v1312
          %v1355 = vadd.f32 %v1299, %v1325
          %v1356 = vadd.f32 %v1300, %v1338
          %v1357 = vadd.f32 %v1301, %v1351
          %v1358 = vxor.u32 %v1354, 2147483648
          %v1359 = vmul.f32 %v1358, 1.442695
          %v1360 = vpow.pop %v1359
          %v1361 = vadd.f32 %v1360, 1.0
          %v1362 = vrcp.pop %v1361
          %v1363 = vmul.f32 %v1361, %v1362
          %v1364 = vsub.f32 1.0, %v1363
          %v1365 = vmul.f32 %v1362, %v1364
          %v1366 = vadd.f32 %v1362, %v1365
          %vm1367 = vweird.f32 %v1361
          %vm1368 = vweird.f32 %v1362
          %vm1369 = vmor %vm1367, %vm1368
          %v1370 = vsel %vm1369, %v1362, %v1366
          %v1371 = vand.u32 2147483647, %v1361
          %vm1372 = vcmp.eq.f32.partialorder %v1371, 8.507059e+37
          %v1373 = vand.u32 %v1361, 2147483648
          %v1374 = vor.u32 1.1754944e-38, %v1373
          %v1375 = vsel %vm1372, %v1374, %v1370
          %v1376 = vmul.f32 1.0, %v1375
          %v1377 = vxor.u32 %v1355, 2147483648
          %v1378 = vmul.f32 %v1377, 1.442695
          %v1379 = vpow.pop %v1378
          %v1380 = vadd.f32 %v1379, 1.0
          %v1381 = vrcp.pop %v1380
          %v1382 = vmul.f32 %v1380, %v1381
          %v1383 = vsub.f32 1.0, %v1382
          %v1384 = vmul.f32 %v1381, %v1383
          %v1385 = vadd.f32 %v1381, %v1384
          %vm1386 = vweird.f32 %v1380
          %vm1387 = vweird.f32 %v1381
          %vm1388 = vmor %vm1386, %vm1387
          %v1389 = vsel %vm1388, %v1381, %v1385
          %v1390 = vand.u32 2147483647, %v1380
          %vm1391 = vcmp.eq.f32.partialorder %v1390, 8.507059e+37
          %v1392 = vand.u32 %v1380, 2147483648
          %v1393 = vor.u32 1.1754944e-38, %v1392
          %v1394 = vsel %vm1391, %v1393, %v1389
          %v1395 = vmul.f32 1.0, %v1394
          %v1396 = vtanh.pop %v1356
          %v1397 = vxor.u32 %v1357, 2147483648
          %v1398 = vmul.f32 %v1397, 1.442695
          %v1399 = vpow.pop %v1398
          %v1400 = vadd.f32 %v1399, 1.0
          %v1401 = vrcp.pop %v1400
          %v1402 = vmul.f32 %v1400, %v1401
          %v1403 = vsub.f32 1.0, %v1402
          %v1404 = vmul.f32 %v1401, %v1403
          %v1405 = vadd.f32 %v1401, %v1404
          %vm1406 = vweird.f32 %v1400
          %vm1407 = vweird.f32 %v1401
          %vm1408 = vmor %vm1406, %vm1407
          %v1409 = vsel %vm1408, %v1401, %v1405
          %v1410 = vand.u32 2147483647, %v1400
          %vm1411 = vcmp.eq.f32.partialorder %v1410, 8.507059e+37
          %v1412 = vand.u32 %v1400, 2147483648
          %v1413 = vor.u32 1.1754944e-38, %v1412
          %v1414 = vsel %vm1411, %v1413, %v1409
          %v1415 = vmul.f32 1.0, %v1414
          %v1416 = vmul.f32 %v1395, %v1293
          %v1417 = vmul.f32 %v1376, %v1396
          %v1418 = vadd.f32 %v1416, %v1417
          %v1419 = vtanh.pop %v1418
          %v1420 = vmul.f32 %v1415, %v1419
          %v1421 = vpack.c.bf16 %v1420, %v1420
          %1422 = vst [vmem:[%s434 + $0x8] sm:$0xf] %v1421
          %v1423 = vld [vmem:[#allocation2 + $0x60] sm:$0xff]
          %v1424 = vld [vmem:[#allocation2 + $0x68] sm:$0xff]
          %v1425 = vld [vmem:[#allocation2 + $0x70] sm:$0xff]
          %v1426 = vld [vmem:[#allocation2 + $0x78] sm:$0xff]
          %1427 = vmatpush.bf16.msra.mxu0 %v1016
          %1428 = vmatpush.bf16.msra.mxu0 %v1012
          %1429 = vmatpush.bf16.msra.mxu0 %v1008
          %1430 = vmatpush.bf16.msra.mxu0 %v1004
          %1431 = vmatpush.bf16.msra.mxu0 %v1000
          %1432 = vmatpush.bf16.msra.mxu0 %v996
          %1433 = vmatpush.bf16.msra.mxu0 %v992
          %1434 = vmatpush.bf16.msra.mxu0 %v988
          %1435 = vmatmul.bf16.gmra.mxu0 %v1421
          %v1436 = vpop.f32.mrf.mxu0
          %v1437 = vadd.f32 0.0, %v1436
          %v1438 = vpop.f32.mrf.mxu0
          %1439 = vdwg.mxu0
          %1440 = vmatpush.bf16.msra.mxu0 %v1017
          %1441 = vmatpush.bf16.msra.mxu0 %v1013
          %1442 = vmatpush.bf16.msra.mxu0 %v1009
          %1443 = vmatpush.bf16.msra.mxu0 %v1005
          %1444 = vmatpush.bf16.msra.mxu0 %v1001
          %1445 = vmatpush.bf16.msra.mxu0 %v997
          %1446 = vmatpush.bf16.msra.mxu0 %v993
          %1447 = vmatpush.bf16.msra.mxu0 %v989
          %1448 = vmatmul.bf16.gmra.mxu0 %v1421
          %v1449 = vpop.f32.mrf.mxu0
          %v1450 = vadd.f32 0.0, %v1449
          %v1451 = vpop.f32.mrf.mxu0
          %1452 = vdwg.mxu0
          %1453 = vmatpush.bf16.msra.mxu0 %v1018
          %1454 = vmatpush.bf16.msra.mxu0 %v1014
          %1455 = vmatpush.bf16.msra.mxu0 %v1010
          %1456 = vmatpush.bf16.msra.mxu0 %v1006
          %1457 = vmatpush.bf16.msra.mxu0 %v1002
          %1458 = vmatpush.bf16.msra.mxu0 %v998
          %1459 = vmatpush.bf16.msra.mxu0 %v994
          %1460 = vmatpush.bf16.msra.mxu0 %v990
          %1461 = vmatmul.bf16.gmra.mxu0 %v1421
          %v1462 = vpop.f32.mrf.mxu0
          %v1463 = vadd.f32 0.0, %v1462
          %v1464 = vpop.f32.mrf.mxu0
          %1465 = vdwg.mxu0
          %1466 = vmatpush.bf16.msra.mxu0 %v1019
          %1467 = vmatpush.bf16.msra.mxu0 %v1015
          %1468 = vmatpush.bf16.msra.mxu0 %v1011
          %1469 = vmatpush.bf16.msra.mxu0 %v1007
          %1470 = vmatpush.bf16.msra.mxu0 %v1003
          %1471 = vmatpush.bf16.msra.mxu0 %v999
          %1472 = vmatpush.bf16.msra.mxu0 %v995
          %1473 = vmatpush.bf16.msra.mxu0 %v991
          %1474 = vmatmul.bf16.gmra.mxu0 %v1421
          %v1475 = vpop.f32.mrf.mxu0
          %v1476 = vadd.f32 0.0, %v1475
          %v1477 = vpop.f32.mrf.mxu0
          %1478 = vdwg.mxu0
          %v1479 = vadd.f32 %v1423, %v1437
          %v1480 = vadd.f32 %v1424, %v1450
          %v1481 = vadd.f32 %v1425, %v1463
          %v1482 = vadd.f32 %v1426, %v1476
          %v1483 = vxor.u32 %v1479, 2147483648
          %v1484 = vmul.f32 %v1483, 1.442695
          %v1485 = vpow.pop %v1484
          %v1486 = vadd.f32 %v1485, 1.0
          %v1487 = vrcp.pop %v1486
          %v1488 = vmul.f32 %v1486, %v1487
          %v1489 = vsub.f32 1.0, %v1488
          %v1490 = vmul.f32 %v1487, %v1489
          %v1491 = vadd.f32 %v1487, %v1490
          %vm1492 = vweird.f32 %v1486
          %vm1493 = vweird.f32 %v1487
          %vm1494 = vmor %vm1492, %vm1493
          %v1495 = vsel %vm1494, %v1487, %v1491
          %v1496 = vand.u32 2147483647, %v1486
          %vm1497 = vcmp.eq.f32.partialorder %v1496, 8.507059e+37
          %v1498 = vand.u32 %v1486, 2147483648
          %v1499 = vor.u32 1.1754944e-38, %v1498
          %v1500 = vsel %vm1497, %v1499, %v1495
          %v1501 = vmul.f32 1.0, %v1500
          %v1502 = vxor.u32 %v1480, 2147483648
          %v1503 = vmul.f32 %v1502, 1.442695
          %v1504 = vpow.pop %v1503
          %v1505 = vadd.f32 %v1504, 1.0
          %v1506 = vrcp.pop %v1505
          %v1507 = vmul.f32 %v1505, %v1506
          %v1508 = vsub.f32 1.0, %v1507
          %v1509 = vmul.f32 %v1506, %v1508
          %v1510 = vadd.f32 %v1506, %v1509
          %vm1511 = vweird.f32 %v1505
          %vm1512 = vweird.f32 %v1506
          %vm1513 = vmor %vm1511, %vm1512
          %v1514 = vsel %vm1513, %v1506, %v1510
          %v1515 = vand.u32 2147483647, %v1505
          %vm1516 = vcmp.eq.f32.partialorder %v1515, 8.507059e+37
          %v1517 = vand.u32 %v1505, 2147483648
          %v1518 = vor.u32 1.1754944e-38, %v1517
          %v1519 = vsel %vm1516, %v1518, %v1514
          %v1520 = vmul.f32 1.0, %v1519
          %v1521 = vtanh.pop %v1481
          %v1522 = vxor.u32 %v1482, 2147483648
          %v1523 = vmul.f32 %v1522, 1.442695
          %v1524 = vpow.pop %v1523
          %v1525 = vadd.f32 %v1524, 1.0
          %v1526 = vrcp.pop %v1525
          %v1527 = vmul.f32 %v1525, %v1526
          %v1528 = vsub.f32 1.0, %v1527
          %v1529 = vmul.f32 %v1526, %v1528
          %v1530 = vadd.f32 %v1526, %v1529
          %vm1531 = vweird.f32 %v1525
          %vm1532 = vweird.f32 %v1526
          %vm1533 = vmor %vm1531, %vm1532
          %v1534 = vsel %vm1533, %v1526, %v1530
          %v1535 = vand.u32 2147483647, %v1525
          %vm1536 = vcmp.eq.f32.partialorder %v1535, 8.507059e+37
          %v1537 = vand.u32 %v1525, 2147483648
          %v1538 = vor.u32 1.1754944e-38, %v1537
          %v1539 = vsel %vm1536, %v1538, %v1534
          %v1540 = vmul.f32 1.0, %v1539
          %v1541 = vmul.f32 %v1520, %v1418
          %v1542 = vmul.f32 %v1501, %v1521
          %v1543 = vadd.f32 %v1541, %v1542
          %v1544 = vtanh.pop %v1543
          %v1545 = vmul.f32 %v1540, %v1544
          %v1546 = vpack.c.bf16 %v1545, %v1545
          %1547 = vst [vmem:[%s434 + $0xc] sm:$0xf] %v1546
          %v1548 = vld [vmem:[#allocation2 + $0x80] sm:$0xff]
          %v1549 = vld [vmem:[#allocation2 + $0x88] sm:$0xff]
          %v1550 = vld [vmem:[#allocation2 + $0x90] sm:$0xff]
          %v1551 = vld [vmem:[#allocation2 + $0x98] sm:$0xff]
          %1552 = vmatpush.bf16.msra.mxu0 %v1016
          %1553 = vmatpush.bf16.msra.mxu0 %v1012
          %1554 = vmatpush.bf16.msra.mxu0 %v1008
          %1555 = vmatpush.bf16.msra.mxu0 %v1004
          %1556 = vmatpush.bf16.msra.mxu0 %v1000
          %1557 = vmatpush.bf16.msra.mxu0 %v996
          %1558 = vmatpush.bf16.msra.mxu0 %v992
          %1559 = vmatpush.bf16.msra.mxu0 %v988
          %1560 = vmatmul.bf16.gmra.mxu0 %v1546
          %v1561 = vpop.f32.mrf.mxu0
          %v1562 = vadd.f32 0.0, %v1561
          %v1563 = vpop.f32.mrf.mxu0
          %1564 = vdwg.mxu0
          %1565 = vmatpush.bf16.msra.mxu0 %v1017
          %1566 = vmatpush.bf16.msra.mxu0 %v1013
          %1567 = vmatpush.bf16.msra.mxu0 %v1009
          %1568 = vmatpush.bf16.msra.mxu0 %v1005
          %1569 = vmatpush.bf16.msra.mxu0 %v1001
          %1570 = vmatpush.bf16.msra.mxu0 %v997
          %1571 = vmatpush.bf16.msra.mxu0 %v993
          %1572 = vmatpush.bf16.msra.mxu0 %v989
          %1573 = vmatmul.bf16.gmra.mxu0 %v1546
          %v1574 = vpop.f32.mrf.mxu0
          %v1575 = vadd.f32 0.0, %v1574
          %v1576 = vpop.f32.mrf.mxu0
          %1577 = vdwg.mxu0
          %1578 = vmatpush.bf16.msra.mxu0 %v1018
          %1579 = vmatpush.bf16.msra.mxu0 %v1014
          %1580 = vmatpush.bf16.msra.mxu0 %v1010
          %1581 = vmatpush.bf16.msra.mxu0 %v1006
          %1582 = vmatpush.bf16.msra.mxu0 %v1002
          %1583 = vmatpush.bf16.msra.mxu0 %v998
          %1584 = vmatpush.bf16.msra.mxu0 %v994
          %1585 = vmatpush.bf16.msra.mxu0 %v990
          %1586 = vmatmul.bf16.gmra.mxu0 %v1546
          %v1587 = vpop.f32.mrf.mxu0
          %v1588 = vadd.f32 0.0, %v1587
          %v1589 = vpop.f32.mrf.mxu0
          %1590 = vdwg.mxu0
          %1591 = vmatpush.bf16.msra.mxu0 %v1019
          %1592 = vmatpush.bf16.msra.mxu0 %v1015
          %1593 = vmatpush.bf16.msra.mxu0 %v1011
          %1594 = vmatpush.bf16.msra.mxu0 %v1007
          %1595 = vmatpush.bf16.msra.mxu0 %v1003
          %1596 = vmatpush.bf16.msra.mxu0 %v999
          %1597 = vmatpush.bf16.msra.mxu0 %v995
          %1598 = vmatpush.bf16.msra.mxu0 %v991
          %1599 = vmatmul.bf16.gmra.mxu0 %v1546
          %v1600 = vpop.f32.mrf.mxu0
          %v1601 = vadd.f32 0.0, %v1600
          %v1602 = vpop.f32.mrf.mxu0
          %1603 = vdwg.mxu0
          %v1604 = vadd.f32 %v1548, %v1562
          %v1605 = vadd.f32 %v1549, %v1575
          %v1606 = vadd.f32 %v1550, %v1588
          %v1607 = vadd.f32 %v1551, %v1601
          %v1608 = vxor.u32 %v1604, 2147483648
          %v1609 = vmul.f32 %v1608, 1.442695
          %v1610 = vpow.pop %v1609
          %v1611 = vadd.f32 %v1610, 1.0
          %v1612 = vrcp.pop %v1611
          %v1613 = vmul.f32 %v1611, %v1612
          %v1614 = vsub.f32 1.0, %v1613
          %v1615 = vmul.f32 %v1612, %v1614
          %v1616 = vadd.f32 %v1612, %v1615
          %vm1617 = vweird.f32 %v1611
          %vm1618 = vweird.f32 %v1612
          %vm1619 = vmor %vm1617, %vm1618
          %v1620 = vsel %vm1619, %v1612, %v1616
          %v1621 = vand.u32 2147483647, %v1611
          %vm1622 = vcmp.eq.f32.partialorder %v1621, 8.507059e+37
          %v1623 = vand.u32 %v1611, 2147483648
          %v1624 = vor.u32 1.1754944e-38, %v1623
          %v1625 = vsel %vm1622, %v1624, %v1620
          %v1626 = vmul.f32 1.0, %v1625
          %v1627 = vxor.u32 %v1605, 2147483648
          %v1628 = vmul.f32 %v1627, 1.442695
          %v1629 = vpow.pop %v1628
          %v1630 = vadd.f32 %v1629, 1.0
          %v1631 = vrcp.pop %v1630
          %v1632 = vmul.f32 %v1630, %v1631
          %v1633 = vsub.f32 1.0, %v1632
          %v1634 = vmul.f32 %v1631, %v1633
          %v1635 = vadd.f32 %v1631, %v1634
          %vm1636 = vweird.f32 %v1630
          %vm1637 = vweird.f32 %v1631
          %vm1638 = vmor %vm1636, %vm1637
          %v1639 = vsel %vm1638, %v1631, %v1635
          %v1640 = vand.u32 2147483647, %v1630
          %vm1641 = vcmp.eq.f32.partialorder %v1640, 8.507059e+37
          %v1642 = vand.u32 %v1630, 2147483648
          %v1643 = vor.u32 1.1754944e-38, %v1642
          %v1644 = vsel %vm1641, %v1643, %v1639
          %v1645 = vmul.f32 1.0, %v1644
          %v1646 = vtanh.pop %v1606
          %v1647 = vxor.u32 %v1607, 2147483648
          %v1648 = vmul.f32 %v1647, 1.442695
          %v1649 = vpow.pop %v1648
          %v1650 = vadd.f32 %v1649, 1.0
          %v1651 = vrcp.pop %v1650
          %v1652 = vmul.f32 %v1650, %v1651
          %v1653 = vsub.f32 1.0, %v1652
          %v1654 = vmul.f32 %v1651, %v1653
          %v1655 = vadd.f32 %v1651, %v1654
          %vm1656 = vweird.f32 %v1650
          %vm1657 = vweird.f32 %v1651
          %vm1658 = vmor %vm1656, %vm1657
          %v1659 = vsel %vm1658, %v1651, %v1655
          %v1660 = vand.u32 2147483647, %v1650
          %vm1661 = vcmp.eq.f32.partialorder %v1660, 8.507059e+37
          %v1662 = vand.u32 %v1650, 2147483648
          %v1663 = vor.u32 1.1754944e-38, %v1662
          %v1664 = vsel %vm1661, %v1663, %v1659
          %v1665 = vmul.f32 1.0, %v1664
          %v1666 = vmul.f32 %v1645, %v1543
          %v1667 = vmul.f32 %v1626, %v1646
          %v1668 = vadd.f32 %v1666, %v1667
          %v1669 = vtanh.pop %v1668
          %v1670 = vmul.f32 %v1665, %v1669
          %v1671 = vpack.c.bf16 %v1670, %v1670
          %1672 = vst [vmem:[%s434 + $0x10] sm:$0xf] %v1671
          %v1673 = vld [vmem:[#allocation2 + $0xa0] sm:$0xff]
          %v1674 = vld [vmem:[#allocation2 + $0xa8] sm:$0xff]
          %v1675 = vld [vmem:[#allocation2 + $0xb0] sm:$0xff]
          %v1676 = vld [vmem:[#allocation2 + $0xb8] sm:$0xff]
          %1677 = vmatpush.bf16.msra.mxu0 %v1016
          %1678 = vmatpush.bf16.msra.mxu0 %v1012
          %1679 = vmatpush.bf16.msra.mxu0 %v1008
          %1680 = vmatpush.bf16.msra.mxu0 %v1004
          %1681 = vmatpush.bf16.msra.mxu0 %v1000
          %1682 = vmatpush.bf16.msra.mxu0 %v996
          %1683 = vmatpush.bf16.msra.mxu0 %v992
          %1684 = vmatpush.bf16.msra.mxu0 %v988
          %1685 = vmatmul.bf16.gmra.mxu0 %v1671
          %v1686 = vpop.f32.mrf.mxu0
          %v1687 = vadd.f32 0.0, %v1686
          %v1688 = vpop.f32.mrf.mxu0
          %1689 = vdwg.mxu0
          %1690 = vmatpush.bf16.msra.mxu0 %v1017
          %1691 = vmatpush.bf16.msra.mxu0 %v1013
          %1692 = vmatpush.bf16.msra.mxu0 %v1009
          %1693 = vmatpush.bf16.msra.mxu0 %v1005
          %1694 = vmatpush.bf16.msra.mxu0 %v1001
          %1695 = vmatpush.bf16.msra.mxu0 %v997
          %1696 = vmatpush.bf16.msra.mxu0 %v993
          %1697 = vmatpush.bf16.msra.mxu0 %v989
          %1698 = vmatmul.bf16.gmra.mxu0 %v1671
          %v1699 = vpop.f32.mrf.mxu0
          %v1700 = vadd.f32 0.0, %v1699
          %v1701 = vpop.f32.mrf.mxu0
          %1702 = vdwg.mxu0
          %1703 = vmatpush.bf16.msra.mxu0 %v1018
          %1704 = vmatpush.bf16.msra.mxu0 %v1014
          %1705 = vmatpush.bf16.msra.mxu0 %v1010
          %1706 = vmatpush.bf16.msra.mxu0 %v1006
          %1707 = vmatpush.bf16.msra.mxu0 %v1002
          %1708 = vmatpush.bf16.msra.mxu0 %v998
          %1709 = vmatpush.bf16.msra.mxu0 %v994
          %1710 = vmatpush.bf16.msra.mxu0 %v990
          %1711 = vmatmul.bf16.gmra.mxu0 %v1671
          %v1712 = vpop.f32.mrf.mxu0
          %v1713 = vadd.f32 0.0, %v1712
          %v1714 = vpop.f32.mrf.mxu0
          %1715 = vdwg.mxu0
          %1716 = vmatpush.bf16.msra.mxu0 %v1019
          %1717 = vmatpush.bf16.msra.mxu0 %v1015
          %1718 = vmatpush.bf16.msra.mxu0 %v1011
          %1719 = vmatpush.bf16.msra.mxu0 %v1007
          %1720 = vmatpush.bf16.msra.mxu0 %v1003
          %1721 = vmatpush.bf16.msra.mxu0 %v999
          %1722 = vmatpush.bf16.msra.mxu0 %v995
          %1723 = vmatpush.bf16.msra.mxu0 %v991
          %1724 = vmatmul.bf16.gmra.mxu0 %v1671
          %v1725 = vpop.f32.mrf.mxu0
          %v1726 = vadd.f32 0.0, %v1725
          %v1727 = vpop.f32.mrf.mxu0
          %1728 = vdwg.mxu0
          %v1729 = vadd.f32 %v1673, %v1687
          %v1730 = vadd.f32 %v1674, %v1700
          %v1731 = vadd.f32 %v1675, %v1713
          %v1732 = vadd.f32 %v1676, %v1726
          %v1733 = vxor.u32 %v1729, 2147483648
          %v1734 = vmul.f32 %v1733, 1.442695
          %v1735 = vpow.pop %v1734
          %v1736 = vadd.f32 %v1735, 1.0
          %v1737 = vrcp.pop %v1736
          %v1738 = vmul.f32 %v1736, %v1737
          %v1739 = vsub.f32 1.0, %v1738
          %v1740 = vmul.f32 %v1737, %v1739
          %v1741 = vadd.f32 %v1737, %v1740
          %vm1742 = vweird.f32 %v1736
          %vm1743 = vweird.f32 %v1737
          %vm1744 = vmor %vm1742, %vm1743
          %v1745 = vsel %vm1744, %v1737, %v1741
          %v1746 = vand.u32 2147483647, %v1736
          %vm1747 = vcmp.eq.f32.partialorder %v1746, 8.507059e+37
          %v1748 = vand.u32 %v1736, 2147483648
          %v1749 = vor.u32 1.1754944e-38, %v1748
          %v1750 = vsel %vm1747, %v1749, %v1745
          %v1751 = vmul.f32 1.0, %v1750
          %v1752 = vxor.u32 %v1730, 2147483648
          %v1753 = vmul.f32 %v1752, 1.442695
          %v1754 = vpow.pop %v1753
          %v1755 = vadd.f32 %v1754, 1.0
          %v1756 = vrcp.pop %v1755
          %v1757 = vmul.f32 %v1755, %v1756
          %v1758 = vsub.f32 1.0, %v1757
          %v1759 = vmul.f32 %v1756, %v1758
          %v1760 = vadd.f32 %v1756, %v1759
          %vm1761 = vweird.f32 %v1755
          %vm1762 = vweird.f32 %v1756
          %vm1763 = vmor %vm1761, %vm1762
          %v1764 = vsel %vm1763, %v1756, %v1760
          %v1765 = vand.u32 2147483647, %v1755
          %vm1766 = vcmp.eq.f32.partialorder %v1765, 8.507059e+37
          %v1767 = vand.u32 %v1755, 2147483648
          %v1768 = vor.u32 1.1754944e-38, %v1767
          %v1769 = vsel %vm1766, %v1768, %v1764
          %v1770 = vmul.f32 1.0, %v1769
          %v1771 = vtanh.pop %v1731
          %v1772 = vxor.u32 %v1732, 2147483648
          %v1773 = vmul.f32 %v1772, 1.442695
          %v1774 = vpow.pop %v1773
          %v1775 = vadd.f32 %v1774, 1.0
          %v1776 = vrcp.pop %v1775
          %v1777 = vmul.f32 %v1775, %v1776
          %v1778 = vsub.f32 1.0, %v1777
          %v1779 = vmul.f32 %v1776, %v1778
          %v1780 = vadd.f32 %v1776, %v1779
          %vm1781 = vweird.f32 %v1775
          %vm1782 = vweird.f32 %v1776
          %vm1783 = vmor %vm1781, %vm1782
          %v1784 = vsel %vm1783, %v1776, %v1780
          %v1785 = vand.u32 2147483647, %v1775
          %vm1786 = vcmp.eq.f32.partialorder %v1785, 8.507059e+37
          %v1787 = vand.u32 %v1775, 2147483648
          %v1788 = vor.u32 1.1754944e-38, %v1787
          %v1789 = vsel %vm1786, %v1788, %v1784
          %v1790 = vmul.f32 1.0, %v1789
          %v1791 = vmul.f32 %v1770, %v1668
          %v1792 = vmul.f32 %v1751, %v1771
          %v1793 = vadd.f32 %v1791, %v1792
          %v1794 = vtanh.pop %v1793
          %v1795 = vmul.f32 %v1790, %v1794
          %v1796 = vpack.c.bf16 %v1795, %v1795
          %1797 = vst [vmem:[%s434 + $0x14] sm:$0xf] %v1796
          %v1798 = vld [vmem:[#allocation2 + $0xc0] sm:$0xff]
          %v1799 = vld [vmem:[#allocation2 + $0xc8] sm:$0xff]
          %v1800 = vld [vmem:[#allocation2 + $0xd0] sm:$0xff]
          %v1801 = vld [vmem:[#allocation2 + $0xd8] sm:$0xff]
          %1802 = vmatpush.bf16.msra.mxu0 %v1016
          %1803 = vmatpush.bf16.msra.mxu0 %v1012
          %1804 = vmatpush.bf16.msra.mxu0 %v1008
          %1805 = vmatpush.bf16.msra.mxu0 %v1004
          %1806 = vmatpush.bf16.msra.mxu0 %v1000
          %1807 = vmatpush.bf16.msra.mxu0 %v996
          %1808 = vmatpush.bf16.msra.mxu0 %v992
          %1809 = vmatpush.bf16.msra.mxu0 %v988
          %1810 = vmatmul.bf16.gmra.mxu0 %v1796
          %v1811 = vpop.f32.mrf.mxu0
          %v1812 = vadd.f32 0.0, %v1811
          %v1813 = vpop.f32.mrf.mxu0
          %1814 = vdwg.mxu0
          %1815 = vmatpush.bf16.msra.mxu0 %v1017
          %1816 = vmatpush.bf16.msra.mxu0 %v1013
          %1817 = vmatpush.bf16.msra.mxu0 %v1009
          %1818 = vmatpush.bf16.msra.mxu0 %v1005
          %1819 = vmatpush.bf16.msra.mxu0 %v1001
          %1820 = vmatpush.bf16.msra.mxu0 %v997
          %1821 = vmatpush.bf16.msra.mxu0 %v993
          %1822 = vmatpush.bf16.msra.mxu0 %v989
          %1823 = vmatmul.bf16.gmra.mxu0 %v1796
          %v1824 = vpop.f32.mrf.mxu0
          %v1825 = vadd.f32 0.0, %v1824
          %v1826 = vpop.f32.mrf.mxu0
          %1827 = vdwg.mxu0
          %1828 = vmatpush.bf16.msra.mxu0 %v1018
          %1829 = vmatpush.bf16.msra.mxu0 %v1014
          %1830 = vmatpush.bf16.msra.mxu0 %v1010
          %1831 = vmatpush.bf16.msra.mxu0 %v1006
          %1832 = vmatpush.bf16.msra.mxu0 %v1002
          %1833 = vmatpush.bf16.msra.mxu0 %v998
          %1834 = vmatpush.bf16.msra.mxu0 %v994
          %1835 = vmatpush.bf16.msra.mxu0 %v990
          %1836 = vmatmul.bf16.gmra.mxu0 %v1796
          %v1837 = vpop.f32.mrf.mxu0
          %v1838 = vadd.f32 0.0, %v1837
          %v1839 = vpop.f32.mrf.mxu0
          %1840 = vdwg.mxu0
          %1841 = vmatpush.bf16.msra.mxu0 %v1019
          %1842 = vmatpush.bf16.msra.mxu0 %v1015
          %1843 = vmatpush.bf16.msra.mxu0 %v1011
          %1844 = vmatpush.bf16.msra.mxu0 %v1007
          %1845 = vmatpush.bf16.msra.mxu0 %v1003
          %1846 = vmatpush.bf16.msra.mxu0 %v999
          %1847 = vmatpush.bf16.msra.mxu0 %v995
          %1848 = vmatpush.bf16.msra.mxu0 %v991
          %1849 = vmatmul.bf16.gmra.mxu0 %v1796
          %v1850 = vpop.f32.mrf.mxu0
          %v1851 = vadd.f32 0.0, %v1850
          %v1852 = vpop.f32.mrf.mxu0
          %1853 = vdwg.mxu0
          %v1854 = vadd.f32 %v1798, %v1812
          %v1855 = vadd.f32 %v1799, %v1825
          %v1856 = vadd.f32 %v1800, %v1838
          %v1857 = vadd.f32 %v1801, %v1851
          %v1858 = vxor.u32 %v1854, 2147483648
          %v1859 = vmul.f32 %v1858, 1.442695
          %v1860 = vpow.pop %v1859
          %v1861 = vadd.f32 %v1860, 1.0
          %v1862 = vrcp.pop %v1861
          %v1863 = vmul.f32 %v1861, %v1862
          %v1864 = vsub.f32 1.0, %v1863
          %v1865 = vmul.f32 %v1862, %v1864
          %v1866 = vadd.f32 %v1862, %v1865
          %vm1867 = vweird.f32 %v1861
          %vm1868 = vweird.f32 %v1862
          %vm1869 = vmor %vm1867, %vm1868
          %v1870 = vsel %vm1869, %v1862, %v1866
          %v1871 = vand.u32 2147483647, %v1861
          %vm1872 = vcmp.eq.f32.partialorder %v1871, 8.507059e+37
          %v1873 = vand.u32 %v1861, 2147483648
          %v1874 = vor.u32 1.1754944e-38, %v1873
          %v1875 = vsel %vm1872, %v1874, %v1870
          %v1876 = vmul.f32 1.0, %v1875
          %v1877 = vxor.u32 %v1855, 2147483648
          %v1878 = vmul.f32 %v1877, 1.442695
          %v1879 = vpow.pop %v1878
          %v1880 = vadd.f32 %v1879, 1.0
          %v1881 = vrcp.pop %v1880
          %v1882 = vmul.f32 %v1880, %v1881
          %v1883 = vsub.f32 1.0, %v1882
          %v1884 = vmul.f32 %v1881, %v1883
          %v1885 = vadd.f32 %v1881, %v1884
          %vm1886 = vweird.f32 %v1880
          %vm1887 = vweird.f32 %v1881
          %vm1888 = vmor %vm1886, %vm1887
          %v1889 = vsel %vm1888, %v1881, %v1885
          %v1890 = vand.u32 2147483647, %v1880
          %vm1891 = vcmp.eq.f32.partialorder %v1890, 8.507059e+37
          %v1892 = vand.u32 %v1880, 2147483648
          %v1893 = vor.u32 1.1754944e-38, %v1892
          %v1894 = vsel %vm1891, %v1893, %v1889
          %v1895 = vmul.f32 1.0, %v1894
          %v1896 = vtanh.pop %v1856
          %v1897 = vxor.u32 %v1857, 2147483648
          %v1898 = vmul.f32 %v1897, 1.442695
          %v1899 = vpow.pop %v1898
          %v1900 = vadd.f32 %v1899, 1.0
          %v1901 = vrcp.pop %v1900
          %v1902 = vmul.f32 %v1900, %v1901
          %v1903 = vsub.f32 1.0, %v1902
          %v1904 = vmul.f32 %v1901, %v1903
          %v1905 = vadd.f32 %v1901, %v1904
          %vm1906 = vweird.f32 %v1900
          %vm1907 = vweird.f32 %v1901
          %vm1908 = vmor %vm1906, %vm1907
          %v1909 = vsel %vm1908, %v1901, %v1905
          %v1910 = vand.u32 2147483647, %v1900
          %vm1911 = vcmp.eq.f32.partialorder %v1910, 8.507059e+37
          %v1912 = vand.u32 %v1900, 2147483648
          %v1913 = vor.u32 1.1754944e-38, %v1912
          %v1914 = vsel %vm1911, %v1913, %v1909
          %v1915 = vmul.f32 1.0, %v1914
          %v1916 = vmul.f32 %v1895, %v1793
          %v1917 = vmul.f32 %v1876, %v1896
          %v1918 = vadd.f32 %v1916, %v1917
          %v1919 = vtanh.pop %v1918
          %v1920 = vmul.f32 %v1915, %v1919
          %v1921 = vpack.c.bf16 %v1920, %v1920
          %1922 = vst [vmem:[%s434 + $0x18] sm:$0xf] %v1921
          %v1923 = vld [vmem:[#allocation2 + $0xe0] sm:$0xff]
          %v1924 = vld [vmem:[#allocation2 + $0xe8] sm:$0xff]
          %v1925 = vld [vmem:[#allocation2 + $0xf0] sm:$0xff]
          %v1926 = vld [vmem:[#allocation2 + $0xf8] sm:$0xff]
          %1927 = vmatpush.bf16.msra.mxu0 %v1016
          %1928 = vmatpush.bf16.msra.mxu0 %v1012
          %1929 = vmatpush.bf16.msra.mxu0 %v1008
          %1930 = vmatpush.bf16.msra.mxu0 %v1004
          %1931 = vmatpush.bf16.msra.mxu0 %v1000
          %1932 = vmatpush.bf16.msra.mxu0 %v996
          %1933 = vmatpush.bf16.msra.mxu0 %v992
          %1934 = vmatpush.bf16.msra.mxu0 %v988
          %1935 = vmatmul.bf16.gmra.mxu0 %v1921
          %v1936 = vpop.f32.mrf.mxu0
          %v1937 = vadd.f32 0.0, %v1936
          %v1938 = vpop.f32.mrf.mxu0
          %1939 = vdwg.mxu0
          %1940 = vmatpush.bf16.msra.mxu0 %v1017
          %1941 = vmatpush.bf16.msra.mxu0 %v1013
          %1942 = vmatpush.bf16.msra.mxu0 %v1009
          %1943 = vmatpush.bf16.msra.mxu0 %v1005
          %1944 = vmatpush.bf16.msra.mxu0 %v1001
          %1945 = vmatpush.bf16.msra.mxu0 %v997
          %1946 = vmatpush.bf16.msra.mxu0 %v993
          %1947 = vmatpush.bf16.msra.mxu0 %v989
          %1948 = vmatmul.bf16.gmra.mxu0 %v1921
          %v1949 = vpop.f32.mrf.mxu0
          %v1950 = vadd.f32 0.0, %v1949
          %v1951 = vpop.f32.mrf.mxu0
          %1952 = vdwg.mxu0
          %1953 = vmatpush.bf16.msra.mxu0 %v1018
          %1954 = vmatpush.bf16.msra.mxu0 %v1014
          %1955 = vmatpush.bf16.msra.mxu0 %v1010
          %1956 = vmatpush.bf16.msra.mxu0 %v1006
          %1957 = vmatpush.bf16.msra.mxu0 %v1002
          %1958 = vmatpush.bf16.msra.mxu0 %v998
          %1959 = vmatpush.bf16.msra.mxu0 %v994
          %1960 = vmatpush.bf16.msra.mxu0 %v990
          %1961 = vmatmul.bf16.gmra.mxu0 %v1921
          %v1962 = vpop.f32.mrf.mxu0
          %v1963 = vadd.f32 0.0, %v1962
          %v1964 = vpop.f32.mrf.mxu0
          %1965 = vdwg.mxu0
          %1966 = vmatpush.bf16.msra.mxu0 %v1019
          %1967 = vmatpush.bf16.msra.mxu0 %v1015
          %1968 = vmatpush.bf16.msra.mxu0 %v1011
          %1969 = vmatpush.bf16.msra.mxu0 %v1007
          %1970 = vmatpush.bf16.msra.mxu0 %v1003
          %1971 = vmatpush.bf16.msra.mxu0 %v999
          %1972 = vmatpush.bf16.msra.mxu0 %v995
          %1973 = vmatpush.bf16.msra.mxu0 %v991
          %1974 = vmatmul.bf16.gmra.mxu0 %v1921
          %v1975 = vpop.f32.mrf.mxu0
          %v1976 = vadd.f32 0.0, %v1975
          %v1977 = vpop.f32.mrf.mxu0
          %1978 = vdwg.mxu0
          %v1979 = vadd.f32 %v1923, %v1937
          %v1980 = vadd.f32 %v1924, %v1950
          %v1981 = vadd.f32 %v1925, %v1963
          %v1982 = vadd.f32 %v1926, %v1976
          %v1983 = vxor.u32 %v1979, 2147483648
          %v1984 = vmul.f32 %v1983, 1.442695
          %v1985 = vpow.pop %v1984
          %v1986 = vadd.f32 %v1985, 1.0
          %v1987 = vrcp.pop %v1986
          %v1988 = vmul.f32 %v1986, %v1987
          %v1989 = vsub.f32 1.0, %v1988
          %v1990 = vmul.f32 %v1987, %v1989
          %v1991 = vadd.f32 %v1987, %v1990
          %vm1992 = vweird.f32 %v1986
          %vm1993 = vweird.f32 %v1987
          %vm1994 = vmor %vm1992, %vm1993
          %v1995 = vsel %vm1994, %v1987, %v1991
          %v1996 = vand.u32 2147483647, %v1986
          %vm1997 = vcmp.eq.f32.partialorder %v1996, 8.507059e+37
          %v1998 = vand.u32 %v1986, 2147483648
          %v1999 = vor.u32 1.1754944e-38, %v1998
          %v2000 = vsel %vm1997, %v1999, %v1995
          %v2001 = vmul.f32 1.0, %v2000
          %v2002 = vxor.u32 %v1980, 2147483648
          %v2003 = vmul.f32 %v2002, 1.442695
          %v2004 = vpow.pop %v2003
          %v2005 = vadd.f32 %v2004, 1.0
          %v2006 = vrcp.pop %v2005
          %v2007 = vmul.f32 %v2005, %v2006
          %v2008 = vsub.f32 1.0, %v2007
          %v2009 = vmul.f32 %v2006, %v2008
          %v2010 = vadd.f32 %v2006, %v2009
          %vm2011 = vweird.f32 %v2005
          %vm2012 = vweird.f32 %v2006
          %vm2013 = vmor %vm2011, %vm2012
          %v2014 = vsel %vm2013, %v2006, %v2010
          %v2015 = vand.u32 2147483647, %v2005
          %vm2016 = vcmp.eq.f32.partialorder %v2015, 8.507059e+37
          %v2017 = vand.u32 %v2005, 2147483648
          %v2018 = vor.u32 1.1754944e-38, %v2017
          %v2019 = vsel %vm2016, %v2018, %v2014
          %v2020 = vmul.f32 1.0, %v2019
          %v2021 = vtanh.pop %v1981
          %v2022 = vxor.u32 %v1982, 2147483648
          %v2023 = vmul.f32 %v2022, 1.442695
          %v2024 = vpow.pop %v2023
          %v2025 = vadd.f32 %v2024, 1.0
          %v2026 = vrcp.pop %v2025
          %v2027 = vmul.f32 %v2025, %v2026
          %v2028 = vsub.f32 1.0, %v2027
          %v2029 = vmul.f32 %v2026, %v2028
          %v2030 = vadd.f32 %v2026, %v2029
          %vm2031 = vweird.f32 %v2025
          %vm2032 = vweird.f32 %v2026
          %vm2033 = vmor %vm2031, %vm2032
          %v2034 = vsel %vm2033, %v2026, %v2030
          %v2035 = vand.u32 2147483647, %v2025
          %vm2036 = vcmp.eq.f32.partialorder %v2035, 8.507059e+37
          %v2037 = vand.u32 %v2025, 2147483648
          %v2038 = vor.u32 1.1754944e-38, %v2037
          %v2039 = vsel %vm2036, %v2038, %v2034
          %v2040 = vmul.f32 1.0, %v2039
          %v2041 = vmul.f32 %v2020, %v1918
          %v2042 = vmul.f32 %v2001, %v2021
          %v2043 = vadd.f32 %v2041, %v2042
          %v2044 = vtanh.pop %v2043
          %v2045 = vmul.f32 %v2040, %v2044
          %v2046 = vpack.c.bf16 %v2045, %v2045
          %2047 = vst [vmem:[%s434 + $0x1c] sm:$0xf] %v2046
          %2048 = vst [vmem:[%s441] sm:$0xff] %v2045
          %2049 = vst [vmem:[%s448] sm:$0xff] %v2043
        $region60: #{_lstm_layer_pallas.1} parent=35 // pred_fallthru
          _
        %p2050 = scmp.eq.s32.totalorder %s37, 1
        // Predicated region
        $region61: #{_lstm_layer_pallas.1} parent=35 // pred_check
          %p2051 = pneg %p2050
        $region62: #{_lstm_layer_pallas.1} parent=35 // pred_check_branch
          %2053 = sbr.rel (%p2051) target = $region64
        $region63: #{_lstm_layer_pallas.1} parent=35 // pred_region
          %v2054 = vld [vmem:[%s441] sm:$0xff]
          %v2055 = vld [vmem:[%s448] sm:$0xff]
          %v2056 = vld [vmem:[#allocation2 + $0xe0] sm:$0xff]
          %v2057 = vld [vmem:[#allocation2 + $0xe8] sm:$0xff]
          %v2058 = vld [vmem:[#allocation2 + $0xf0] sm:$0xff]
          %v2059 = vld [vmem:[#allocation2 + $0xf8] sm:$0xff]
          %v2060 = vpack.c.bf16 %v2054, %v2054
          %v2093 = vunpack.c.l.b16 %v849
          %v2094 = vunpack.c.h.b16 %v849
          %v2095 = vunpack.c.l.b16 %v850
          %v2096 = vunpack.c.h.b16 %v850
          %v2097 = vunpack.c.l.b16 %v851
          %v2098 = vunpack.c.h.b16 %v851
          %v2099 = vunpack.c.l.b16 %v852
          %v2100 = vunpack.c.h.b16 %v852
          %v2101 = vunpack.c.l.b16 %v853
          %v2102 = vunpack.c.h.b16 %v853
          %v2103 = vunpack.c.l.b16 %v854
          %v2104 = vunpack.c.h.b16 %v854
          %v2105 = vunpack.c.l.b16 %v855
          %v2106 = vunpack.c.h.b16 %v855
          %v2107 = vunpack.c.l.b16 %v856
          %v2108 = vunpack.c.h.b16 %v856
          %v2109 = vunpack.c.l.b16 %v857
          %v2110 = vunpack.c.h.b16 %v857
          %v2111 = vunpack.c.l.b16 %v858
          %v2112 = vunpack.c.h.b16 %v858
          %v2113 = vunpack.c.l.b16 %v859
          %v2114 = vunpack.c.h.b16 %v859
          %v2115 = vunpack.c.l.b16 %v860
          %v2116 = vunpack.c.h.b16 %v860
          %v2117 = vunpack.c.l.b16 %v861
          %v2118 = vunpack.c.h.b16 %v861
          %v2119 = vunpack.c.l.b16 %v862
          %v2120 = vunpack.c.h.b16 %v862
          %v2121 = vunpack.c.l.b16 %v863
          %v2122 = vunpack.c.h.b16 %v863
          %v2123 = vunpack.c.l.b16 %v864
          %v2124 = vunpack.c.h.b16 %v864
          %v2125 = vunpack.c.l.b16 %v865
          %v2126 = vunpack.c.h.b16 %v865
          %v2127 = vunpack.c.l.b16 %v866
          %v2128 = vunpack.c.h.b16 %v866
          %v2129 = vunpack.c.l.b16 %v867
          %v2130 = vunpack.c.h.b16 %v867
          %v2131 = vunpack.c.l.b16 %v868
          %v2132 = vunpack.c.h.b16 %v868
          %v2133 = vunpack.c.l.b16 %v869
          %v2134 = vunpack.c.h.b16 %v869
          %v2135 = vunpack.c.l.b16 %v870
          %v2136 = vunpack.c.h.b16 %v870
          %v2137 = vunpack.c.l.b16 %v871
          %v2138 = vunpack.c.h.b16 %v871
          %v2139 = vunpack.c.l.b16 %v872
          %v2140 = vunpack.c.h.b16 %v872
          %v2141 = vunpack.c.l.b16 %v873
          %v2142 = vunpack.c.h.b16 %v873
          %v2143 = vunpack.c.l.b16 %v874
          %v2144 = vunpack.c.h.b16 %v874
          %v2145 = vunpack.c.l.b16 %v875
          %v2146 = vunpack.c.h.b16 %v875
          %v2147 = vunpack.c.l.b16 %v876
          %v2148 = vunpack.c.h.b16 %v876
          %v2149 = vunpack.c.l.b16 %v877
          %v2150 = vunpack.c.h.b16 %v877
          %v2151 = vunpack.c.l.b16 %v878
          %v2152 = vunpack.c.h.b16 %v878
          %v2153 = vunpack.c.l.b16 %v879
          %v2154 = vunpack.c.h.b16 %v879
          %v2155 = vunpack.c.l.b16 %v880
          %v2156 = vunpack.c.h.b16 %v880
          %v2157 = vpack.c.b16 %v2097, %v2093
          %v2158 = vpack.c.b16 %v2098, %v2094
          %v2159 = vpack.c.b16 %v2099, %v2095
          %v2160 = vpack.c.b16 %v2100, %v2096
          %v2161 = vpack.c.b16 %v2105, %v2101
          %v2162 = vpack.c.b16 %v2106, %v2102
          %v2163 = vpack.c.b16 %v2107, %v2103
          %v2164 = vpack.c.b16 %v2108, %v2104
          %v2165 = vpack.c.b16 %v2113, %v2109
          %v2166 = vpack.c.b16 %v2114, %v2110
          %v2167 = vpack.c.b16 %v2115, %v2111
          %v2168 = vpack.c.b16 %v2116, %v2112
          %v2169 = vpack.c.b16 %v2121, %v2117
          %v2170 = vpack.c.b16 %v2122, %v2118
          %v2171 = vpack.c.b16 %v2123, %v2119
          %v2172 = vpack.c.b16 %v2124, %v2120
          %v2173 = vpack.c.b16 %v2129, %v2125
          %v2174 = vpack.c.b16 %v2130, %v2126
          %v2175 = vpack.c.b16 %v2131, %v2127
          %v2176 = vpack.c.b16 %v2132, %v2128
          %v2177 = vpack.c.b16 %v2137, %v2133
          %v2178 = vpack.c.b16 %v2138, %v2134
          %v2179 = vpack.c.b16 %v2139, %v2135
          %v2180 = vpack.c.b16 %v2140, %v2136
          %v2181 = vpack.c.b16 %v2145, %v2141
          %v2182 = vpack.c.b16 %v2146, %v2142
          %v2183 = vpack.c.b16 %v2147, %v2143
          %v2184 = vpack.c.b16 %v2148, %v2144
          %v2185 = vpack.c.b16 %v2153, %v2149
          %v2186 = vpack.c.b16 %v2154, %v2150
          %v2187 = vpack.c.b16 %v2155, %v2151
          %v2188 = vpack.c.b16 %v2156, %v2152
          %2221 = vmatpush.bf16.msra.mxu0 %v2185
          %2222 = vmatpush.bf16.msra.mxu0 %v2181
          %2223 = vmatpush.bf16.msra.mxu0 %v2177
          %2224 = vmatpush.bf16.msra.mxu0 %v2173
          %2225 = vmatpush.bf16.msra.mxu0 %v2169
          %2226 = vmatpush.bf16.msra.mxu0 %v2165
          %2227 = vmatpush.bf16.msra.mxu0 %v2161
          %2228 = vmatpush.bf16.msra.mxu0 %v2157
          %2229 = vmatmul.bf16.gmra.mxu0 %v2060
          %v2230 = vpop.f32.mrf.mxu0
          %v2231 = vadd.f32 0.0, %v2230
          %v2232 = vpop.f32.mrf.mxu0
          %2233 = vdwg.mxu0
          %2234 = vmatpush.bf16.msra.mxu0 %v2186
          %2235 = vmatpush.bf16.msra.mxu0 %v2182
          %2236 = vmatpush.bf16.msra.mxu0 %v2178
          %2237 = vmatpush.bf16.msra.mxu0 %v2174
          %2238 = vmatpush.bf16.msra.mxu0 %v2170
          %2239 = vmatpush.bf16.msra.mxu0 %v2166
          %2240 = vmatpush.bf16.msra.mxu0 %v2162
          %2241 = vmatpush.bf16.msra.mxu0 %v2158
          %2242 = vmatmul.bf16.gmra.mxu0 %v2060
          %v2243 = vpop.f32.mrf.mxu0
          %v2244 = vadd.f32 0.0, %v2243
          %v2245 = vpop.f32.mrf.mxu0
          %2246 = vdwg.mxu0
          %2247 = vmatpush.bf16.msra.mxu0 %v2187
          %2248 = vmatpush.bf16.msra.mxu0 %v2183
          %2249 = vmatpush.bf16.msra.mxu0 %v2179
          %2250 = vmatpush.bf16.msra.mxu0 %v2175
          %2251 = vmatpush.bf16.msra.mxu0 %v2171
          %2252 = vmatpush.bf16.msra.mxu0 %v2167
          %2253 = vmatpush.bf16.msra.mxu0 %v2163
          %2254 = vmatpush.bf16.msra.mxu0 %v2159
          %2255 = vmatmul.bf16.gmra.mxu0 %v2060
          %v2256 = vpop.f32.mrf.mxu0
          %v2257 = vadd.f32 0.0, %v2256
          %v2258 = vpop.f32.mrf.mxu0
          %2259 = vdwg.mxu0
          %2260 = vmatpush.bf16.msra.mxu0 %v2188
          %2261 = vmatpush.bf16.msra.mxu0 %v2184
          %2262 = vmatpush.bf16.msra.mxu0 %v2180
          %2263 = vmatpush.bf16.msra.mxu0 %v2176
          %2264 = vmatpush.bf16.msra.mxu0 %v2172
          %2265 = vmatpush.bf16.msra.mxu0 %v2168
          %2266 = vmatpush.bf16.msra.mxu0 %v2164
          %2267 = vmatpush.bf16.msra.mxu0 %v2160
          %2268 = vmatmul.bf16.gmra.mxu0 %v2060
          %v2269 = vpop.f32.mrf.mxu0
          %v2270 = vadd.f32 0.0, %v2269
          %v2271 = vpop.f32.mrf.mxu0
          %2272 = vdwg.mxu0
          %v2273 = vadd.f32 %v2056, %v2231
          %v2274 = vadd.f32 %v2057, %v2244
          %v2275 = vadd.f32 %v2058, %v2257
          %v2276 = vadd.f32 %v2059, %v2270
          %v2277 = vxor.u32 %v2273, 2147483648
          %v2278 = vmul.f32 %v2277, 1.442695
          %v2279 = vpow.pop %v2278
          %v2280 = vadd.f32 %v2279, 1.0
          %v2281 = vrcp.pop %v2280
          %v2282 = vmul.f32 %v2280, %v2281
          %v2283 = vsub.f32 1.0, %v2282
          %v2284 = vmul.f32 %v2281, %v2283
          %v2285 = vadd.f32 %v2281, %v2284
          %vm2286 = vweird.f32 %v2280
          %vm2287 = vweird.f32 %v2281
          %vm2288 = vmor %vm2286, %vm2287
          %v2289 = vsel %vm2288, %v2281, %v2285
          %v2290 = vand.u32 2147483647, %v2280
          %vm2291 = vcmp.eq.f32.partialorder %v2290, 8.507059e+37
          %v2292 = vand.u32 %v2280, 2147483648
          %v2293 = vor.u32 1.1754944e-38, %v2292
          %v2294 = vsel %vm2291, %v2293, %v2289
          %v2295 = vmul.f32 1.0, %v2294
          %v2296 = vxor.u32 %v2274, 2147483648
          %v2297 = vmul.f32 %v2296, 1.442695
          %v2298 = vpow.pop %v2297
          %v2299 = vadd.f32 %v2298, 1.0
          %v2300 = vrcp.pop %v2299
          %v2301 = vmul.f32 %v2299, %v2300
          %v2302 = vsub.f32 1.0, %v2301
          %v2303 = vmul.f32 %v2300, %v2302
          %v2304 = vadd.f32 %v2300, %v2303
          %vm2305 = vweird.f32 %v2299
          %vm2306 = vweird.f32 %v2300
          %vm2307 = vmor %vm2305, %vm2306
          %v2308 = vsel %vm2307, %v2300, %v2304
          %v2309 = vand.u32 2147483647, %v2299
          %vm2310 = vcmp.eq.f32.partialorder %v2309, 8.507059e+37
          %v2311 = vand.u32 %v2299, 2147483648
          %v2312 = vor.u32 1.1754944e-38, %v2311
          %v2313 = vsel %vm2310, %v2312, %v2308
          %v2314 = vmul.f32 1.0, %v2313
          %v2315 = vtanh.pop %v2275
          %v2316 = vxor.u32 %v2276, 2147483648
          %v2317 = vmul.f32 %v2316, 1.442695
          %v2318 = vpow.pop %v2317
          %v2319 = vadd.f32 %v2318, 1.0
          %v2320 = vrcp.pop %v2319
          %v2321 = vmul.f32 %v2319, %v2320
          %v2322 = vsub.f32 1.0, %v2321
          %v2323 = vmul.f32 %v2320, %v2322
          %v2324 = vadd.f32 %v2320, %v2323
          %vm2325 = vweird.f32 %v2319
          %vm2326 = vweird.f32 %v2320
          %vm2327 = vmor %vm2325, %vm2326
          %v2328 = vsel %vm2327, %v2320, %v2324
          %v2329 = vand.u32 2147483647, %v2319
          %vm2330 = vcmp.eq.f32.partialorder %v2329, 8.507059e+37
          %v2331 = vand.u32 %v2319, 2147483648
          %v2332 = vor.u32 1.1754944e-38, %v2331
          %v2333 = vsel %vm2330, %v2332, %v2328
          %v2334 = vmul.f32 1.0, %v2333
          %v2335 = vmul.f32 %v2314, %v2055
          %v2336 = vmul.f32 %v2295, %v2315
          %v2337 = vadd.f32 %v2335, %v2336
          %v2338 = vtanh.pop %v2337
          %v2339 = vmul.f32 %v2334, %v2338
          %v2340 = vpack.c.bf16 %v2339, %v2339
          %2341 = vst [vmem:[%s434 + $0x1c] sm:$0xf] %v2340
          %v2342 = vld [vmem:[#allocation2 + $0xc0] sm:$0xff]
          %v2343 = vld [vmem:[#allocation2 + $0xc8] sm:$0xff]
          %v2344 = vld [vmem:[#allocation2 + $0xd0] sm:$0xff]
          %v2345 = vld [vmem:[#allocation2 + $0xd8] sm:$0xff]
          %2346 = vmatpush.bf16.msra.mxu0 %v2185
          %2347 = vmatpush.bf16.msra.mxu0 %v2181
          %2348 = vmatpush.bf16.msra.mxu0 %v2177
          %2349 = vmatpush.bf16.msra.mxu0 %v2173
          %2350 = vmatpush.bf16.msra.mxu0 %v2169
          %2351 = vmatpush.bf16.msra.mxu0 %v2165
          %2352 = vmatpush.bf16.msra.mxu0 %v2161
          %2353 = vmatpush.bf16.msra.mxu0 %v2157
          %2354 = vmatmul.bf16.gmra.mxu0 %v2340
          %v2355 = vpop.f32.mrf.mxu0
          %v2356 = vadd.f32 0.0, %v2355
          %v2357 = vpop.f32.mrf.mxu0
          %2358 = vdwg.mxu0
          %2359 = vmatpush.bf16.msra.mxu0 %v2186
          %2360 = vmatpush.bf16.msra.mxu0 %v2182
          %2361 = vmatpush.bf16.msra.mxu0 %v2178
          %2362 = vmatpush.bf16.msra.mxu0 %v2174
          %2363 = vmatpush.bf16.msra.mxu0 %v2170
          %2364 = vmatpush.bf16.msra.mxu0 %v2166
          %2365 = vmatpush.bf16.msra.mxu0 %v2162
          %2366 = vmatpush.bf16.msra.mxu0 %v2158
          %2367 = vmatmul.bf16.gmra.mxu0 %v2340
          %v2368 = vpop.f32.mrf.mxu0
          %v2369 = vadd.f32 0.0, %v2368
          %v2370 = vpop.f32.mrf.mxu0
          %2371 = vdwg.mxu0
          %2372 = vmatpush.bf16.msra.mxu0 %v2187
          %2373 = vmatpush.bf16.msra.mxu0 %v2183
          %2374 = vmatpush.bf16.msra.mxu0 %v2179
          %2375 = vmatpush.bf16.msra.mxu0 %v2175
          %2376 = vmatpush.bf16.msra.mxu0 %v2171
          %2377 = vmatpush.bf16.msra.mxu0 %v2167
          %2378 = vmatpush.bf16.msra.mxu0 %v2163
          %2379 = vmatpush.bf16.msra.mxu0 %v2159
          %2380 = vmatmul.bf16.gmra.mxu0 %v2340
          %v2381 = vpop.f32.mrf.mxu0
          %v2382 = vadd.f32 0.0, %v2381
          %v2383 = vpop.f32.mrf.mxu0
          %2384 = vdwg.mxu0
          %2385 = vmatpush.bf16.msra.mxu0 %v2188
          %2386 = vmatpush.bf16.msra.mxu0 %v2184
          %2387 = vmatpush.bf16.msra.mxu0 %v2180
          %2388 = vmatpush.bf16.msra.mxu0 %v2176
          %2389 = vmatpush.bf16.msra.mxu0 %v2172
          %2390 = vmatpush.bf16.msra.mxu0 %v2168
          %2391 = vmatpush.bf16.msra.mxu0 %v2164
          %2392 = vmatpush.bf16.msra.mxu0 %v2160
          %2393 = vmatmul.bf16.gmra.mxu0 %v2340
          %v2394 = vpop.f32.mrf.mxu0
          %v2395 = vadd.f32 0.0, %v2394
          %v2396 = vpop.f32.mrf.mxu0
          %2397 = vdwg.mxu0
          %v2398 = vadd.f32 %v2342, %v2356
          %v2399 = vadd.f32 %v2343, %v2369
          %v2400 = vadd.f32 %v2344, %v2382
          %v2401 = vadd.f32 %v2345, %v2395
          %v2402 = vxor.u32 %v2398, 2147483648
          %v2403 = vmul.f32 %v2402, 1.442695
          %v2404 = vpow.pop %v2403
          %v2405 = vadd.f32 %v2404, 1.0
          %v2406 = vrcp.pop %v2405
          %v2407 = vmul.f32 %v2405, %v2406
          %v2408 = vsub.f32 1.0, %v2407
          %v2409 = vmul.f32 %v2406, %v2408
          %v2410 = vadd.f32 %v2406, %v2409
          %vm2411 = vweird.f32 %v2405
          %vm2412 = vweird.f32 %v2406
          %vm2413 = vmor %vm2411, %vm2412
          %v2414 = vsel %vm2413, %v2406, %v2410
          %v2415 = vand.u32 2147483647, %v2405
          %vm2416 = vcmp.eq.f32.partialorder %v2415, 8.507059e+37
          %v2417 = vand.u32 %v2405, 2147483648
          %v2418 = vor.u32 1.1754944e-38, %v2417
          %v2419 = vsel %vm2416, %v2418, %v2414
          %v2420 = vmul.f32 1.0, %v2419
          %v2421 = vxor.u32 %v2399, 2147483648
          %v2422 = vmul.f32 %v2421, 1.442695
          %v2423 = vpow.pop %v2422
          %v2424 = vadd.f32 %v2423, 1.0
          %v2425 = vrcp.pop %v2424
          %v2426 = vmul.f32 %v2424, %v2425
          %v2427 = vsub.f32 1.0, %v2426
          %v2428 = vmul.f32 %v2425, %v2427
          %v2429 = vadd.f32 %v2425, %v2428
          %vm2430 = vweird.f32 %v2424
          %vm2431 = vweird.f32 %v2425
          %vm2432 = vmor %vm2430, %vm2431
          %v2433 = vsel %vm2432, %v2425, %v2429
          %v2434 = vand.u32 2147483647, %v2424
          %vm2435 = vcmp.eq.f32.partialorder %v2434, 8.507059e+37
          %v2436 = vand.u32 %v2424, 2147483648
          %v2437 = vor.u32 1.1754944e-38, %v2436
          %v2438 = vsel %vm2435, %v2437, %v2433
          %v2439 = vmul.f32 1.0, %v2438
          %v2440 = vtanh.pop %v2400
          %v2441 = vxor.u32 %v2401, 2147483648
          %v2442 = vmul.f32 %v2441, 1.442695
          %v2443 = vpow.pop %v2442
          %v2444 = vadd.f32 %v2443, 1.0
          %v2445 = vrcp.pop %v2444
          %v2446 = vmul.f32 %v2444, %v2445
          %v2447 = vsub.f32 1.0, %v2446
          %v2448 = vmul.f32 %v2445, %v2447
          %v2449 = vadd.f32 %v2445, %v2448
          %vm2450 = vweird.f32 %v2444
          %vm2451 = vweird.f32 %v2445
          %vm2452 = vmor %vm2450, %vm2451
          %v2453 = vsel %vm2452, %v2445, %v2449
          %v2454 = vand.u32 2147483647, %v2444
          %vm2455 = vcmp.eq.f32.partialorder %v2454, 8.507059e+37
          %v2456 = vand.u32 %v2444, 2147483648
          %v2457 = vor.u32 1.1754944e-38, %v2456
          %v2458 = vsel %vm2455, %v2457, %v2453
          %v2459 = vmul.f32 1.0, %v2458
          %v2460 = vmul.f32 %v2439, %v2337
          %v2461 = vmul.f32 %v2420, %v2440
          %v2462 = vadd.f32 %v2460, %v2461
          %v2463 = vtanh.pop %v2462
          %v2464 = vmul.f32 %v2459, %v2463
          %v2465 = vpack.c.bf16 %v2464, %v2464
          %2466 = vst [vmem:[%s434 + $0x18] sm:$0xf] %v2465
          %v2467 = vld [vmem:[#allocation2 + $0xa0] sm:$0xff]
          %v2468 = vld [vmem:[#allocation2 + $0xa8] sm:$0xff]
          %v2469 = vld [vmem:[#allocation2 + $0xb0] sm:$0xff]
          %v2470 = vld [vmem:[#allocation2 + $0xb8] sm:$0xff]
          %2471 = vmatpush.bf16.msra.mxu0 %v2185
          %2472 = vmatpush.bf16.msra.mxu0 %v2181
          %2473 = vmatpush.bf16.msra.mxu0 %v2177
          %2474 = vmatpush.bf16.msra.mxu0 %v2173
          %2475 = vmatpush.bf16.msra.mxu0 %v2169
          %2476 = vmatpush.bf16.msra.mxu0 %v2165
          %2477 = vmatpush.bf16.msra.mxu0 %v2161
          %2478 = vmatpush.bf16.msra.mxu0 %v2157
          %2479 = vmatmul.bf16.gmra.mxu0 %v2465
          %v2480 = vpop.f32.mrf.mxu0
          %v2481 = vadd.f32 0.0, %v2480
          %v2482 = vpop.f32.mrf.mxu0
          %2483 = vdwg.mxu0
          %2484 = vmatpush.bf16.msra.mxu0 %v2186
          %2485 = vmatpush.bf16.msra.mxu0 %v2182
          %2486 = vmatpush.bf16.msra.mxu0 %v2178
          %2487 = vmatpush.bf16.msra.mxu0 %v2174
          %2488 = vmatpush.bf16.msra.mxu0 %v2170
          %2489 = vmatpush.bf16.msra.mxu0 %v2166
          %2490 = vmatpush.bf16.msra.mxu0 %v2162
          %2491 = vmatpush.bf16.msra.mxu0 %v2158
          %2492 = vmatmul.bf16.gmra.mxu0 %v2465
          %v2493 = vpop.f32.mrf.mxu0
          %v2494 = vadd.f32 0.0, %v2493
          %v2495 = vpop.f32.mrf.mxu0
          %2496 = vdwg.mxu0
          %2497 = vmatpush.bf16.msra.mxu0 %v2187
          %2498 = vmatpush.bf16.msra.mxu0 %v2183
          %2499 = vmatpush.bf16.msra.mxu0 %v2179
          %2500 = vmatpush.bf16.msra.mxu0 %v2175
          %2501 = vmatpush.bf16.msra.mxu0 %v2171
          %2502 = vmatpush.bf16.msra.mxu0 %v2167
          %2503 = vmatpush.bf16.msra.mxu0 %v2163
          %2504 = vmatpush.bf16.msra.mxu0 %v2159
          %2505 = vmatmul.bf16.gmra.mxu0 %v2465
          %v2506 = vpop.f32.mrf.mxu0
          %v2507 = vadd.f32 0.0, %v2506
          %v2508 = vpop.f32.mrf.mxu0
          %2509 = vdwg.mxu0
          %2510 = vmatpush.bf16.msra.mxu0 %v2188
          %2511 = vmatpush.bf16.msra.mxu0 %v2184
          %2512 = vmatpush.bf16.msra.mxu0 %v2180
          %2513 = vmatpush.bf16.msra.mxu0 %v2176
          %2514 = vmatpush.bf16.msra.mxu0 %v2172
          %2515 = vmatpush.bf16.msra.mxu0 %v2168
          %2516 = vmatpush.bf16.msra.mxu0 %v2164
          %2517 = vmatpush.bf16.msra.mxu0 %v2160
          %2518 = vmatmul.bf16.gmra.mxu0 %v2465
          %v2519 = vpop.f32.mrf.mxu0
          %v2520 = vadd.f32 0.0, %v2519
          %v2521 = vpop.f32.mrf.mxu0
          %2522 = vdwg.mxu0
          %v2523 = vadd.f32 %v2467, %v2481
          %v2524 = vadd.f32 %v2468, %v2494
          %v2525 = vadd.f32 %v2469, %v2507
          %v2526 = vadd.f32 %v2470, %v2520
          %v2527 = vxor.u32 %v2523, 2147483648
          %v2528 = vmul.f32 %v2527, 1.442695
          %v2529 = vpow.pop %v2528
          %v2530 = vadd.f32 %v2529, 1.0
          %v2531 = vrcp.pop %v2530
          %v2532 = vmul.f32 %v2530, %v2531
          %v2533 = vsub.f32 1.0, %v2532
          %v2534 = vmul.f32 %v2531, %v2533
          %v2535 = vadd.f32 %v2531, %v2534
          %vm2536 = vweird.f32 %v2530
          %vm2537 = vweird.f32 %v2531
          %vm2538 = vmor %vm2536, %vm2537
          %v2539 = vsel %vm2538, %v2531, %v2535
          %v2540 = vand.u32 2147483647, %v2530
          %vm2541 = vcmp.eq.f32.partialorder %v2540, 8.507059e+37
          %v2542 = vand.u32 %v2530, 2147483648
          %v2543 = vor.u32 1.1754944e-38, %v2542
          %v2544 = vsel %vm2541, %v2543, %v2539
          %v2545 = vmul.f32 1.0, %v2544
          %v2546 = vxor.u32 %v2524, 2147483648
          %v2547 = vmul.f32 %v2546, 1.442695
          %v2548 = vpow.pop %v2547
          %v2549 = vadd.f32 %v2548, 1.0
          %v2550 = vrcp.pop %v2549
          %v2551 = vmul.f32 %v2549, %v2550
          %v2552 = vsub.f32 1.0, %v2551
          %v2553 = vmul.f32 %v2550, %v2552
          %v2554 = vadd.f32 %v2550, %v2553
          %vm2555 = vweird.f32 %v2549
          %vm2556 = vweird.f32 %v2550
          %vm2557 = vmor %vm2555, %vm2556
          %v2558 = vsel %vm2557, %v2550, %v2554
          %v2559 = vand.u32 2147483647, %v2549
          %vm2560 = vcmp.eq.f32.partialorder %v2559, 8.507059e+37
          %v2561 = vand.u32 %v2549, 2147483648
          %v2562 = vor.u32 1.1754944e-38, %v2561
          %v2563 = vsel %vm2560, %v2562, %v2558
          %v2564 = vmul.f32 1.0, %v2563
          %v2565 = vtanh.pop %v2525
          %v2566 = vxor.u32 %v2526, 2147483648
          %v2567 = vmul.f32 %v2566, 1.442695
          %v2568 = vpow.pop %v2567
          %v2569 = vadd.f32 %v2568, 1.0
          %v2570 = vrcp.pop %v2569
          %v2571 = vmul.f32 %v2569, %v2570
          %v2572 = vsub.f32 1.0, %v2571
          %v2573 = vmul.f32 %v2570, %v2572
          %v2574 = vadd.f32 %v2570, %v2573
          %vm2575 = vweird.f32 %v2569
          %vm2576 = vweird.f32 %v2570
          %vm2577 = vmor %vm2575, %vm2576
          %v2578 = vsel %vm2577, %v2570, %v2574
          %v2579 = vand.u32 2147483647, %v2569
          %vm2580 = vcmp.eq.f32.partialorder %v2579, 8.507059e+37
          %v2581 = vand.u32 %v2569, 2147483648
          %v2582 = vor.u32 1.1754944e-38, %v2581
          %v2583 = vsel %vm2580, %v2582, %v2578
          %v2584 = vmul.f32 1.0, %v2583
          %v2585 = vmul.f32 %v2564, %v2462
          %v2586 = vmul.f32 %v2545, %v2565
          %v2587 = vadd.f32 %v2585, %v2586
          %v2588 = vtanh.pop %v2587
          %v2589 = vmul.f32 %v2584, %v2588
          %v2590 = vpack.c.bf16 %v2589, %v2589
          %2591 = vst [vmem:[%s434 + $0x14] sm:$0xf] %v2590
          %v2592 = vld [vmem:[#allocation2 + $0x80] sm:$0xff]
          %v2593 = vld [vmem:[#allocation2 + $0x88] sm:$0xff]
          %v2594 = vld [vmem:[#allocation2 + $0x90] sm:$0xff]
          %v2595 = vld [vmem:[#allocation2 + $0x98] sm:$0xff]
          %2596 = vmatpush.bf16.msra.mxu0 %v2185
          %2597 = vmatpush.bf16.msra.mxu0 %v2181
          %2598 = vmatpush.bf16.msra.mxu0 %v2177
          %2599 = vmatpush.bf16.msra.mxu0 %v2173
          %2600 = vmatpush.bf16.msra.mxu0 %v2169
          %2601 = vmatpush.bf16.msra.mxu0 %v2165
          %2602 = vmatpush.bf16.msra.mxu0 %v2161
          %2603 = vmatpush.bf16.msra.mxu0 %v2157
          %2604 = vmatmul.bf16.gmra.mxu0 %v2590
          %v2605 = vpop.f32.mrf.mxu0
          %v2606 = vadd.f32 0.0, %v2605
          %v2607 = vpop.f32.mrf.mxu0
          %2608 = vdwg.mxu0
          %2609 = vmatpush.bf16.msra.mxu0 %v2186
          %2610 = vmatpush.bf16.msra.mxu0 %v2182
          %2611 = vmatpush.bf16.msra.mxu0 %v2178
          %2612 = vmatpush.bf16.msra.mxu0 %v2174
          %2613 = vmatpush.bf16.msra.mxu0 %v2170
          %2614 = vmatpush.bf16.msra.mxu0 %v2166
          %2615 = vmatpush.bf16.msra.mxu0 %v2162
          %2616 = vmatpush.bf16.msra.mxu0 %v2158
          %2617 = vmatmul.bf16.gmra.mxu0 %v2590
          %v2618 = vpop.f32.mrf.mxu0
          %v2619 = vadd.f32 0.0, %v2618
          %v2620 = vpop.f32.mrf.mxu0
          %2621 = vdwg.mxu0
          %2622 = vmatpush.bf16.msra.mxu0 %v2187
          %2623 = vmatpush.bf16.msra.mxu0 %v2183
          %2624 = vmatpush.bf16.msra.mxu0 %v2179
          %2625 = vmatpush.bf16.msra.mxu0 %v2175
          %2626 = vmatpush.bf16.msra.mxu0 %v2171
          %2627 = vmatpush.bf16.msra.mxu0 %v2167
          %2628 = vmatpush.bf16.msra.mxu0 %v2163
          %2629 = vmatpush.bf16.msra.mxu0 %v2159
          %2630 = vmatmul.bf16.gmra.mxu0 %v2590
          %v2631 = vpop.f32.mrf.mxu0
          %v2632 = vadd.f32 0.0, %v2631
          %v2633 = vpop.f32.mrf.mxu0
          %2634 = vdwg.mxu0
          %2635 = vmatpush.bf16.msra.mxu0 %v2188
          %2636 = vmatpush.bf16.msra.mxu0 %v2184
          %2637 = vmatpush.bf16.msra.mxu0 %v2180
          %2638 = vmatpush.bf16.msra.mxu0 %v2176
          %2639 = vmatpush.bf16.msra.mxu0 %v2172
          %2640 = vmatpush.bf16.msra.mxu0 %v2168
          %2641 = vmatpush.bf16.msra.mxu0 %v2164
          %2642 = vmatpush.bf16.msra.mxu0 %v2160
          %2643 = vmatmul.bf16.gmra.mxu0 %v2590
          %v2644 = vpop.f32.mrf.mxu0
          %v2645 = vadd.f32 0.0, %v2644
          %v2646 = vpop.f32.mrf.mxu0
          %2647 = vdwg.mxu0
          %v2648 = vadd.f32 %v2592, %v2606
          %v2649 = vadd.f32 %v2593, %v2619
          %v2650 = vadd.f32 %v2594, %v2632
          %v2651 = vadd.f32 %v2595, %v2645
          %v2652 = vxor.u32 %v2648, 2147483648
          %v2653 = vmul.f32 %v2652, 1.442695
          %v2654 = vpow.pop %v2653
          %v2655 = vadd.f32 %v2654, 1.0
          %v2656 = vrcp.pop %v2655
          %v2657 = vmul.f32 %v2655, %v2656
          %v2658 = vsub.f32 1.0, %v2657
          %v2659 = vmul.f32 %v2656, %v2658
          %v2660 = vadd.f32 %v2656, %v2659
          %vm2661 = vweird.f32 %v2655
          %vm2662 = vweird.f32 %v2656
          %vm2663 = vmor %vm2661, %vm2662
          %v2664 = vsel %vm2663, %v2656, %v2660
          %v2665 = vand.u32 2147483647, %v2655
          %vm2666 = vcmp.eq.f32.partialorder %v2665, 8.507059e+37
          %v2667 = vand.u32 %v2655, 2147483648
          %v2668 = vor.u32 1.1754944e-38, %v2667
          %v2669 = vsel %vm2666, %v2668, %v2664
          %v2670 = vmul.f32 1.0, %v2669
          %v2671 = vxor.u32 %v2649, 2147483648
          %v2672 = vmul.f32 %v2671, 1.442695
          %v2673 = vpow.pop %v2672
          %v2674 = vadd.f32 %v2673, 1.0
          %v2675 = vrcp.pop %v2674
          %v2676 = vmul.f32 %v2674, %v2675
          %v2677 = vsub.f32 1.0, %v2676
          %v2678 = vmul.f32 %v2675, %v2677
          %v2679 = vadd.f32 %v2675, %v2678
          %vm2680 = vweird.f32 %v2674
          %vm2681 = vweird.f32 %v2675
          %vm2682 = vmor %vm2680, %vm2681
          %v2683 = vsel %vm2682, %v2675, %v2679
          %v2684 = vand.u32 2147483647, %v2674
          %vm2685 = vcmp.eq.f32.partialorder %v2684, 8.507059e+37
          %v2686 = vand.u32 %v2674, 2147483648
          %v2687 = vor.u32 1.1754944e-38, %v2686
          %v2688 = vsel %vm2685, %v2687, %v2683
          %v2689 = vmul.f32 1.0, %v2688
          %v2690 = vtanh.pop %v2650
          %v2691 = vxor.u32 %v2651, 2147483648
          %v2692 = vmul.f32 %v2691, 1.442695
          %v2693 = vpow.pop %v2692
          %v2694 = vadd.f32 %v2693, 1.0
          %v2695 = vrcp.pop %v2694
          %v2696 = vmul.f32 %v2694, %v2695
          %v2697 = vsub.f32 1.0, %v2696
          %v2698 = vmul.f32 %v2695, %v2697
          %v2699 = vadd.f32 %v2695, %v2698
          %vm2700 = vweird.f32 %v2694
          %vm2701 = vweird.f32 %v2695
          %vm2702 = vmor %vm2700, %vm2701
          %v2703 = vsel %vm2702, %v2695, %v2699
          %v2704 = vand.u32 2147483647, %v2694
          %vm2705 = vcmp.eq.f32.partialorder %v2704, 8.507059e+37
          %v2706 = vand.u32 %v2694, 2147483648
          %v2707 = vor.u32 1.1754944e-38, %v2706
          %v2708 = vsel %vm2705, %v2707, %v2703
          %v2709 = vmul.f32 1.0, %v2708
          %v2710 = vmul.f32 %v2689, %v2587
          %v2711 = vmul.f32 %v2670, %v2690
          %v2712 = vadd.f32 %v2710, %v2711
          %v2713 = vtanh.pop %v2712
          %v2714 = vmul.f32 %v2709, %v2713
          %v2715 = vpack.c.bf16 %v2714, %v2714
          %2716 = vst [vmem:[%s434 + $0x10] sm:$0xf] %v2715
          %v2717 = vld [vmem:[#allocation2 + $0x60] sm:$0xff]
          %v2718 = vld [vmem:[#allocation2 + $0x68] sm:$0xff]
          %v2719 = vld [vmem:[#allocation2 + $0x70] sm:$0xff]
          %v2720 = vld [vmem:[#allocation2 + $0x78] sm:$0xff]
          %2721 = vmatpush.bf16.msra.mxu0 %v2185
          %2722 = vmatpush.bf16.msra.mxu0 %v2181
          %2723 = vmatpush.bf16.msra.mxu0 %v2177
          %2724 = vmatpush.bf16.msra.mxu0 %v2173
          %2725 = vmatpush.bf16.msra.mxu0 %v2169
          %2726 = vmatpush.bf16.msra.mxu0 %v2165
          %2727 = vmatpush.bf16.msra.mxu0 %v2161
          %2728 = vmatpush.bf16.msra.mxu0 %v2157
          %2729 = vmatmul.bf16.gmra.mxu0 %v2715
          %v2730 = vpop.f32.mrf.mxu0
          %v2731 = vadd.f32 0.0, %v2730
          %v2732 = vpop.f32.mrf.mxu0
          %2733 = vdwg.mxu0
          %2734 = vmatpush.bf16.msra.mxu0 %v2186
          %2735 = vmatpush.bf16.msra.mxu0 %v2182
          %2736 = vmatpush.bf16.msra.mxu0 %v2178
          %2737 = vmatpush.bf16.msra.mxu0 %v2174
          %2738 = vmatpush.bf16.msra.mxu0 %v2170
          %2739 = vmatpush.bf16.msra.mxu0 %v2166
          %2740 = vmatpush.bf16.msra.mxu0 %v2162
          %2741 = vmatpush.bf16.msra.mxu0 %v2158
          %2742 = vmatmul.bf16.gmra.mxu0 %v2715
          %v2743 = vpop.f32.mrf.mxu0
          %v2744 = vadd.f32 0.0, %v2743
          %v2745 = vpop.f32.mrf.mxu0
          %2746 = vdwg.mxu0
          %2747 = vmatpush.bf16.msra.mxu0 %v2187
          %2748 = vmatpush.bf16.msra.mxu0 %v2183
          %2749 = vmatpush.bf16.msra.mxu0 %v2179
          %2750 = vmatpush.bf16.msra.mxu0 %v2175
          %2751 = vmatpush.bf16.msra.mxu0 %v2171
          %2752 = vmatpush.bf16.msra.mxu0 %v2167
          %2753 = vmatpush.bf16.msra.mxu0 %v2163
          %2754 = vmatpush.bf16.msra.mxu0 %v2159
          %2755 = vmatmul.bf16.gmra.mxu0 %v2715
          %v2756 = vpop.f32.mrf.mxu0
          %v2757 = vadd.f32 0.0, %v2756
          %v2758 = vpop.f32.mrf.mxu0
          %2759 = vdwg.mxu0
          %2760 = vmatpush.bf16.msra.mxu0 %v2188
          %2761 = vmatpush.bf16.msra.mxu0 %v2184
          %2762 = vmatpush.bf16.msra.mxu0 %v2180
          %2763 = vmatpush.bf16.msra.mxu0 %v2176
          %2764 = vmatpush.bf16.msra.mxu0 %v2172
          %2765 = vmatpush.bf16.msra.mxu0 %v2168
          %2766 = vmatpush.bf16.msra.mxu0 %v2164
          %2767 = vmatpush.bf16.msra.mxu0 %v2160
          %2768 = vmatmul.bf16.gmra.mxu0 %v2715
          %v2769 = vpop.f32.mrf.mxu0
          %v2770 = vadd.f32 0.0, %v2769
          %v2771 = vpop.f32.mrf.mxu0
          %2772 = vdwg.mxu0
          %v2773 = vadd.f32 %v2717, %v2731
          %v2774 = vadd.f32 %v2718, %v2744
          %v2775 = vadd.f32 %v2719, %v2757
          %v2776 = vadd.f32 %v2720, %v2770
          %v2777 = vxor.u32 %v2773, 2147483648
          %v2778 = vmul.f32 %v2777, 1.442695
          %v2779 = vpow.pop %v2778
          %v2780 = vadd.f32 %v2779, 1.0
          %v2781 = vrcp.pop %v2780
          %v2782 = vmul.f32 %v2780, %v2781
          %v2783 = vsub.f32 1.0, %v2782
          %v2784 = vmul.f32 %v2781, %v2783
          %v2785 = vadd.f32 %v2781, %v2784
          %vm2786 = vweird.f32 %v2780
          %vm2787 = vweird.f32 %v2781
          %vm2788 = vmor %vm2786, %vm2787
          %v2789 = vsel %vm2788, %v2781, %v2785
          %v2790 = vand.u32 2147483647, %v2780
          %vm2791 = vcmp.eq.f32.partialorder %v2790, 8.507059e+37
          %v2792 = vand.u32 %v2780, 2147483648
          %v2793 = vor.u32 1.1754944e-38, %v2792
          %v2794 = vsel %vm2791, %v2793, %v2789
          %v2795 = vmul.f32 1.0, %v2794
          %v2796 = vxor.u32 %v2774, 2147483648
          %v2797 = vmul.f32 %v2796, 1.442695
          %v2798 = vpow.pop %v2797
          %v2799 = vadd.f32 %v2798, 1.0
          %v2800 = vrcp.pop %v2799
          %v2801 = vmul.f32 %v2799, %v2800
          %v2802 = vsub.f32 1.0, %v2801
          %v2803 = vmul.f32 %v2800, %v2802
          %v2804 = vadd.f32 %v2800, %v2803
          %vm2805 = vweird.f32 %v2799
          %vm2806 = vweird.f32 %v2800
          %vm2807 = vmor %vm2805, %vm2806
          %v2808 = vsel %vm2807, %v2800, %v2804
          %v2809 = vand.u32 2147483647, %v2799
          %vm2810 = vcmp.eq.f32.partialorder %v2809, 8.507059e+37
          %v2811 = vand.u32 %v2799, 2147483648
          %v2812 = vor.u32 1.1754944e-38, %v2811
          %v2813 = vsel %vm2810, %v2812, %v2808
          %v2814 = vmul.f32 1.0, %v2813
          %v2815 = vtanh.pop %v2775
          %v2816 = vxor.u32 %v2776, 2147483648
          %v2817 = vmul.f32 %v2816, 1.442695
          %v2818 = vpow.pop %v2817
          %v2819 = vadd.f32 %v2818, 1.0
          %v2820 = vrcp.pop %v2819
          %v2821 = vmul.f32 %v2819, %v2820
          %v2822 = vsub.f32 1.0, %v2821
          %v2823 = vmul.f32 %v2820, %v2822
          %v2824 = vadd.f32 %v2820, %v2823
          %vm2825 = vweird.f32 %v2819
          %vm2826 = vweird.f32 %v2820
          %vm2827 = vmor %vm2825, %vm2826
          %v2828 = vsel %vm2827, %v2820, %v2824
          %v2829 = vand.u32 2147483647, %v2819
          %vm2830 = vcmp.eq.f32.partialorder %v2829, 8.507059e+37
          %v2831 = vand.u32 %v2819, 2147483648
          %v2832 = vor.u32 1.1754944e-38, %v2831
          %v2833 = vsel %vm2830, %v2832, %v2828
          %v2834 = vmul.f32 1.0, %v2833
          %v2835 = vmul.f32 %v2814, %v2712
          %v2836 = vmul.f32 %v2795, %v2815
          %v2837 = vadd.f32 %v2835, %v2836
          %v2838 = vtanh.pop %v2837
          %v2839 = vmul.f32 %v2834, %v2838
          %v2840 = vpack.c.bf16 %v2839, %v2839
          %2841 = vst [vmem:[%s434 + $0xc] sm:$0xf] %v2840
          %v2842 = vld [vmem:[#allocation2 + $0x40] sm:$0xff]
          %v2843 = vld [vmem:[#allocation2 + $0x48] sm:$0xff]
          %v2844 = vld [vmem:[#allocation2 + $0x50] sm:$0xff]
          %v2845 = vld [vmem:[#allocation2 + $0x58] sm:$0xff]
          %2846 = vmatpush.bf16.msra.mxu0 %v2185
          %2847 = vmatpush.bf16.msra.mxu0 %v2181
          %2848 = vmatpush.bf16.msra.mxu0 %v2177
          %2849 = vmatpush.bf16.msra.mxu0 %v2173
          %2850 = vmatpush.bf16.msra.mxu0 %v2169
          %2851 = vmatpush.bf16.msra.mxu0 %v2165
          %2852 = vmatpush.bf16.msra.mxu0 %v2161
          %2853 = vmatpush.bf16.msra.mxu0 %v2157
          %2854 = vmatmul.bf16.gmra.mxu0 %v2840
          %v2855 = vpop.f32.mrf.mxu0
          %v2856 = vadd.f32 0.0, %v2855
          %v2857 = vpop.f32.mrf.mxu0
          %2858 = vdwg.mxu0
          %2859 = vmatpush.bf16.msra.mxu0 %v2186
          %2860 = vmatpush.bf16.msra.mxu0 %v2182
          %2861 = vmatpush.bf16.msra.mxu0 %v2178
          %2862 = vmatpush.bf16.msra.mxu0 %v2174
          %2863 = vmatpush.bf16.msra.mxu0 %v2170
          %2864 = vmatpush.bf16.msra.mxu0 %v2166
          %2865 = vmatpush.bf16.msra.mxu0 %v2162
          %2866 = vmatpush.bf16.msra.mxu0 %v2158
          %2867 = vmatmul.bf16.gmra.mxu0 %v2840
          %v2868 = vpop.f32.mrf.mxu0
          %v2869 = vadd.f32 0.0, %v2868
          %v2870 = vpop.f32.mrf.mxu0
          %2871 = vdwg.mxu0
          %2872 = vmatpush.bf16.msra.mxu0 %v2187
          %2873 = vmatpush.bf16.msra.mxu0 %v2183
          %2874 = vmatpush.bf16.msra.mxu0 %v2179
          %2875 = vmatpush.bf16.msra.mxu0 %v2175
          %2876 = vmatpush.bf16.msra.mxu0 %v2171
          %2877 = vmatpush.bf16.msra.mxu0 %v2167
          %2878 = vmatpush.bf16.msra.mxu0 %v2163
          %2879 = vmatpush.bf16.msra.mxu0 %v2159
          %2880 = vmatmul.bf16.gmra.mxu0 %v2840
          %v2881 = vpop.f32.mrf.mxu0
          %v2882 = vadd.f32 0.0, %v2881
          %v2883 = vpop.f32.mrf.mxu0
          %2884 = vdwg.mxu0
          %2885 = vmatpush.bf16.msra.mxu0 %v2188
          %2886 = vmatpush.bf16.msra.mxu0 %v2184
          %2887 = vmatpush.bf16.msra.mxu0 %v2180
          %2888 = vmatpush.bf16.msra.mxu0 %v2176
          %2889 = vmatpush.bf16.msra.mxu0 %v2172
          %2890 = vmatpush.bf16.msra.mxu0 %v2168
          %2891 = vmatpush.bf16.msra.mxu0 %v2164
          %2892 = vmatpush.bf16.msra.mxu0 %v2160
          %2893 = vmatmul.bf16.gmra.mxu0 %v2840
          %v2894 = vpop.f32.mrf.mxu0
          %v2895 = vadd.f32 0.0, %v2894
          %v2896 = vpop.f32.mrf.mxu0
          %2897 = vdwg.mxu0
          %v2898 = vadd.f32 %v2842, %v2856
          %v2899 = vadd.f32 %v2843, %v2869
          %v2900 = vadd.f32 %v2844, %v2882
          %v2901 = vadd.f32 %v2845, %v2895
          %v2902 = vxor.u32 %v2898, 2147483648
          %v2903 = vmul.f32 %v2902, 1.442695
          %v2904 = vpow.pop %v2903
          %v2905 = vadd.f32 %v2904, 1.0
          %v2906 = vrcp.pop %v2905
          %v2907 = vmul.f32 %v2905, %v2906
          %v2908 = vsub.f32 1.0, %v2907
          %v2909 = vmul.f32 %v2906, %v2908
          %v2910 = vadd.f32 %v2906, %v2909
          %vm2911 = vweird.f32 %v2905
          %vm2912 = vweird.f32 %v2906
          %vm2913 = vmor %vm2911, %vm2912
          %v2914 = vsel %vm2913, %v2906, %v2910
          %v2915 = vand.u32 2147483647, %v2905
          %vm2916 = vcmp.eq.f32.partialorder %v2915, 8.507059e+37
          %v2917 = vand.u32 %v2905, 2147483648
          %v2918 = vor.u32 1.1754944e-38, %v2917
          %v2919 = vsel %vm2916, %v2918, %v2914
          %v2920 = vmul.f32 1.0, %v2919
          %v2921 = vxor.u32 %v2899, 2147483648
          %v2922 = vmul.f32 %v2921, 1.442695
          %v2923 = vpow.pop %v2922
          %v2924 = vadd.f32 %v2923, 1.0
          %v2925 = vrcp.pop %v2924
          %v2926 = vmul.f32 %v2924, %v2925
          %v2927 = vsub.f32 1.0, %v2926
          %v2928 = vmul.f32 %v2925, %v2927
          %v2929 = vadd.f32 %v2925, %v2928
          %vm2930 = vweird.f32 %v2924
          %vm2931 = vweird.f32 %v2925
          %vm2932 = vmor %vm2930, %vm2931
          %v2933 = vsel %vm2932, %v2925, %v2929
          %v2934 = vand.u32 2147483647, %v2924
          %vm2935 = vcmp.eq.f32.partialorder %v2934, 8.507059e+37
          %v2936 = vand.u32 %v2924, 2147483648
          %v2937 = vor.u32 1.1754944e-38, %v2936
          %v2938 = vsel %vm2935, %v2937, %v2933
          %v2939 = vmul.f32 1.0, %v2938
          %v2940 = vtanh.pop %v2900
          %v2941 = vxor.u32 %v2901, 2147483648
          %v2942 = vmul.f32 %v2941, 1.442695
          %v2943 = vpow.pop %v2942
          %v2944 = vadd.f32 %v2943, 1.0
          %v2945 = vrcp.pop %v2944
          %v2946 = vmul.f32 %v2944, %v2945
          %v2947 = vsub.f32 1.0, %v2946
          %v2948 = vmul.f32 %v2945, %v2947
          %v2949 = vadd.f32 %v2945, %v2948
          %vm2950 = vweird.f32 %v2944
          %vm2951 = vweird.f32 %v2945
          %vm2952 = vmor %vm2950, %vm2951
          %v2953 = vsel %vm2952, %v2945, %v2949
          %v2954 = vand.u32 2147483647, %v2944
          %vm2955 = vcmp.eq.f32.partialorder %v2954, 8.507059e+37
          %v2956 = vand.u32 %v2944, 2147483648
          %v2957 = vor.u32 1.1754944e-38, %v2956
          %v2958 = vsel %vm2955, %v2957, %v2953
          %v2959 = vmul.f32 1.0, %v2958
          %v2960 = vmul.f32 %v2939, %v2837
          %v2961 = vmul.f32 %v2920, %v2940
          %v2962 = vadd.f32 %v2960, %v2961
          %v2963 = vtanh.pop %v2962
          %v2964 = vmul.f32 %v2959, %v2963
          %v2965 = vpack.c.bf16 %v2964, %v2964
          %2966 = vst [vmem:[%s434 + $0x8] sm:$0xf] %v2965
          %v2967 = vld [vmem:[#allocation2 + $0x20] sm:$0xff]
          %v2968 = vld [vmem:[#allocation2 + $0x28] sm:$0xff]
          %v2969 = vld [vmem:[#allocation2 + $0x30] sm:$0xff]
          %v2970 = vld [vmem:[#allocation2 + $0x38] sm:$0xff]
          %2971 = vmatpush.bf16.msra.mxu0 %v2185
          %2972 = vmatpush.bf16.msra.mxu0 %v2181
          %2973 = vmatpush.bf16.msra.mxu0 %v2177
          %2974 = vmatpush.bf16.msra.mxu0 %v2173
          %2975 = vmatpush.bf16.msra.mxu0 %v2169
          %2976 = vmatpush.bf16.msra.mxu0 %v2165
          %2977 = vmatpush.bf16.msra.mxu0 %v2161
          %2978 = vmatpush.bf16.msra.mxu0 %v2157
          %2979 = vmatmul.bf16.gmra.mxu0 %v2965
          %v2980 = vpop.f32.mrf.mxu0
          %v2981 = vadd.f32 0.0, %v2980
          %v2982 = vpop.f32.mrf.mxu0
          %2983 = vdwg.mxu0
          %2984 = vmatpush.bf16.msra.mxu0 %v2186
          %2985 = vmatpush.bf16.msra.mxu0 %v2182
          %2986 = vmatpush.bf16.msra.mxu0 %v2178
          %2987 = vmatpush.bf16.msra.mxu0 %v2174
          %2988 = vmatpush.bf16.msra.mxu0 %v2170
          %2989 = vmatpush.bf16.msra.mxu0 %v2166
          %2990 = vmatpush.bf16.msra.mxu0 %v2162
          %2991 = vmatpush.bf16.msra.mxu0 %v2158
          %2992 = vmatmul.bf16.gmra.mxu0 %v2965
          %v2993 = vpop.f32.mrf.mxu0
          %v2994 = vadd.f32 0.0, %v2993
          %v2995 = vpop.f32.mrf.mxu0
          %2996 = vdwg.mxu0
          %2997 = vmatpush.bf16.msra.mxu0 %v2187
          %2998 = vmatpush.bf16.msra.mxu0 %v2183
          %2999 = vmatpush.bf16.msra.mxu0 %v2179
          %3000 = vmatpush.bf16.msra.mxu0 %v2175
          %3001 = vmatpush.bf16.msra.mxu0 %v2171
          %3002 = vmatpush.bf16.msra.mxu0 %v2167
          %3003 = vmatpush.bf16.msra.mxu0 %v2163
          %3004 = vmatpush.bf16.msra.mxu0 %v2159
          %3005 = vmatmul.bf16.gmra.mxu0 %v2965
          %v3006 = vpop.f32.mrf.mxu0
          %v3007 = vadd.f32 0.0, %v3006
          %v3008 = vpop.f32.mrf.mxu0
          %3009 = vdwg.mxu0
          %3010 = vmatpush.bf16.msra.mxu0 %v2188
          %3011 = vmatpush.bf16.msra.mxu0 %v2184
          %3012 = vmatpush.bf16.msra.mxu0 %v2180
          %3013 = vmatpush.bf16.msra.mxu0 %v2176
          %3014 = vmatpush.bf16.msra.mxu0 %v2172
          %3015 = vmatpush.bf16.msra.mxu0 %v2168
          %3016 = vmatpush.bf16.msra.mxu0 %v2164
          %3017 = vmatpush.bf16.msra.mxu0 %v2160
          %3018 = vmatmul.bf16.gmra.mxu0 %v2965
          %v3019 = vpop.f32.mrf.mxu0
          %v3020 = vadd.f32 0.0, %v3019
          %v3021 = vpop.f32.mrf.mxu0
          %3022 = vdwg.mxu0
          %v3023 = vadd.f32 %v2967, %v2981
          %v3024 = vadd.f32 %v2968, %v2994
          %v3025 = vadd.f32 %v2969, %v3007
          %v3026 = vadd.f32 %v2970, %v3020
          %v3027 = vxor.u32 %v3023, 2147483648
          %v3028 = vmul.f32 %v3027, 1.442695
          %v3029 = vpow.pop %v3028
          %v3030 = vadd.f32 %v3029, 1.0
          %v3031 = vrcp.pop %v3030
          %v3032 = vmul.f32 %v3030, %v3031
          %v3033 = vsub.f32 1.0, %v3032
          %v3034 = vmul.f32 %v3031, %v3033
          %v3035 = vadd.f32 %v3031, %v3034
          %vm3036 = vweird.f32 %v3030
          %vm3037 = vweird.f32 %v3031
          %vm3038 = vmor %vm3036, %vm3037
          %v3039 = vsel %vm3038, %v3031, %v3035
          %v3040 = vand.u32 2147483647, %v3030
          %vm3041 = vcmp.eq.f32.partialorder %v3040, 8.507059e+37
          %v3042 = vand.u32 %v3030, 2147483648
          %v3043 = vor.u32 1.1754944e-38, %v3042
          %v3044 = vsel %vm3041, %v3043, %v3039
          %v3045 = vmul.f32 1.0, %v3044
          %v3046 = vxor.u32 %v3024, 2147483648
          %v3047 = vmul.f32 %v3046, 1.442695
          %v3048 = vpow.pop %v3047
          %v3049 = vadd.f32 %v3048, 1.0
          %v3050 = vrcp.pop %v3049
          %v3051 = vmul.f32 %v3049, %v3050
          %v3052 = vsub.f32 1.0, %v3051
          %v3053 = vmul.f32 %v3050, %v3052
          %v3054 = vadd.f32 %v3050, %v3053
          %vm3055 = vweird.f32 %v3049
          %vm3056 = vweird.f32 %v3050
          %vm3057 = vmor %vm3055, %vm3056
          %v3058 = vsel %vm3057, %v3050, %v3054
          %v3059 = vand.u32 2147483647, %v3049
          %vm3060 = vcmp.eq.f32.partialorder %v3059, 8.507059e+37
          %v3061 = vand.u32 %v3049, 2147483648
          %v3062 = vor.u32 1.1754944e-38, %v3061
          %v3063 = vsel %vm3060, %v3062, %v3058
          %v3064 = vmul.f32 1.0, %v3063
          %v3065 = vtanh.pop %v3025
          %v3066 = vxor.u32 %v3026, 2147483648
          %v3067 = vmul.f32 %v3066, 1.442695
          %v3068 = vpow.pop %v3067
          %v3069 = vadd.f32 %v3068, 1.0
          %v3070 = vrcp.pop %v3069
          %v3071 = vmul.f32 %v3069, %v3070
          %v3072 = vsub.f32 1.0, %v3071
          %v3073 = vmul.f32 %v3070, %v3072
          %v3074 = vadd.f32 %v3070, %v3073
          %vm3075 = vweird.f32 %v3069
          %vm3076 = vweird.f32 %v3070
          %vm3077 = vmor %vm3075, %vm3076
          %v3078 = vsel %vm3077, %v3070, %v3074
          %v3079 = vand.u32 2147483647, %v3069
          %vm3080 = vcmp.eq.f32.partialorder %v3079, 8.507059e+37
          %v3081 = vand.u32 %v3069, 2147483648
          %v3082 = vor.u32 1.1754944e-38, %v3081
          %v3083 = vsel %vm3080, %v3082, %v3078
          %v3084 = vmul.f32 1.0, %v3083
          %v3085 = vmul.f32 %v3064, %v2962
          %v3086 = vmul.f32 %v3045, %v3065
          %v3087 = vadd.f32 %v3085, %v3086
          %v3088 = vtanh.pop %v3087
          %v3089 = vmul.f32 %v3084, %v3088
          %v3090 = vpack.c.bf16 %v3089, %v3089
          %3091 = vst [vmem:[%s434 + $0x4] sm:$0xf] %v3090
          %v3092 = vld [vmem:[#allocation2] sm:$0xff]
          %v3093 = vld [vmem:[#allocation2 + $0x8] sm:$0xff]
          %v3094 = vld [vmem:[#allocation2 + $0x10] sm:$0xff]
          %v3095 = vld [vmem:[#allocation2 + $0x18] sm:$0xff]
          %3096 = vmatpush.bf16.msra.mxu0 %v2185
          %3097 = vmatpush.bf16.msra.mxu0 %v2181
          %3098 = vmatpush.bf16.msra.mxu0 %v2177
          %3099 = vmatpush.bf16.msra.mxu0 %v2173
          %3100 = vmatpush.bf16.msra.mxu0 %v2169
          %3101 = vmatpush.bf16.msra.mxu0 %v2165
          %3102 = vmatpush.bf16.msra.mxu0 %v2161
          %3103 = vmatpush.bf16.msra.mxu0 %v2157
          %3104 = vmatmul.bf16.gmra.mxu0 %v3090
          %v3105 = vpop.f32.mrf.mxu0
          %v3106 = vadd.f32 0.0, %v3105
          %v3107 = vpop.f32.mrf.mxu0
          %3108 = vdwg.mxu0
          %3109 = vmatpush.bf16.msra.mxu0 %v2186
          %3110 = vmatpush.bf16.msra.mxu0 %v2182
          %3111 = vmatpush.bf16.msra.mxu0 %v2178
          %3112 = vmatpush.bf16.msra.mxu0 %v2174
          %3113 = vmatpush.bf16.msra.mxu0 %v2170
          %3114 = vmatpush.bf16.msra.mxu0 %v2166
          %3115 = vmatpush.bf16.msra.mxu0 %v2162
          %3116 = vmatpush.bf16.msra.mxu0 %v2158
          %3117 = vmatmul.bf16.gmra.mxu0 %v3090
          %v3118 = vpop.f32.mrf.mxu0
          %v3119 = vadd.f32 0.0, %v3118
          %v3120 = vpop.f32.mrf.mxu0
          %3121 = vdwg.mxu0
          %3122 = vmatpush.bf16.msra.mxu0 %v2187
          %3123 = vmatpush.bf16.msra.mxu0 %v2183
          %3124 = vmatpush.bf16.msra.mxu0 %v2179
          %3125 = vmatpush.bf16.msra.mxu0 %v2175
          %3126 = vmatpush.bf16.msra.mxu0 %v2171
          %3127 = vmatpush.bf16.msra.mxu0 %v2167
          %3128 = vmatpush.bf16.msra.mxu0 %v2163
          %3129 = vmatpush.bf16.msra.mxu0 %v2159
          %3130 = vmatmul.bf16.gmra.mxu0 %v3090
          %v3131 = vpop.f32.mrf.mxu0
          %v3132 = vadd.f32 0.0, %v3131
          %v3133 = vpop.f32.mrf.mxu0
          %3134 = vdwg.mxu0
          %3135 = vmatpush.bf16.msra.mxu0 %v2188
          %3136 = vmatpush.bf16.msra.mxu0 %v2184
          %3137 = vmatpush.bf16.msra.mxu0 %v2180
          %3138 = vmatpush.bf16.msra.mxu0 %v2176
          %3139 = vmatpush.bf16.msra.mxu0 %v2172
          %3140 = vmatpush.bf16.msra.mxu0 %v2168
          %3141 = vmatpush.bf16.msra.mxu0 %v2164
          %3142 = vmatpush.bf16.msra.mxu0 %v2160
          %3143 = vmatmul.bf16.gmra.mxu0 %v3090
          %v3144 = vpop.f32.mrf.mxu0
          %v3145 = vadd.f32 0.0, %v3144
          %v3146 = vpop.f32.mrf.mxu0
          %3147 = vdwg.mxu0
          %v3148 = vadd.f32 %v3092, %v3106
          %v3149 = vadd.f32 %v3093, %v3119
          %v3150 = vadd.f32 %v3094, %v3132
          %v3151 = vadd.f32 %v3095, %v3145
          %v3152 = vxor.u32 %v3148, 2147483648
          %v3153 = vmul.f32 %v3152, 1.442695
          %v3154 = vpow.pop %v3153
          %v3155 = vadd.f32 %v3154, 1.0
          %v3156 = vrcp.pop %v3155
          %v3157 = vmul.f32 %v3155, %v3156
          %v3158 = vsub.f32 1.0, %v3157
          %v3159 = vmul.f32 %v3156, %v3158
          %v3160 = vadd.f32 %v3156, %v3159
          %vm3161 = vweird.f32 %v3155
          %vm3162 = vweird.f32 %v3156
          %vm3163 = vmor %vm3161, %vm3162
          %v3164 = vsel %vm3163, %v3156, %v3160
          %v3165 = vand.u32 2147483647, %v3155
          %vm3166 = vcmp.eq.f32.partialorder %v3165, 8.507059e+37
          %v3167 = vand.u32 %v3155, 2147483648
          %v3168 = vor.u32 1.1754944e-38, %v3167
          %v3169 = vsel %vm3166, %v3168, %v3164
          %v3170 = vmul.f32 1.0, %v3169
          %v3171 = vxor.u32 %v3149, 2147483648
          %v3172 = vmul.f32 %v3171, 1.442695
          %v3173 = vpow.pop %v3172
          %v3174 = vadd.f32 %v3173, 1.0
          %v3175 = vrcp.pop %v3174
          %v3176 = vmul.f32 %v3174, %v3175
          %v3177 = vsub.f32 1.0, %v3176
          %v3178 = vmul.f32 %v3175, %v3177
          %v3179 = vadd.f32 %v3175, %v3178
          %vm3180 = vweird.f32 %v3174
          %vm3181 = vweird.f32 %v3175
          %vm3182 = vmor %vm3180, %vm3181
          %v3183 = vsel %vm3182, %v3175, %v3179
          %v3184 = vand.u32 2147483647, %v3174
          %vm3185 = vcmp.eq.f32.partialorder %v3184, 8.507059e+37
          %v3186 = vand.u32 %v3174, 2147483648
          %v3187 = vor.u32 1.1754944e-38, %v3186
          %v3188 = vsel %vm3185, %v3187, %v3183
          %v3189 = vmul.f32 1.0, %v3188
          %v3190 = vtanh.pop %v3150
          %v3191 = vxor.u32 %v3151, 2147483648
          %v3192 = vmul.f32 %v3191, 1.442695
          %v3193 = vpow.pop %v3192
          %v3194 = vadd.f32 %v3193, 1.0
          %v3195 = vrcp.pop %v3194
          %v3196 = vmul.f32 %v3194, %v3195
          %v3197 = vsub.f32 1.0, %v3196
          %v3198 = vmul.f32 %v3195, %v3197
          %v3199 = vadd.f32 %v3195, %v3198
          %vm3200 = vweird.f32 %v3194
          %vm3201 = vweird.f32 %v3195
          %vm3202 = vmor %vm3200, %vm3201
          %v3203 = vsel %vm3202, %v3195, %v3199
          %v3204 = vand.u32 2147483647, %v3194
          %vm3205 = vcmp.eq.f32.partialorder %v3204, 8.507059e+37
          %v3206 = vand.u32 %v3194, 2147483648
          %v3207 = vor.u32 1.1754944e-38, %v3206
          %v3208 = vsel %vm3205, %v3207, %v3203
          %v3209 = vmul.f32 1.0, %v3208
          %v3210 = vmul.f32 %v3189, %v3087
          %v3211 = vmul.f32 %v3170, %v3190
          %v3212 = vadd.f32 %v3210, %v3211
          %v3213 = vtanh.pop %v3212
          %v3214 = vmul.f32 %v3209, %v3213
          %v3215 = vpack.c.bf16 %v3214, %v3214
          %3216 = vst [vmem:[%s434] sm:$0xf] %v3215
          %3217 = vst [vmem:[%s441] sm:$0xff] %v3214
          %3218 = vst [vmem:[%s448] sm:$0xff] %v3212
        $region64: #{_lstm_layer_pallas.1} parent=35 // pred_fallthru
          _
        %s3219 = sand.u32 %s179, 1
        %s3220 = scalar_lea.sflag [#allocation5], %s3219
        %s3221 = sand.u32 %s179, 1
        %s3222 = smul.addr %s3221, 32
        %s3223 = scalar_lea.vmem [#allocation11], %s3222
        %s3224 = sand.u32 %s33, 1
        %s3225 = scalar_lea.sflag [#allocation13], %s3224
        %s3226 = sand.u32 %s205, 1
        %s3227 = smul.addr %s3226, 8
        %s3228 = scalar_lea.vmem [#allocation12], %s3227
        %s3229 = sand.u32 %s33, 1
        %s3230 = scalar_lea.sflag [#allocation13], %s3229
        %s3231 = sand.u32 %s231, 1
        %s3232 = smul.addr %s3231, 8
        %s3233 = scalar_lea.vmem [#allocation14], %s3232
        // Predicated region
        $region65: #{_lstm_layer_pallas.1} parent=35 // pred_check
          %p3234 = pneg %p189
        $region66: #{_lstm_layer_pallas.1} parent=35 // pred_check_branch
          %3236 = sbr.rel (%p3234) target = $region68
        $region67: #{_lstm_layer_pallas.1} parent=35 // pred_region
          %s3237 = ssub.s32 1, %s37
          %s3238 = smul.u32 %s3237, %s38
          %s3239 = ssub.s32 0, %s38
          %s3240 = smul.u32 %s37, %s3239
          %s3241 = sadd.s32 %s3238, %s3240
          %s3242 = smul.u32 8, %s3241
          %3244 = vsyncadd %s3220, 0
          %s3245 = smul.addr %s3242, 2
          %s3246 = sadd.s32 %s37, %s3245
          %s3247 = smul.addr %s3246, 4
          %s3248 = scalar_lea.hbm %s4, %s3247
          %s3249 = sshll.u32 %s3223, 4
          %s3250 = int_to_ptr.vmem [resolvable:$true] %s3249
          %s3251 = sshll.u32 %s3248, 4
          %s3252 = int_to_ptr.hbm [resolvable:$true] %s3251
          %3257 = dma.vmem_to_hbm [thread:$0]  %s3250, 512, %s3252, %s3220, 64, 128, 4
        $region68: #{_lstm_layer_pallas.1} parent=35 // pred_fallthru
          _
        // Predicated region
        $region69: #{_lstm_layer_pallas.1} parent=35 // pred_check
          %p3258 = pneg %p215
        $region70: #{_lstm_layer_pallas.1} parent=35 // pred_check_branch
          %3260 = sbr.rel (%p3258) target = $region72
        $region71: #{_lstm_layer_pallas.1} parent=35 // pred_region
          %3262 = vsyncadd %s3225, 0
          %s3263 = smul.addr %s37, 8
          %s3264 = scalar_lea.hbm %s5, %s3263
          %s3266 = sshll.u32 %s3228, 4
          %s3267 = int_to_ptr.vmem [resolvable:$true] %s3266
          %s3268 = sshll.u32 %s3264, 4
          %s3269 = int_to_ptr.hbm [resolvable:$true] %s3268
          %3271 = dma.vmem_to_hbm [thread:$0]  %s3267, 128, %s3269, %s3225
        $region72: #{_lstm_layer_pallas.1} parent=35 // pred_fallthru
          _
        // Predicated region
        $region73: #{_lstm_layer_pallas.1} parent=35 // pred_check
          %p3272 = pneg %p241
        $region74: #{_lstm_layer_pallas.1} parent=35 // pred_check_branch
          %3274 = sbr.rel (%p3272) target = $region76
        $region75: #{_lstm_layer_pallas.1} parent=35 // pred_region
          %3276 = vsyncadd %s3230, 0
          %s3277 = smul.addr %s37, 8
          %s3278 = scalar_lea.hbm %s6, %s3277
          %s3280 = sshll.u32 %s3233, 4
          %s3281 = int_to_ptr.vmem [resolvable:$true] %s3280
          %s3282 = sshll.u32 %s3278, 4
          %s3283 = int_to_ptr.hbm [resolvable:$true] %s3282
          %3285 = dma.vmem_to_hbm [thread:$0]  %s3281, 128, %s3283, %s3230
        $region76: #{_lstm_layer_pallas.1} parent=35 // pred_fallthru
          _
      $region36: #{_lstm_layer_pallas.1} parent=5 // pred_fallthru
        _
      %p3286 = scmp.le.s32.totalorder 2, %s28
      // Predicated region
      $region77: #{_lstm_layer_pallas.1} parent=5 // pred_check
        %p3287 = pneg %p3286
      $region78: #{_lstm_layer_pallas.1} parent=5 // pred_check_branch
        %3289 = sbr.rel (%p3287) target = $region80
      $region79: #{_lstm_layer_pallas.1} parent=5 // pred_region
        %s3290 = ssub.s32 %s28, 2
        // Predicated region
        $region81: #{_lstm_layer_pallas.1} parent=79 // pred_check
          %p3291 = pneg %p195
        $region82: #{_lstm_layer_pallas.1} parent=79 // pred_check_branch
          %3293 = sbr.rel (%p3291) target = $region84
        $region83: #{_lstm_layer_pallas.1} parent=79 // pred_region
          %s3294 = sand.u32 %s180, 1
          %s3295 = scalar_lea.sflag [#allocation5], %s3294
          %s3296 = sand.u32 %s180, 1
          %s3297 = smul.addr %s3296, 32
          %s3298 = scalar_lea.vmem [#allocation11], %s3297
          %3300 = dma.done %s3295, 512
        $region84: #{_lstm_layer_pallas.1} parent=79 // pred_fallthru
          _
        // Predicated region
        $region85: #{_lstm_layer_pallas.1} parent=79 // pred_check
          %p3301 = pneg %p221
        $region86: #{_lstm_layer_pallas.1} parent=79 // pred_check_branch
          %3303 = sbr.rel (%p3301) target = $region88
        $region87: #{_lstm_layer_pallas.1} parent=79 // pred_region
          %s3304 = sand.u32 %s34, 1
          %s3305 = scalar_lea.sflag [#allocation13], %s3304
          %s3306 = sand.u32 %s206, 1
          %s3307 = smul.addr %s3306, 8
          %s3308 = scalar_lea.vmem [#allocation12], %s3307
          %3310 = dma.done %s3305, 128
        $region88: #{_lstm_layer_pallas.1} parent=79 // pred_fallthru
          _
        // Predicated region
        $region89: #{_lstm_layer_pallas.1} parent=79 // pred_check
          %p3311 = pneg %p247
        $region90: #{_lstm_layer_pallas.1} parent=79 // pred_check_branch
          %3313 = sbr.rel (%p3311) target = $region92
        $region91: #{_lstm_layer_pallas.1} parent=79 // pred_region
          %s3314 = sand.u32 %s34, 1
          %s3315 = scalar_lea.sflag [#allocation13], %s3314
          %s3316 = sand.u32 %s232, 1
          %s3317 = smul.addr %s3316, 8
          %s3318 = scalar_lea.vmem [#allocation14], %s3317
          %3320 = dma.done %s3315, 128
        $region92: #{_lstm_layer_pallas.1} parent=79 // pred_fallthru
          _
      $region80: #{_lstm_layer_pallas.1} parent=5 // pred_fallthru
        _
    $region6: #{_lstm_layer_pallas.1} parent=1 // loop_footer
      %s32 = sadd.s32 1, %s28
    $region7: #{_lstm_layer_pallas.1} parent=1 // loop_footer_branch
      %27 = sbr.rel target = $region3
    $region8: #{_lstm_layer_pallas.1} parent=1 // loop_exit
      _
    %3321 = vsyncpa [#allocation4], 1
    %s3322 = scalar_lea.sflag [#allocation4], 1
    %3323 = vsyncpa %s3322, 1
    %3324 = vsyncpa [#allocation7], 1
    %s3325 = scalar_lea.sflag [#allocation7], 1
    %3326 = vsyncpa %s3325, 1
    %3327 = vsyncpa [#allocation10], 1
    %s3328 = scalar_lea.sflag [#allocation10], 1
    %3329 = vsyncpa %s3328, 1
    %3330 = vsyncpa [#allocation5], 1
    %s3331 = scalar_lea.sflag [#allocation5], 1
    %3332 = vsyncpa %s3331, 1
    %3333 = vsyncpa [#allocation13], 1
    %s3334 = scalar_lea.sflag [#allocation13], 1
    %3335 = vsyncpa %s3334, 1

</llo_original>
